<compile_context>
chip_gen: v7x
topology: tpu7x:2x2x1
jax: 0.10.0
libtpu: 0.0.40
codegen_flags: <defaults>
</compile_context>

<pallas_src>
import functools

import jax
import jax.numpy as jnp
from jax.experimental import pallas as pl
from jax.experimental.pallas import tpu as pltpu

BN_EPS = 1e-5
_LANES = 128
_SUBLANES = 8


def _round_up(x, m):
    return (x + m - 1) // m * m


def _vmem_limit_bytes():
    """Per-generation VMEM budget (3/4 of physical), conservative fallback."""
    cap = 64 << 20                              # v7x-sized fallback
    try:
        info = pltpu.get_tpu_info()
        cap = int(getattr(info, "vmem_capacity_bytes", cap)) or cap
    except Exception:
        pass
    return (cap * 3) // 4


def _conv3x3_taps(x, w_ref, *, wp2, base, nc):
    """3x3 'same' conv on the flat padded slab as 9 tap matmuls.

    x:     (Cin_p, nc) flat slab, zero beyond the real padded-image columns.
    w_ref: (9, Cout_p, Cin_p) VMEM ref, tap order k = dh*3 + dw.
    Tap (dh, dw) for output column b reads x[:, b + base + dh*wp2 + dw]; that
    shift is a pure lane rotation (XLU slot), so no patch matrix is stored.
    """
    acc = None
    for dh in range(3):
        for dw in range(3):
            k = dh * 3 + dw
            delta = base + dh * wp2 + dw
            shifted = x if delta == 0 else pltpu.roll(x, (nc - delta) % nc, axis=1)
            part = jnp.dot(w_ref[k], shifted, preferred_element_type=jnp.float32)
            acc = part if acc is None else acc + part
    return acc


def _bn_relu(acc, gamma, beta, mask, inv_n):
    """Training-mode BatchNorm (stats over valid columns) + ReLU, fused.

    Two-pass stats (mean, then centered sum-of-squares -> no cancellation),
    affine folded into one scale/shift multiply-add; rsqrt -> EUP slot.
    acc: (C, L); gamma/beta: (C, 1); mask: (1, L) with 1.0 on real columns.
    """
    maskb = jnp.broadcast_to(mask, acc.shape)               # hoist broadcast
    mean = jnp.sum(acc * maskb, axis=1, keepdims=True) * inv_n   # (C, 1)
    d = (acc - mean) * maskb
    var = jnp.sum(d * d, axis=1, keepdims=True) * inv_n
    scale = gamma * jax.lax.rsqrt(var + BN_EPS)
    shift = beta - mean * scale
    return jnp.maximum(acc * scale + shift, 0.0)


def _first2d_kernel(x_ref, w1_ref, g1_ref, bt1_ref, w2_ref, g2_ref, bt2_ref,
                    mask_ref, out_ref, *, wp2, n_valid):
    """Fused (conv3x3 -> BN -> ReLU) x 2 on the lane-dense flat slab."""
    nc = out_ref.shape[-1]
    mask = mask_ref[...]                                    # (1, nc)
    inv_n = 1.0 / float(n_valid)

    # ---- block 1: conv3x3 -> BN(batch stats) -> ReLU ------------------------
    acc1 = _conv3x3_taps(x_ref[...], w1_ref, wp2=wp2, base=0, nc=nc)
    y1 = _bn_relu(acc1, g1_ref[...], bt1_ref[...], mask, inv_n) * mask

    # ---- block 2: conv3x3 -> BN(batch stats) -> ReLU ------------------------
    # y1 columns are indexed by padded-image position b = n*S + h*(W+2) + w;
    # the zero-padded re-embedding for conv2 is just a -(W+3) offset folded
    # into the tap deltas, so no intermediate buffer is materialized. Negative
    # offsets wrap into the slab's zero tail (guaranteed by the wrapper).
    acc2 = _conv3x3_taps(y1, w2_ref, wp2=wp2, base=-(wp2 + 1), nc=nc)
    out_ref[...] = _bn_relu(acc2, g2_ref[...], bt2_ref[...], mask, inv_n)


def first2d_forward_fn(x_nchw, params):
    """First2D forward. Input/output are NCHW like the PyTorch module."""
    N, Cin, H, W = x_nchw.shape
    Cmid = params["w1"].shape[0]
    Cout = params["w2"].shape[0]
    wp2 = W + 2
    S = (H + 2) * wp2
    L = N * S
    n_valid = N * H * W
    nc = _round_up(L + 2 * wp2 + 2, _LANES)          # lane-dense slab width
    # Block-2's negative tap offsets wrap to the slab tail; it must be all-zero
    # (i.e. beyond the last real column), and positive offsets must not wrap
    # for any valid output column.
    assert nc >= L + 2 * (wp2 + 1), "slab zero tail too small for tap wrap"

    cin_p = _round_up(Cin, _SUBLANES)
    cmid_p = _round_up(Cmid, _SUBLANES)
    cout_p = _round_up(Cout, _SUBLANES)

    vmem_limit = _vmem_limit_bytes()
    # rough fully-resident footprint: x + rolled copy + y1 + acc2 + out + mask
    resident = 4 * nc * (2 * cin_p + 3 * cmid_p + 2 * cout_p + 2)
    if resident > vmem_limit:
        # TODO(synk): column-tiled grid (halo = 2*wp2+2) + two-pass BN fallback
        # for production sizes; this fully VMEM-resident path covers small and
        # medium inputs only.
        raise ValueError(
            f"First2D fused kernel needs ~{resident} B VMEM (> {vmem_limit} B); tile it.")

    # ---- wrapper-side layout plumbing (cheap, lane-dense presentation) ------
    # channels-first (padded to 8 sublanes), spatially zero-padded, flattened
    # to (cin_p, nc) with a zero tail.
    xp = jnp.pad(jnp.transpose(x_nchw, (1, 0, 2, 3)),
                 ((0, cin_p - Cin), (0, 0), (1, 1), (1, 1)))
    xflat = jnp.pad(xp.reshape(cin_p, L), ((0, 0), (0, nc - L)))

    # conv weights (O, I, 3, 3) -> (9, O_p, I_p), tap order k = dh*3 + dw.
    def prep_w(w, co_p, ci_p):
        w = jnp.pad(w, ((0, co_p - w.shape[0]), (0, ci_p - w.shape[1]),
                        (0, 0), (0, 0)))
        return jnp.transpose(w, (2, 3, 0, 1)).reshape(9, co_p, ci_p)

    w1_9 = prep_w(params["w1"], cmid_p, cin_p)
    w2_9 = prep_w(params["w2"], cout_p, cmid_p)

    def prep_v(v, c_p):
        return jnp.pad(v, (0, c_p - v.shape[0])).reshape(c_p, 1)

    g1 = prep_v(params["g1"], cmid_p)
    b1 = prep_v(params["beta1"], cmid_p)
    g2 = prep_v(params["g2"], cout_p)
    b2 = prep_v(params["beta2"], cout_p)

    # validity mask over slab columns: b = n*S + h*(W+2) + w is real iff h<H, w<W
    col = jnp.arange(nc, dtype=jnp.int32)
    within = col % S
    mask = ((col < L) & (within // wp2 < H) & (within % wp2 < W))
    mask = mask.astype(jnp.float32).reshape(1, nc)

    kernel = functools.partial(_first2d_kernel, wp2=wp2, n_valid=n_valid)
    vmem = pl.BlockSpec(memory_space=pltpu.MemorySpace.VMEM)
    out_slab = pl.pallas_call(
        kernel,
        out_shape=jax.ShapeDtypeStruct((cout_p, nc), jnp.float32),
        in_specs=[vmem] * 8,
        out_specs=vmem,
        compiler_params=pltpu.CompilerParams(vmem_limit_bytes=vmem_limit),
    )(xflat, w1_9, g1, b1, w2_9, g2, b2, mask)

    # slab -> NCHW: slab column b = n*S + h*(W+2) + w
    y = out_slab[:Cout, :L].reshape(Cout, N, H + 2, W + 2)[:, :, :H, :W]
    return jnp.transpose(y, (1, 0, 2, 3))
    # TODO(synk): Dropout2d branch (dropout=True) not implemented; module default is False.


first2d_forward = jax.jit(first2d_forward_fn)


def init_first2d_params(key, in_channels, middle_channels, out_channels):
    """Synthetic params with the PyTorch module's shapes (Conv2d OIHW, BN gamma/beta).

    Conv biases are created for module fidelity but NOT used by the kernel:
    training-mode BN subtracts the per-channel batch mean immediately after the
    conv, so a constant per-channel bias cancels exactly.
    """
    k1, k2, k3, k4 = jax.random.split(key, 4)
    return {
        "w1": 0.1 * jax.random.normal(k1, (middle_channels, in_channels, 3, 3), jnp.float32),
        "b1": 0.05 * jax.random.normal(k2, (middle_channels,), jnp.float32),  # cancelled by BN
        "g1": jnp.ones((middle_channels,), jnp.float32),
        "beta1": jnp.zeros((middle_channels,), jnp.float32),
        "w2": 0.1 * jax.random.normal(k3, (out_channels, middle_channels, 3, 3), jnp.float32),
        "b2": 0.05 * jax.random.normal(k4, (out_channels,), jnp.float32),     # cancelled by BN
        "g2": jnp.ones((out_channels,), jnp.float32),
        "beta2": jnp.zeros((out_channels,), jnp.float32),
    }


def _reference_forward(x, params):
    """Pure-JAX reference: conv(+bias) -> training-mode BN -> ReLU, twice."""
    def block(z, w, b_conv, g, b_bn):
        z = jax.lax.conv_general_dilated(
            z, w, (1, 1), ((1, 1), (1, 1)),
            dimension_numbers=("NCHW", "OIHW", "NCHW"))
        z = z + b_conv.reshape(1, -1, 1, 1)
        mean = jnp.mean(z, axis=(0, 2, 3), keepdims=True)
        var = jnp.mean(jnp.square(z - mean), axis=(0, 2, 3), keepdims=True)
        z = (z - mean) * jax.lax.rsqrt(var + BN_EPS)
        z = z * g.reshape(1, -1, 1, 1) + b_bn.reshape(1, -1, 1, 1)
        return jnp.maximum(z, 0.0)

    z = block(x, params["w1"], params["b1"], params["g1"], params["beta1"])
    return block(z, params["w2"], params["b2"], params["g2"], params["beta2"])


if __name__ == "__main__":
    key = jax.random.PRNGKey(0)
    kx, kp = jax.random.split(key)

    N, Cin, Cmid, Cout, H, W = 2, 4, 8, 8, 16, 16
    x = jax.random.normal(kx, (N, Cin, H, W), jnp.float32)
    params = init_first2d_params(kp, Cin, Cmid, Cout)

    y = first2d_forward(x, params)
    jax.block_until_ready(y)

    assert y.shape == (N, Cout, H, W), y.shape
    assert bool(jnp.all(jnp.isfinite(y))), "non-finite output"
    assert bool(jnp.all(y >= 0.0)), "ReLU violated"

    y_ref = _reference_forward(x, params)
    err = float(jnp.max(jnp.abs(y - y_ref)))
    assert err < 1e-3, f"mismatch vs pure-JAX reference: max abs err {err}"

    print("KERNEL_OK")
</pallas_src>

<mosaic_0001>
module attributes {stable_mosaic.version = 11 : i64} {
  func.func @_first2d_kernel(%arg0: memref<8x768xf32, #tpu.memory_space<vmem>>, %arg1: memref<9x8x8xf32, #tpu.memory_space<vmem>>, %arg2: memref<8x1xf32, #tpu.memory_space<vmem>>, %arg3: memref<8x1xf32, #tpu.memory_space<vmem>>, %arg4: memref<9x8x8xf32, #tpu.memory_space<vmem>>, %arg5: memref<8x1xf32, #tpu.memory_space<vmem>>, %arg6: memref<8x1xf32, #tpu.memory_space<vmem>>, %arg7: memref<1x768xf32, #tpu.memory_space<vmem>>, %arg8: memref<8x768xf32, #tpu.memory_space<vmem>>) attributes {dimension_semantics = [], scalar_prefetch = 0 : i64, scratch_operands = 0 : i64, tpu.core_type = #tpu.core_type<tc>} {
    %c0 = arith.constant 0 : index
    %c0_0 = arith.constant 0 : index
    %0 = vector.load %arg7[%c0, %c0_0] : memref<1x768xf32, #tpu.memory_space<vmem>>, vector<1x768xf32>
    %c0_1 = arith.constant 0 : index
    %c0_2 = arith.constant 0 : index
    %1 = vector.load %arg0[%c0_1, %c0_2] : memref<8x768xf32, #tpu.memory_space<vmem>>, vector<8x768xf32>
    %c0_3 = arith.constant 0 : index
    %c0_4 = arith.constant 0 : index
    %c0_5 = arith.constant 0 : index
    %2 = vector.load %arg1[%c0_3, %c0_4, %c0_5] : memref<9x8x8xf32, #tpu.memory_space<vmem>>, vector<1x8x8xf32>
    %3 = vector.shape_cast %2 : vector<1x8x8xf32> to vector<8x8xf32>
    %cst = arith.constant dense<0.000000e+00> : vector<8x768xf32>
    %4 = tpu.matmul %3, %1, %cst {dimension_numbers = #tpu.dot_dimension_numbers<[1], [0], [0], [1], [0, 0, 1, 1], [], []>} : vector<8x8xf32>, vector<8x768xf32>, vector<8x768xf32> -> vector<8x768xf32>
    %c767_i32 = arith.constant 767 : i32
    %5 = tpu.dynamic_rotate %1 by %c767_i32 dim 1 : vector<8x768xf32>, i32 -> vector<8x768xf32>
    %c1 = arith.constant 1 : index
    %c0_6 = arith.constant 0 : index
    %c0_7 = arith.constant 0 : index
    %6 = vector.load %arg1[%c1, %c0_6, %c0_7] : memref<9x8x8xf32, #tpu.memory_space<vmem>>, vector<1x8x8xf32>
    %7 = vector.shape_cast %6 : vector<1x8x8xf32> to vector<8x8xf32>
    %cst_8 = arith.constant dense<0.000000e+00> : vector<8x768xf32>
    %8 = tpu.matmul %7, %5, %cst_8 {dimension_numbers = #tpu.dot_dimension_numbers<[1], [0], [0], [1], [0, 0, 1, 1], [], []>} : vector<8x8xf32>, vector<8x768xf32>, vector<8x768xf32> -> vector<8x768xf32>
    %9 = arith.addf %4, %8 : vector<8x768xf32>
    %c766_i32 = arith.constant 766 : i32
    %10 = tpu.dynamic_rotate %1 by %c766_i32 dim 1 : vector<8x768xf32>, i32 -> vector<8x768xf32>
    %c2 = arith.constant 2 : index
    %c0_9 = arith.constant 0 : index
    %c0_10 = arith.constant 0 : index
    %11 = vector.load %arg1[%c2, %c0_9, %c0_10] : memref<9x8x8xf32, #tpu.memory_space<vmem>>, vector<1x8x8xf32>
    %12 = vector.shape_cast %11 : vector<1x8x8xf32> to vector<8x8xf32>
    %cst_11 = arith.constant dense<0.000000e+00> : vector<8x768xf32>
    %13 = tpu.matmul %12, %10, %cst_11 {dimension_numbers = #tpu.dot_dimension_numbers<[1], [0], [0], [1], [0, 0, 1, 1], [], []>} : vector<8x8xf32>, vector<8x768xf32>, vector<8x768xf32> -> vector<8x768xf32>
    %14 = arith.addf %9, %13 : vector<8x768xf32>
    %c750_i32 = arith.constant 750 : i32
    %15 = tpu.dynamic_rotate %1 by %c750_i32 dim 1 : vector<8x768xf32>, i32 -> vector<8x768xf32>
    %c3 = arith.constant 3 : index
    %c0_12 = arith.constant 0 : index
    %c0_13 = arith.constant 0 : index
    %16 = vector.load %arg1[%c3, %c0_12, %c0_13] : memref<9x8x8xf32, #tpu.memory_space<vmem>>, vector<1x8x8xf32>
    %17 = vector.shape_cast %16 : vector<1x8x8xf32> to vector<8x8xf32>
    %cst_14 = arith.constant dense<0.000000e+00> : vector<8x768xf32>
    %18 = tpu.matmul %17, %15, %cst_14 {dimension_numbers = #tpu.dot_dimension_numbers<[1], [0], [0], [1], [0, 0, 1, 1], [], []>} : vector<8x8xf32>, vector<8x768xf32>, vector<8x768xf32> -> vector<8x768xf32>
    %19 = arith.addf %14, %18 : vector<8x768xf32>
    %c749_i32 = arith.constant 749 : i32
    %20 = tpu.dynamic_rotate %1 by %c749_i32 dim 1 : vector<8x768xf32>, i32 -> vector<8x768xf32>
    %c4 = arith.constant 4 : index
    %c0_15 = arith.constant 0 : index
    %c0_16 = arith.constant 0 : index
    %21 = vector.load %arg1[%c4, %c0_15, %c0_16] : memref<9x8x8xf32, #tpu.memory_space<vmem>>, vector<1x8x8xf32>
    %22 = vector.shape_cast %21 : vector<1x8x8xf32> to vector<8x8xf32>
    %cst_17 = arith.constant dense<0.000000e+00> : vector<8x768xf32>
    %23 = tpu.matmul %22, %20, %cst_17 {dimension_numbers = #tpu.dot_dimension_numbers<[1], [0], [0], [1], [0, 0, 1, 1], [], []>} : vector<8x8xf32>, vector<8x768xf32>, vector<8x768xf32> -> vector<8x768xf32>
    %24 = arith.addf %19, %23 : vector<8x768xf32>
    %c748_i32 = arith.constant 748 : i32
    %25 = tpu.dynamic_rotate %1 by %c748_i32 dim 1 : vector<8x768xf32>, i32 -> vector<8x768xf32>
    %c5 = arith.constant 5 : index
    %c0_18 = arith.constant 0 : index
    %c0_19 = arith.constant 0 : index
    %26 = vector.load %arg1[%c5, %c0_18, %c0_19] : memref<9x8x8xf32, #tpu.memory_space<vmem>>, vector<1x8x8xf32>
    %27 = vector.shape_cast %26 : vector<1x8x8xf32> to vector<8x8xf32>
    %cst_20 = arith.constant dense<0.000000e+00> : vector<8x768xf32>
    %28 = tpu.matmul %27, %25, %cst_20 {dimension_numbers = #tpu.dot_dimension_numbers<[1], [0], [0], [1], [0, 0, 1, 1], [], []>} : vector<8x8xf32>, vector<8x768xf32>, vector<8x768xf32> -> vector<8x768xf32>
    %29 = arith.addf %24, %28 : vector<8x768xf32>
    %c732_i32 = arith.constant 732 : i32
    %30 = tpu.dynamic_rotate %1 by %c732_i32 dim 1 : vector<8x768xf32>, i32 -> vector<8x768xf32>
    %c6 = arith.constant 6 : index
    %c0_21 = arith.constant 0 : index
    %c0_22 = arith.constant 0 : index
    %31 = vector.load %arg1[%c6, %c0_21, %c0_22] : memref<9x8x8xf32, #tpu.memory_space<vmem>>, vector<1x8x8xf32>
    %32 = vector.shape_cast %31 : vector<1x8x8xf32> to vector<8x8xf32>
    %cst_23 = arith.constant dense<0.000000e+00> : vector<8x768xf32>
    %33 = tpu.matmul %32, %30, %cst_23 {dimension_numbers = #tpu.dot_dimension_numbers<[1], [0], [0], [1], [0, 0, 1, 1], [], []>} : vector<8x8xf32>, vector<8x768xf32>, vector<8x768xf32> -> vector<8x768xf32>
    %34 = arith.addf %29, %33 : vector<8x768xf32>
    %c731_i32 = arith.constant 731 : i32
    %35 = tpu.dynamic_rotate %1 by %c731_i32 dim 1 : vector<8x768xf32>, i32 -> vector<8x768xf32>
    %c7 = arith.constant 7 : index
    %c0_24 = arith.constant 0 : index
    %c0_25 = arith.constant 0 : index
    %36 = vector.load %arg1[%c7, %c0_24, %c0_25] : memref<9x8x8xf32, #tpu.memory_space<vmem>>, vector<1x8x8xf32>
    %37 = vector.shape_cast %36 : vector<1x8x8xf32> to vector<8x8xf32>
    %cst_26 = arith.constant dense<0.000000e+00> : vector<8x768xf32>
    %38 = tpu.matmul %37, %35, %cst_26 {dimension_numbers = #tpu.dot_dimension_numbers<[1], [0], [0], [1], [0, 0, 1, 1], [], []>} : vector<8x8xf32>, vector<8x768xf32>, vector<8x768xf32> -> vector<8x768xf32>
    %39 = arith.addf %34, %38 : vector<8x768xf32>
    %c730_i32 = arith.constant 730 : i32
    %40 = tpu.dynamic_rotate %1 by %c730_i32 dim 1 : vector<8x768xf32>, i32 -> vector<8x768xf32>
    %c8 = arith.constant 8 : index
    %c0_27 = arith.constant 0 : index
    %c0_28 = arith.constant 0 : index
    %41 = vector.load %arg1[%c8, %c0_27, %c0_28] : memref<9x8x8xf32, #tpu.memory_space<vmem>>, vector<1x8x8xf32>
    %42 = vector.shape_cast %41 : vector<1x8x8xf32> to vector<8x8xf32>
    %cst_29 = arith.constant dense<0.000000e+00> : vector<8x768xf32>
    %43 = tpu.matmul %42, %40, %cst_29 {dimension_numbers = #tpu.dot_dimension_numbers<[1], [0], [0], [1], [0, 0, 1, 1], [], []>} : vector<8x8xf32>, vector<8x768xf32>, vector<8x768xf32> -> vector<8x768xf32>
    %44 = arith.addf %39, %43 : vector<8x768xf32>
    %c0_30 = arith.constant 0 : index
    %c0_31 = arith.constant 0 : index
    %45 = vector.load %arg2[%c0_30, %c0_31] : memref<8x1xf32, #tpu.memory_space<vmem>>, vector<8x1xf32>
    %c0_32 = arith.constant 0 : index
    %c0_33 = arith.constant 0 : index
    %46 = vector.load %arg3[%c0_32, %c0_33] : memref<8x1xf32, #tpu.memory_space<vmem>>, vector<8x1xf32>
    %47 = vector.shape_cast %0 : vector<1x768xf32> to vector<1x768xf32>
    %48 = vector.broadcast %47 : vector<1x768xf32> to vector<8x768xf32>
    %49 = arith.mulf %44, %48 : vector<8x768xf32>
    %cst_34 = arith.constant dense<0.000000e+00> : vector<8xf32>
    %50 = vector.multi_reduction <add>, %49, %cst_34 [1] : vector<8x768xf32> to vector<8xf32>
    %51 = vector.shape_cast %50 : vector<8xf32> to vector<8x1xf32>
    %cst_35 = arith.constant 0.001953125 : f32
    %52 = vector.broadcast %cst_35 : f32 to vector<8x1xf32>
    %53 = arith.mulf %51, %52 : vector<8x1xf32>
    %54 = vector.broadcast %53 : vector<8x1xf32> to vector<8x768xf32>
    %55 = arith.subf %44, %54 : vector<8x768xf32>
    %56 = arith.mulf %55, %48 : vector<8x768xf32>
    %57 = arith.mulf %56, %56 : vector<8x768xf32>
    %cst_36 = arith.constant dense<0.000000e+00> : vector<8xf32>
    %58 = vector.multi_reduction <add>, %57, %cst_36 [1] : vector<8x768xf32> to vector<8xf32>
    %59 = vector.shape_cast %58 : vector<8xf32> to vector<8x1xf32>
    %cst_37 = arith.constant 0.001953125 : f32
    %60 = vector.broadcast %cst_37 : f32 to vector<8x1xf32>
    %61 = arith.mulf %59, %60 : vector<8x1xf32>
    %cst_38 = arith.constant 9.99999974E-6 : f32
    %62 = vector.broadcast %cst_38 : f32 to vector<8x1xf32>
    %63 = arith.addf %61, %62 : vector<8x1xf32>
    %64 = math.rsqrt %63 : vector<8x1xf32>
    %65 = arith.mulf %45, %64 : vector<8x1xf32>
    %66 = arith.mulf %53, %65 : vector<8x1xf32>
    %67 = arith.subf %46, %66 : vector<8x1xf32>
    %68 = vector.broadcast %65 : vector<8x1xf32> to vector<8x768xf32>
    %69 = arith.mulf %44, %68 : vector<8x768xf32>
    %70 = vector.broadcast %67 : vector<8x1xf32> to vector<8x768xf32>
    %71 = arith.addf %69, %70 : vector<8x768xf32>
    %cst_39 = arith.constant 0.000000e+00 : f32
    %72 = vector.broadcast %cst_39 : f32 to vector<8x768xf32>
    %73 = arith.maximumf %71, %72 : vector<8x768xf32>
    %74 = vector.broadcast %0 : vector<1x768xf32> to vector<8x768xf32>
    %75 = arith.mulf %73, %74 : vector<8x768xf32>
    %c19_i32 = arith.constant 19 : i32
    %76 = tpu.dynamic_rotate %75 by %c19_i32 dim 1 : vector<8x768xf32>, i32 -> vector<8x768xf32>
    %c0_40 = arith.constant 0 : index
    %c0_41 = arith.constant 0 : index
    %c0_42 = arith.constant 0 : index
    %77 = vector.load %arg4[%c0_40, %c0_41, %c0_42] : memref<9x8x8xf32, #tpu.memory_space<vmem>>, vector<1x8x8xf32>
    %78 = vector.shape_cast %77 : vector<1x8x8xf32> to vector<8x8xf32>
    %cst_43 = arith.constant dense<0.000000e+00> : vector<8x768xf32>
    %79 = tpu.matmul %78, %76, %cst_43 {dimension_numbers = #tpu.dot_dimension_numbers<[1], [0], [0], [1], [0, 0, 1, 1], [], []>} : vector<8x8xf32>, vector<8x768xf32>, vector<8x768xf32> -> vector<8x768xf32>
    %c18_i32 = arith.constant 18 : i32
    %80 = tpu.dynamic_rotate %75 by %c18_i32 dim 1 : vector<8x768xf32>, i32 -> vector<8x768xf32>
    %c1_44 = arith.constant 1 : index
    %c0_45 = arith.constant 0 : index
    %c0_46 = arith.constant 0 : index
    %81 = vector.load %arg4[%c1_44, %c0_45, %c0_46] : memref<9x8x8xf32, #tpu.memory_space<vmem>>, vector<1x8x8xf32>
    %82 = vector.shape_cast %81 : vector<1x8x8xf32> to vector<8x8xf32>
    %cst_47 = arith.constant dense<0.000000e+00> : vector<8x768xf32>
    %83 = tpu.matmul %82, %80, %cst_47 {dimension_numbers = #tpu.dot_dimension_numbers<[1], [0], [0], [1], [0, 0, 1, 1], [], []>} : vector<8x8xf32>, vector<8x768xf32>, vector<8x768xf32> -> vector<8x768xf32>
    %84 = arith.addf %79, %83 : vector<8x768xf32>
    %c17_i32 = arith.constant 17 : i32
    %85 = tpu.dynamic_rotate %75 by %c17_i32 dim 1 : vector<8x768xf32>, i32 -> vector<8x768xf32>
    %c2_48 = arith.constant 2 : index
    %c0_49 = arith.constant 0 : index
    %c0_50 = arith.constant 0 : index
    %86 = vector.load %arg4[%c2_48, %c0_49, %c0_50] : memref<9x8x8xf32, #tpu.memory_space<vmem>>, vector<1x8x8xf32>
    %87 = vector.shape_cast %86 : vector<1x8x8xf32> to vector<8x8xf32>
    %cst_51 = arith.constant dense<0.000000e+00> : vector<8x768xf32>
    %88 = tpu.matmul %87, %85, %cst_51 {dimension_numbers = #tpu.dot_dimension_numbers<[1], [0], [0], [1], [0, 0, 1, 1], [], []>} : vector<8x8xf32>, vector<8x768xf32>, vector<8x768xf32> -> vector<8x768xf32>
    %89 = arith.addf %84, %88 : vector<8x768xf32>
    %c1_i32 = arith.constant 1 : i32
    %90 = tpu.dynamic_rotate %75 by %c1_i32 dim 1 : vector<8x768xf32>, i32 -> vector<8x768xf32>
    %c3_52 = arith.constant 3 : index
    %c0_53 = arith.constant 0 : index
    %c0_54 = arith.constant 0 : index
    %91 = vector.load %arg4[%c3_52, %c0_53, %c0_54] : memref<9x8x8xf32, #tpu.memory_space<vmem>>, vector<1x8x8xf32>
    %92 = vector.shape_cast %91 : vector<1x8x8xf32> to vector<8x8xf32>
    %cst_55 = arith.constant dense<0.000000e+00> : vector<8x768xf32>
    %93 = tpu.matmul %92, %90, %cst_55 {dimension_numbers = #tpu.dot_dimension_numbers<[1], [0], [0], [1], [0, 0, 1, 1], [], []>} : vector<8x8xf32>, vector<8x768xf32>, vector<8x768xf32> -> vector<8x768xf32>
    %94 = arith.addf %89, %93 : vector<8x768xf32>
    %c4_56 = arith.constant 4 : index
    %c0_57 = arith.constant 0 : index
    %c0_58 = arith.constant 0 : index
    %95 = vector.load %arg4[%c4_56, %c0_57, %c0_58] : memref<9x8x8xf32, #tpu.memory_space<vmem>>, vector<1x8x8xf32>
    %96 = vector.shape_cast %95 : vector<1x8x8xf32> to vector<8x8xf32>
    %cst_59 = arith.constant dense<0.000000e+00> : vector<8x768xf32>
    %97 = tpu.matmul %96, %75, %cst_59 {dimension_numbers = #tpu.dot_dimension_numbers<[1], [0], [0], [1], [0, 0, 1, 1], [], []>} : vector<8x8xf32>, vector<8x768xf32>, vector<8x768xf32> -> vector<8x768xf32>
    %98 = arith.addf %94, %97 : vector<8x768xf32>
    %c767_i32_60 = arith.constant 767 : i32
    %99 = tpu.dynamic_rotate %75 by %c767_i32_60 dim 1 : vector<8x768xf32>, i32 -> vector<8x768xf32>
    %c5_61 = arith.constant 5 : index
    %c0_62 = arith.constant 0 : index
    %c0_63 = arith.constant 0 : index
    %100 = vector.load %arg4[%c5_61, %c0_62, %c0_63] : memref<9x8x8xf32, #tpu.memory_space<vmem>>, vector<1x8x8xf32>
    %101 = vector.shape_cast %100 : vector<1x8x8xf32> to vector<8x8xf32>
    %cst_64 = arith.constant dense<0.000000e+00> : vector<8x768xf32>
    %102 = tpu.matmul %101, %99, %cst_64 {dimension_numbers = #tpu.dot_dimension_numbers<[1], [0], [0], [1], [0, 0, 1, 1], [], []>} : vector<8x8xf32>, vector<8x768xf32>, vector<8x768xf32> -> vector<8x768xf32>
    %103 = arith.addf %98, %102 : vector<8x768xf32>
    %c751_i32 = arith.constant 751 : i32
    %104 = tpu.dynamic_rotate %75 by %c751_i32 dim 1 : vector<8x768xf32>, i32 -> vector<8x768xf32>
    %c6_65 = arith.constant 6 : index
    %c0_66 = arith.constant 0 : index
    %c0_67 = arith.constant 0 : index
    %105 = vector.load %arg4[%c6_65, %c0_66, %c0_67] : memref<9x8x8xf32, #tpu.memory_space<vmem>>, vector<1x8x8xf32>
    %106 = vector.shape_cast %105 : vector<1x8x8xf32> to vector<8x8xf32>
    %cst_68 = arith.constant dense<0.000000e+00> : vector<8x768xf32>
    %107 = tpu.matmul %106, %104, %cst_68 {dimension_numbers = #tpu.dot_dimension_numbers<[1], [0], [0], [1], [0, 0, 1, 1], [], []>} : vector<8x8xf32>, vector<8x768xf32>, vector<8x768xf32> -> vector<8x768xf32>
    %108 = arith.addf %103, %107 : vector<8x768xf32>
    %c750_i32_69 = arith.constant 750 : i32
    %109 = tpu.dynamic_rotate %75 by %c750_i32_69 dim 1 : vector<8x768xf32>, i32 -> vector<8x768xf32>
    %c7_70 = arith.constant 7 : index
    %c0_71 = arith.constant 0 : index
    %c0_72 = arith.constant 0 : index
    %110 = vector.load %arg4[%c7_70, %c0_71, %c0_72] : memref<9x8x8xf32, #tpu.memory_space<vmem>>, vector<1x8x8xf32>
    %111 = vector.shape_cast %110 : vector<1x8x8xf32> to vector<8x8xf32>
    %cst_73 = arith.constant dense<0.000000e+00> : vector<8x768xf32>
    %112 = tpu.matmul %111, %109, %cst_73 {dimension_numbers = #tpu.dot_dimension_numbers<[1], [0], [0], [1], [0, 0, 1, 1], [], []>} : vector<8x8xf32>, vector<8x768xf32>, vector<8x768xf32> -> vector<8x768xf32>
    %113 = arith.addf %108, %112 : vector<8x768xf32>
    %c749_i32_74 = arith.constant 749 : i32
    %114 = tpu.dynamic_rotate %75 by %c749_i32_74 dim 1 : vector<8x768xf32>, i32 -> vector<8x768xf32>
    %c8_75 = arith.constant 8 : index
    %c0_76 = arith.constant 0 : index
    %c0_77 = arith.constant 0 : index
    %115 = vector.load %arg4[%c8_75, %c0_76, %c0_77] : memref<9x8x8xf32, #tpu.memory_space<vmem>>, vector<1x8x8xf32>
    %116 = vector.shape_cast %115 : vector<1x8x8xf32> to vector<8x8xf32>
    %cst_78 = arith.constant dense<0.000000e+00> : vector<8x768xf32>
    %117 = tpu.matmul %116, %114, %cst_78 {dimension_numbers = #tpu.dot_dimension_numbers<[1], [0], [0], [1], [0, 0, 1, 1], [], []>} : vector<8x8xf32>, vector<8x768xf32>, vector<8x768xf32> -> vector<8x768xf32>
    %118 = arith.addf %113, %117 : vector<8x768xf32>
    %c0_79 = arith.constant 0 : index
    %c0_80 = arith.constant 0 : index
    %119 = vector.load %arg5[%c0_79, %c0_80] : memref<8x1xf32, #tpu.memory_space<vmem>>, vector<8x1xf32>
    %c0_81 = arith.constant 0 : index
    %c0_82 = arith.constant 0 : index
    %120 = vector.load %arg6[%c0_81, %c0_82] : memref<8x1xf32, #tpu.memory_space<vmem>>, vector<8x1xf32>
    %121 = vector.shape_cast %0 : vector<1x768xf32> to vector<1x768xf32>
    %122 = vector.broadcast %121 : vector<1x768xf32> to vector<8x768xf32>
    %123 = arith.mulf %118, %122 : vector<8x768xf32>
    %cst_83 = arith.constant dense<0.000000e+00> : vector<8xf32>
    %124 = vector.multi_reduction <add>, %123, %cst_83 [1] : vector<8x768xf32> to vector<8xf32>
    %125 = vector.shape_cast %124 : vector<8xf32> to vector<8x1xf32>
    %cst_84 = arith.constant 0.001953125 : f32
    %126 = vector.broadcast %cst_84 : f32 to vector<8x1xf32>
    %127 = arith.mulf %125, %126 : vector<8x1xf32>
    %128 = vector.broadcast %127 : vector<8x1xf32> to vector<8x768xf32>
    %129 = arith.subf %118, %128 : vector<8x768xf32>
    %130 = arith.mulf %129, %122 : vector<8x768xf32>
    %131 = arith.mulf %130, %130 : vector<8x768xf32>
    %cst_85 = arith.constant dense<0.000000e+00> : vector<8xf32>
    %132 = vector.multi_reduction <add>, %131, %cst_85 [1] : vector<8x768xf32> to vector<8xf32>
    %133 = vector.shape_cast %132 : vector<8xf32> to vector<8x1xf32>
    %cst_86 = arith.constant 0.001953125 : f32
    %134 = vector.broadcast %cst_86 : f32 to vector<8x1xf32>
    %135 = arith.mulf %133, %134 : vector<8x1xf32>
    %cst_87 = arith.constant 9.99999974E-6 : f32
    %136 = vector.broadcast %cst_87 : f32 to vector<8x1xf32>
    %137 = arith.addf %135, %136 : vector<8x1xf32>
    %138 = math.rsqrt %137 : vector<8x1xf32>
    %139 = arith.mulf %119, %138 : vector<8x1xf32>
    %140 = arith.mulf %127, %139 : vector<8x1xf32>
    %141 = arith.subf %120, %140 : vector<8x1xf32>
    %142 = vector.broadcast %139 : vector<8x1xf32> to vector<8x768xf32>
    %143 = arith.mulf %118, %142 : vector<8x768xf32>
    %144 = vector.broadcast %141 : vector<8x1xf32> to vector<8x768xf32>
    %145 = arith.addf %143, %144 : vector<8x768xf32>
    %cst_88 = arith.constant 0.000000e+00 : f32
    %146 = vector.broadcast %cst_88 : f32 to vector<8x768xf32>
    %147 = arith.maximumf %145, %146 : vector<8x768xf32>
    %c0_89 = arith.constant 0 : index
    %c0_90 = arith.constant 0 : index
    %148 = vector.load %arg8[%c0_89, %c0_90] : memref<8x768xf32, #tpu.memory_space<vmem>>, vector<8x768xf32>
    tpu.vector_store %arg8[%c0_89, %c0_90], %147 {strides = array<i32>} : memref<8x768xf32, #tpu.memory_space<vmem>>, vector<8x768xf32>,
    return
  }
}

</mosaic_0001>

<llo_original>
// kernel: first2d_forward_fn.1
$region0: #{first2d_forward_fn.1}
  #allocation0 [shape = 'u32[]', space=smem, size = 0x4, offset = 0x4, fixed_abs, tag = 'smem constant byte address 0x4 - core index']
  #allocation1 [shape = 'u32[144,128]{1,0:T(1,128)}', space=vmem, size = 0x12000, scoped, tag = 'internal scratch']
  %s0 = inlined_call_operand.vmem [shape: f32[8,768], index: 0, kind: input, shape index: {}]
  %s1 = inlined_call_operand.vmem [shape: f32[9,8,8], index: 1, kind: input, shape index: {}]
  %s2 = inlined_call_operand.vmem [shape: f32[8,1], index: 2, kind: input, shape index: {}]
  %s3 = inlined_call_operand.vmem [shape: f32[8,1], index: 3, kind: input, shape index: {}]
  %s4 = inlined_call_operand.vmem [shape: f32[9,8,8], index: 4, kind: input, shape index: {}]
  %s5 = inlined_call_operand.vmem [shape: f32[8,1], index: 5, kind: input, shape index: {}]
  %s6 = inlined_call_operand.vmem [shape: f32[8,1], index: 6, kind: input, shape index: {}]
  %s7 = inlined_call_operand.vmem [shape: f32[1,768], index: 7, kind: input, shape index: {}]
  %s8 = inlined_call_operand.vmem [shape: f32[8,768], index: 8, kind: output, shape index: {}]
  %s9 = sld [smem:[#allocation0]]
  $region42: #{first2d_forward_fn.1} parent=0
    _
  %s11 = ssub.s32 1, %s9
  %s12 = scalar_select 0, %s11, %s9
  // Predicated region
  $region2: #{first2d_forward_fn.1} parent=0 // pred_check
    _
  $region3: #{first2d_forward_fn.1} parent=0 // pred_check_branch
    %14 = sbr.rel (0) target = $region5
  $region4: #{first2d_forward_fn.1} parent=0 // pred_region
    _
  $region5: #{first2d_forward_fn.1} parent=0 // pred_fallthru
    _
  // Predicated region
  $region6: #{first2d_forward_fn.1} parent=0 // pred_check
    _
  $region7: #{first2d_forward_fn.1} parent=0 // pred_check_branch
    %16 = sbr.rel (0) target = $region9
  $region8: #{first2d_forward_fn.1} parent=0 // pred_region
    _
  $region9: #{first2d_forward_fn.1} parent=0 // pred_fallthru
    _
  // Predicated region
  $region10: #{first2d_forward_fn.1} parent=0 // pred_check
    _
  $region11: #{first2d_forward_fn.1} parent=0 // pred_check_branch
    %18 = sbr.rel (0) target = $region13
  $region12: #{first2d_forward_fn.1} parent=0 // pred_region
    _
  $region13: #{first2d_forward_fn.1} parent=0 // pred_fallthru
    _
  // Predicated region
  $region14: #{first2d_forward_fn.1} parent=0 // pred_check
    _
  $region15: #{first2d_forward_fn.1} parent=0 // pred_check_branch
    %20 = sbr.rel (0) target = $region17
  $region16: #{first2d_forward_fn.1} parent=0 // pred_region
    _
  $region17: #{first2d_forward_fn.1} parent=0 // pred_fallthru
    _
  // Predicated region
  $region18: #{first2d_forward_fn.1} parent=0 // pred_check
    _
  $region19: #{first2d_forward_fn.1} parent=0 // pred_check_branch
    %22 = sbr.rel (0) target = $region21
  $region20: #{first2d_forward_fn.1} parent=0 // pred_region
    _
  $region21: #{first2d_forward_fn.1} parent=0 // pred_fallthru
    _
  // Predicated region
  $region22: #{first2d_forward_fn.1} parent=0 // pred_check
    _
  $region23: #{first2d_forward_fn.1} parent=0 // pred_check_branch
    %24 = sbr.rel (0) target = $region25
  $region24: #{first2d_forward_fn.1} parent=0 // pred_region
    _
  $region25: #{first2d_forward_fn.1} parent=0 // pred_fallthru
    _
  // Predicated region
  $region26: #{first2d_forward_fn.1} parent=0 // pred_check
    _
  $region27: #{first2d_forward_fn.1} parent=0 // pred_check_branch
    %26 = sbr.rel (0) target = $region29
  $region28: #{first2d_forward_fn.1} parent=0 // pred_region
    _
  $region29: #{first2d_forward_fn.1} parent=0 // pred_fallthru
    _
  // Predicated region
  $region30: #{first2d_forward_fn.1} parent=0 // pred_check
    _
  $region31: #{first2d_forward_fn.1} parent=0 // pred_check_branch
    %28 = sbr.rel (0) target = $region33
  $region32: #{first2d_forward_fn.1} parent=0 // pred_region
    _
  $region33: #{first2d_forward_fn.1} parent=0 // pred_fallthru
    _
  %v29 = vld [vmem:[%s7] sm:$0x3f]
  %v30 = vld [vmem:[%s0] sm:$0xff]
  %v31 = vld [vmem:[%s0 + $0x8] sm:$0xff]
  %v32 = vld [vmem:[%s0 + $0x10] sm:$0xff]
  %v33 = vld [vmem:[%s0 + $0x18] sm:$0xff]
  %v34 = vld [vmem:[%s0 + $0x20] sm:$0xff]
  %v35 = vld [vmem:[%s0 + $0x28] sm:$0xff]
  %v36 = vld [vmem:[%s1] sm:$0xff]
  %37 = vrot.lane.b32.xlu0 %v30, 127
  %v38 = vpop.permute.xlu0 %37
  %39 = vrot.lane.b32.xlu0 %v31, 127
  %v40 = vpop.permute.xlu0 %39
  %41 = vrot.lane.b32.xlu0 %v32, 127
  %v42 = vpop.permute.xlu0 %41
  %43 = vrot.lane.b32.xlu0 %v33, 127
  %v44 = vpop.permute.xlu0 %43
  %45 = vrot.lane.b32.xlu0 %v34, 127
  %v46 = vpop.permute.xlu0 %45
  %47 = vrot.lane.b32.xlu0 %v35, 127
  %v48 = vpop.permute.xlu0 %47
  %v49 = vlaneseq
  %v50 = vand.u32 %v49, 127
  %vm51 = vcmp.lt.s32.totalorder %v50, 127
  %v52 = vsel %vm51, %v46, %v48
  %v53 = vsel %vm51, %v44, %v46
  %v54 = vsel %vm51, %v42, %v44
  %v55 = vsel %vm51, %v40, %v42
  %v56 = vsel %vm51, %v38, %v40
  %v57 = vsel %vm51, %v48, %v38
  %s58 = scalar_lea.vmem %s1, 8
  %v59 = vld [vmem:[%s58] sm:$0xff]
  %vm60 = vcmask 64512
  %v62 = vsel %vm60, %v59, 0
  %64 = vmatprep.subr.mxu0 %v55
  %65 = vmatpush1.msra.mxu0 %v56
  %66 = vmatprep.subr.mxu0 0.0
  %67 = vmatpush1.msra.mxu0 0.0
  %68 = vmatprep.subr.mxu0 0.0
  %69 = vmatpush1.msra.mxu0 0.0
  %70 = vmatprep.subr.mxu0 0.0
  %71 = vmatpush1.msra.mxu0 0.0
  %72 = vmatprep.subr.mxu0 0.0
  %73 = vmatpush1.msra.mxu0 0.0
  %74 = vmatprep.subr.mxu0 0.0
  %75 = vmatpush1.msra.mxu0 0.0
  %76 = vmatprep.subr.mxu0 0.0
  %77 = vmatpush1.msra.mxu0 0.0
  %78 = vmatprep.subr.mxu0 0.0
  %79 = vmatpush1.msra.mxu0 0.0
  %80 = vmatprep.subr.mxu0 0.0
  %81 = vmatpush1.msra.mxu0 0.0
  %82 = vmatprep.subr.mxu0 0.0
  %83 = vmatpush1.msra.mxu0 0.0
  %84 = vmatprep.subr.mxu0 0.0
  %85 = vmatpush1.msra.mxu0 0.0
  %86 = vmatprep.subr.mxu0 0.0
  %87 = vmatpush1.msra.mxu0 0.0
  %88 = vmatprep.subr.mxu0 0.0
  %89 = vmatpush1.msra.mxu0 0.0
  %90 = vmatprep.subr.mxu0 0.0
  %91 = vmatpush1.msra.mxu0 0.0
  %92 = vmatprep.subr.mxu0 0.0
  %93 = vmatpush1.msra.mxu0 0.0
  %94 = vmatprep.subr.mxu0 0.0
  %95 = vmatpush1.msra.mxu0 0.0
  %96 = vmatprep.subr.mxu0 0.0
  %97 = vmatpush1.msra.mxu0 0.0
  %98 = vmatprep.subr.mxu0 0.0
  %99 = vmatpush1.msra.mxu0 0.0
  %100 = vmatprep.subr.mxu0 0.0
  %101 = vmatpush1.msra.mxu0 0.0
  %102 = vmatprep.subr.mxu0 0.0
  %103 = vmatpush1.msra.mxu0 0.0
  %104 = vmatprep.subr.mxu0 0.0
  %105 = vmatpush1.msra.mxu0 0.0
  %106 = vmatprep.subr.mxu0 0.0
  %107 = vmatpush1.msra.mxu0 0.0
  %108 = vmatprep.subr.mxu0 0.0
  %109 = vmatpush1.msra.mxu0 0.0
  %110 = vmatprep.subr.mxu0 0.0
  %111 = vmatpush1.msra.mxu0 0.0
  %112 = vmatprep.subr.mxu0 0.0
  %113 = vmatpush1.msra.mxu0 0.0
  %114 = vmatprep.subr.mxu0 0.0
  %115 = vmatpush1.msra.mxu0 0.0
  %116 = vmatprep.subr.mxu0 0.0
  %117 = vmatpush1.msra.mxu0 0.0
  %118 = vmatprep.subr.mxu0 0.0
  %119 = vmatpush1.msra.mxu0 0.0
  %120 = vmatprep.subr.mxu0 0.0
  %121 = vmatpush1.msra.mxu0 0.0
  %122 = vmatprep.subr.mxu0 0.0
  %123 = vmatpush1.msra.mxu0 0.0
  %124 = vmatprep.subr.mxu0 0.0
  %125 = vmatpush1.msra.mxu0 0.0
  %126 = vmatprep.subr.mxu0 0.0
  %127 = vmatpush1.msra.mxu0 0.0
  %128 = vmatprep.mubr.f32.mxu0 0.0
  %129 = vmatmul.mubr.f32.gmra.mrb[0].mxu0 %v62
  %v130 = vpop.f32.mrb[0].mxu0
  %v131 = vadd.f32 0.0, %v130
  %v132 = vpop.f32.mrb[0].mxu0
  %v133 = vadd.f32 0.0, %v132
  %134 = vdwg.mxu0
  %135 = vmatprep.subr.mxu0 %v53
  %136 = vmatpush1.msra.mxu0 %v54
  %137 = vmatprep.subr.mxu0 0.0
  %138 = vmatpush1.msra.mxu0 0.0
  %139 = vmatprep.subr.mxu0 0.0
  %140 = vmatpush1.msra.mxu0 0.0
  %141 = vmatprep.subr.mxu0 0.0
  %142 = vmatpush1.msra.mxu0 0.0
  %143 = vmatprep.subr.mxu0 0.0
  %144 = vmatpush1.msra.mxu0 0.0
  %145 = vmatprep.subr.mxu0 0.0
  %146 = vmatpush1.msra.mxu0 0.0
  %147 = vmatprep.subr.mxu0 0.0
  %148 = vmatpush1.msra.mxu0 0.0
  %149 = vmatprep.subr.mxu0 0.0
  %150 = vmatpush1.msra.mxu0 0.0
  %151 = vmatprep.subr.mxu0 0.0
  %152 = vmatpush1.msra.mxu0 0.0
  %153 = vmatprep.subr.mxu0 0.0
  %154 = vmatpush1.msra.mxu0 0.0
  %155 = vmatprep.subr.mxu0 0.0
  %156 = vmatpush1.msra.mxu0 0.0
  %157 = vmatprep.subr.mxu0 0.0
  %158 = vmatpush1.msra.mxu0 0.0
  %159 = vmatprep.subr.mxu0 0.0
  %160 = vmatpush1.msra.mxu0 0.0
  %161 = vmatprep.subr.mxu0 0.0
  %162 = vmatpush1.msra.mxu0 0.0
  %163 = vmatprep.subr.mxu0 0.0
  %164 = vmatpush1.msra.mxu0 0.0
  %165 = vmatprep.subr.mxu0 0.0
  %166 = vmatpush1.msra.mxu0 0.0
  %167 = vmatprep.subr.mxu0 0.0
  %168 = vmatpush1.msra.mxu0 0.0
  %169 = vmatprep.subr.mxu0 0.0
  %170 = vmatpush1.msra.mxu0 0.0
  %171 = vmatprep.subr.mxu0 0.0
  %172 = vmatpush1.msra.mxu0 0.0
  %173 = vmatprep.subr.mxu0 0.0
  %174 = vmatpush1.msra.mxu0 0.0
  %175 = vmatprep.subr.mxu0 0.0
  %176 = vmatpush1.msra.mxu0 0.0
  %177 = vmatprep.subr.mxu0 0.0
  %178 = vmatpush1.msra.mxu0 0.0
  %179 = vmatprep.subr.mxu0 0.0
  %180 = vmatpush1.msra.mxu0 0.0
  %181 = vmatprep.subr.mxu0 0.0
  %182 = vmatpush1.msra.mxu0 0.0
  %183 = vmatprep.subr.mxu0 0.0
  %184 = vmatpush1.msra.mxu0 0.0
  %185 = vmatprep.subr.mxu0 0.0
  %186 = vmatpush1.msra.mxu0 0.0
  %187 = vmatprep.subr.mxu0 0.0
  %188 = vmatpush1.msra.mxu0 0.0
  %189 = vmatprep.subr.mxu0 0.0
  %190 = vmatpush1.msra.mxu0 0.0
  %191 = vmatprep.subr.mxu0 0.0
  %192 = vmatpush1.msra.mxu0 0.0
  %193 = vmatprep.subr.mxu0 0.0
  %194 = vmatpush1.msra.mxu0 0.0
  %195 = vmatprep.subr.mxu0 0.0
  %196 = vmatpush1.msra.mxu0 0.0
  %197 = vmatprep.subr.mxu0 0.0
  %198 = vmatpush1.msra.mxu0 0.0
  %199 = vmatprep.mubr.f32.mxu0 0.0
  %200 = vmatmul.mubr.f32.gmra.mrb[0].mxu0 %v62
  %v201 = vpop.f32.mrb[0].mxu0
  %v202 = vadd.f32 0.0, %v201
  %v203 = vpop.f32.mrb[0].mxu0
  %v204 = vadd.f32 0.0, %v203
  %205 = vdwg.mxu0
  %206 = vmatprep.subr.mxu0 %v57
  %207 = vmatpush1.msra.mxu0 %v52
  %208 = vmatprep.subr.mxu0 0.0
  %209 = vmatpush1.msra.mxu0 0.0
  %210 = vmatprep.subr.mxu0 0.0
  %211 = vmatpush1.msra.mxu0 0.0
  %212 = vmatprep.subr.mxu0 0.0
  %213 = vmatpush1.msra.mxu0 0.0
  %214 = vmatprep.subr.mxu0 0.0
  %215 = vmatpush1.msra.mxu0 0.0
  %216 = vmatprep.subr.mxu0 0.0
  %217 = vmatpush1.msra.mxu0 0.0
  %218 = vmatprep.subr.mxu0 0.0
  %219 = vmatpush1.msra.mxu0 0.0
  %220 = vmatprep.subr.mxu0 0.0
  %221 = vmatpush1.msra.mxu0 0.0
  %222 = vmatprep.subr.mxu0 0.0
  %223 = vmatpush1.msra.mxu0 0.0
  %224 = vmatprep.subr.mxu0 0.0
  %225 = vmatpush1.msra.mxu0 0.0
  %226 = vmatprep.subr.mxu0 0.0
  %227 = vmatpush1.msra.mxu0 0.0
  %228 = vmatprep.subr.mxu0 0.0
  %229 = vmatpush1.msra.mxu0 0.0
  %230 = vmatprep.subr.mxu0 0.0
  %231 = vmatpush1.msra.mxu0 0.0
  %232 = vmatprep.subr.mxu0 0.0
  %233 = vmatpush1.msra.mxu0 0.0
  %234 = vmatprep.subr.mxu0 0.0
  %235 = vmatpush1.msra.mxu0 0.0
  %236 = vmatprep.subr.mxu0 0.0
  %237 = vmatpush1.msra.mxu0 0.0
  %238 = vmatprep.subr.mxu0 0.0
  %239 = vmatpush1.msra.mxu0 0.0
  %240 = vmatprep.subr.mxu0 0.0
  %241 = vmatpush1.msra.mxu0 0.0
  %242 = vmatprep.subr.mxu0 0.0
  %243 = vmatpush1.msra.mxu0 0.0
  %244 = vmatprep.subr.mxu0 0.0
  %245 = vmatpush1.msra.mxu0 0.0
  %246 = vmatprep.subr.mxu0 0.0
  %247 = vmatpush1.msra.mxu0 0.0
  %248 = vmatprep.subr.mxu0 0.0
  %249 = vmatpush1.msra.mxu0 0.0
  %250 = vmatprep.subr.mxu0 0.0
  %251 = vmatpush1.msra.mxu0 0.0
  %252 = vmatprep.subr.mxu0 0.0
  %253 = vmatpush1.msra.mxu0 0.0
  %254 = vmatprep.subr.mxu0 0.0
  %255 = vmatpush1.msra.mxu0 0.0
  %256 = vmatprep.subr.mxu0 0.0
  %257 = vmatpush1.msra.mxu0 0.0
  %258 = vmatprep.subr.mxu0 0.0
  %259 = vmatpush1.msra.mxu0 0.0
  %260 = vmatprep.subr.mxu0 0.0
  %261 = vmatpush1.msra.mxu0 0.0
  %262 = vmatprep.subr.mxu0 0.0
  %263 = vmatpush1.msra.mxu0 0.0
  %264 = vmatprep.subr.mxu0 0.0
  %265 = vmatpush1.msra.mxu0 0.0
  %266 = vmatprep.subr.mxu0 0.0
  %267 = vmatpush1.msra.mxu0 0.0
  %268 = vmatprep.subr.mxu0 0.0
  %269 = vmatpush1.msra.mxu0 0.0
  %270 = vmatprep.mubr.f32.mxu0 0.0
  %271 = vmatmul.mubr.f32.gmra.mrb[0].mxu0 %v62
  %v272 = vpop.f32.mrb[0].mxu0
  %v273 = vadd.f32 0.0, %v272
  %v274 = vpop.f32.mrb[0].mxu0
  %v275 = vadd.f32 0.0, %v274
  %276 = vdwg.mxu0
  %v278 = vsel %vm60, %v36, 0
  %280 = vmatprep.subr.mxu0 %v31
  %281 = vmatpush1.msra.mxu0 %v30
  %282 = vmatprep.subr.mxu0 0.0
  %283 = vmatpush1.msra.mxu0 0.0
  %284 = vmatprep.subr.mxu0 0.0
  %285 = vmatpush1.msra.mxu0 0.0
  %286 = vmatprep.subr.mxu0 0.0
  %287 = vmatpush1.msra.mxu0 0.0
  %288 = vmatprep.subr.mxu0 0.0
  %289 = vmatpush1.msra.mxu0 0.0
  %290 = vmatprep.subr.mxu0 0.0
  %291 = vmatpush1.msra.mxu0 0.0
  %292 = vmatprep.subr.mxu0 0.0
  %293 = vmatpush1.msra.mxu0 0.0
  %294 = vmatprep.subr.mxu0 0.0
  %295 = vmatpush1.msra.mxu0 0.0
  %296 = vmatprep.subr.mxu0 0.0
  %297 = vmatpush1.msra.mxu0 0.0
  %298 = vmatprep.subr.mxu0 0.0
  %299 = vmatpush1.msra.mxu0 0.0
  %300 = vmatprep.subr.mxu0 0.0
  %301 = vmatpush1.msra.mxu0 0.0
  %302 = vmatprep.subr.mxu0 0.0
  %303 = vmatpush1.msra.mxu0 0.0
  %304 = vmatprep.subr.mxu0 0.0
  %305 = vmatpush1.msra.mxu0 0.0
  %306 = vmatprep.subr.mxu0 0.0
  %307 = vmatpush1.msra.mxu0 0.0
  %308 = vmatprep.subr.mxu0 0.0
  %309 = vmatpush1.msra.mxu0 0.0
  %310 = vmatprep.subr.mxu0 0.0
  %311 = vmatpush1.msra.mxu0 0.0
  %312 = vmatprep.subr.mxu0 0.0
  %313 = vmatpush1.msra.mxu0 0.0
  %314 = vmatprep.subr.mxu0 0.0
  %315 = vmatpush1.msra.mxu0 0.0
  %316 = vmatprep.subr.mxu0 0.0
  %317 = vmatpush1.msra.mxu0 0.0
  %318 = vmatprep.subr.mxu0 0.0
  %319 = vmatpush1.msra.mxu0 0.0
  %320 = vmatprep.subr.mxu0 0.0
  %321 = vmatpush1.msra.mxu0 0.0
  %322 = vmatprep.subr.mxu0 0.0
  %323 = vmatpush1.msra.mxu0 0.0
  %324 = vmatprep.subr.mxu0 0.0
  %325 = vmatpush1.msra.mxu0 0.0
  %326 = vmatprep.subr.mxu0 0.0
  %327 = vmatpush1.msra.mxu0 0.0
  %328 = vmatprep.subr.mxu0 0.0
  %329 = vmatpush1.msra.mxu0 0.0
  %330 = vmatprep.subr.mxu0 0.0
  %331 = vmatpush1.msra.mxu0 0.0
  %332 = vmatprep.subr.mxu0 0.0
  %333 = vmatpush1.msra.mxu0 0.0
  %334 = vmatprep.subr.mxu0 0.0
  %335 = vmatpush1.msra.mxu0 0.0
  %336 = vmatprep.subr.mxu0 0.0
  %337 = vmatpush1.msra.mxu0 0.0
  %338 = vmatprep.subr.mxu0 0.0
  %339 = vmatpush1.msra.mxu0 0.0
  %340 = vmatprep.subr.mxu0 0.0
  %341 = vmatpush1.msra.mxu0 0.0
  %342 = vmatprep.subr.mxu0 0.0
  %343 = vmatpush1.msra.mxu0 0.0
  %344 = vmatprep.mubr.f32.mxu0 0.0
  %345 = vmatmul.mubr.f32.gmra.mrb[0].mxu0 %v278
  %v346 = vpop.f32.mrb[0].mxu0
  %v347 = vadd.f32 %v131, %v346
  %v348 = vpop.f32.mrb[0].mxu0
  %v349 = vadd.f32 %v133, %v348
  %350 = vdwg.mxu0
  %351 = vmatprep.subr.mxu0 %v33
  %352 = vmatpush1.msra.mxu0 %v32
  %353 = vmatprep.subr.mxu0 0.0
  %354 = vmatpush1.msra.mxu0 0.0
  %355 = vmatprep.subr.mxu0 0.0
  %356 = vmatpush1.msra.mxu0 0.0
  %357 = vmatprep.subr.mxu0 0.0
  %358 = vmatpush1.msra.mxu0 0.0
  %359 = vmatprep.subr.mxu0 0.0
  %360 = vmatpush1.msra.mxu0 0.0
  %361 = vmatprep.subr.mxu0 0.0
  %362 = vmatpush1.msra.mxu0 0.0
  %363 = vmatprep.subr.mxu0 0.0
  %364 = vmatpush1.msra.mxu0 0.0
  %365 = vmatprep.subr.mxu0 0.0
  %366 = vmatpush1.msra.mxu0 0.0
  %367 = vmatprep.subr.mxu0 0.0
  %368 = vmatpush1.msra.mxu0 0.0
  %369 = vmatprep.subr.mxu0 0.0
  %370 = vmatpush1.msra.mxu0 0.0
  %371 = vmatprep.subr.mxu0 0.0
  %372 = vmatpush1.msra.mxu0 0.0
  %373 = vmatprep.subr.mxu0 0.0
  %374 = vmatpush1.msra.mxu0 0.0
  %375 = vmatprep.subr.mxu0 0.0
  %376 = vmatpush1.msra.mxu0 0.0
  %377 = vmatprep.subr.mxu0 0.0
  %378 = vmatpush1.msra.mxu0 0.0
  %379 = vmatprep.subr.mxu0 0.0
  %380 = vmatpush1.msra.mxu0 0.0
  %381 = vmatprep.subr.mxu0 0.0
  %382 = vmatpush1.msra.mxu0 0.0
  %383 = vmatprep.subr.mxu0 0.0
  %384 = vmatpush1.msra.mxu0 0.0
  %385 = vmatprep.subr.mxu0 0.0
  %386 = vmatpush1.msra.mxu0 0.0
  %387 = vmatprep.subr.mxu0 0.0
  %388 = vmatpush1.msra.mxu0 0.0
  %389 = vmatprep.subr.mxu0 0.0
  %390 = vmatpush1.msra.mxu0 0.0
  %391 = vmatprep.subr.mxu0 0.0
  %392 = vmatpush1.msra.mxu0 0.0
  %393 = vmatprep.subr.mxu0 0.0
  %394 = vmatpush1.msra.mxu0 0.0
  %395 = vmatprep.subr.mxu0 0.0
  %396 = vmatpush1.msra.mxu0 0.0
  %397 = vmatprep.subr.mxu0 0.0
  %398 = vmatpush1.msra.mxu0 0.0
  %399 = vmatprep.subr.mxu0 0.0
  %400 = vmatpush1.msra.mxu0 0.0
  %401 = vmatprep.subr.mxu0 0.0
  %402 = vmatpush1.msra.mxu0 0.0
  %403 = vmatprep.subr.mxu0 0.0
  %404 = vmatpush1.msra.mxu0 0.0
  %405 = vmatprep.subr.mxu0 0.0
  %406 = vmatpush1.msra.mxu0 0.0
  %407 = vmatprep.subr.mxu0 0.0
  %408 = vmatpush1.msra.mxu0 0.0
  %409 = vmatprep.subr.mxu0 0.0
  %410 = vmatpush1.msra.mxu0 0.0
  %411 = vmatprep.subr.mxu0 0.0
  %412 = vmatpush1.msra.mxu0 0.0
  %413 = vmatprep.subr.mxu0 0.0
  %414 = vmatpush1.msra.mxu0 0.0
  %415 = vmatprep.mubr.f32.mxu0 0.0
  %416 = vmatmul.mubr.f32.gmra.mrb[0].mxu0 %v278
  %v417 = vpop.f32.mrb[0].mxu0
  %v418 = vadd.f32 %v202, %v417
  %v419 = vpop.f32.mrb[0].mxu0
  %v420 = vadd.f32 %v204, %v419
  %421 = vdwg.mxu0
  %422 = vmatprep.subr.mxu0 %v35
  %423 = vmatpush1.msra.mxu0 %v34
  %424 = vmatprep.subr.mxu0 0.0
  %425 = vmatpush1.msra.mxu0 0.0
  %426 = vmatprep.subr.mxu0 0.0
  %427 = vmatpush1.msra.mxu0 0.0
  %428 = vmatprep.subr.mxu0 0.0
  %429 = vmatpush1.msra.mxu0 0.0
  %430 = vmatprep.subr.mxu0 0.0
  %431 = vmatpush1.msra.mxu0 0.0
  %432 = vmatprep.subr.mxu0 0.0
  %433 = vmatpush1.msra.mxu0 0.0
  %434 = vmatprep.subr.mxu0 0.0
  %435 = vmatpush1.msra.mxu0 0.0
  %436 = vmatprep.subr.mxu0 0.0
  %437 = vmatpush1.msra.mxu0 0.0
  %438 = vmatprep.subr.mxu0 0.0
  %439 = vmatpush1.msra.mxu0 0.0
  %440 = vmatprep.subr.mxu0 0.0
  %441 = vmatpush1.msra.mxu0 0.0
  %442 = vmatprep.subr.mxu0 0.0
  %443 = vmatpush1.msra.mxu0 0.0
  %444 = vmatprep.subr.mxu0 0.0
  %445 = vmatpush1.msra.mxu0 0.0
  %446 = vmatprep.subr.mxu0 0.0
  %447 = vmatpush1.msra.mxu0 0.0
  %448 = vmatprep.subr.mxu0 0.0
  %449 = vmatpush1.msra.mxu0 0.0
  %450 = vmatprep.subr.mxu0 0.0
  %451 = vmatpush1.msra.mxu0 0.0
  %452 = vmatprep.subr.mxu0 0.0
  %453 = vmatpush1.msra.mxu0 0.0
  %454 = vmatprep.subr.mxu0 0.0
  %455 = vmatpush1.msra.mxu0 0.0
  %456 = vmatprep.subr.mxu0 0.0
  %457 = vmatpush1.msra.mxu0 0.0
  %458 = vmatprep.subr.mxu0 0.0
  %459 = vmatpush1.msra.mxu0 0.0
  %460 = vmatprep.subr.mxu0 0.0
  %461 = vmatpush1.msra.mxu0 0.0
  %462 = vmatprep.subr.mxu0 0.0
  %463 = vmatpush1.msra.mxu0 0.0
  %464 = vmatprep.subr.mxu0 0.0
  %465 = vmatpush1.msra.mxu0 0.0
  %466 = vmatprep.subr.mxu0 0.0
  %467 = vmatpush1.msra.mxu0 0.0
  %468 = vmatprep.subr.mxu0 0.0
  %469 = vmatpush1.msra.mxu0 0.0
  %470 = vmatprep.subr.mxu0 0.0
  %471 = vmatpush1.msra.mxu0 0.0
  %472 = vmatprep.subr.mxu0 0.0
  %473 = vmatpush1.msra.mxu0 0.0
  %474 = vmatprep.subr.mxu0 0.0
  %475 = vmatpush1.msra.mxu0 0.0
  %476 = vmatprep.subr.mxu0 0.0
  %477 = vmatpush1.msra.mxu0 0.0
  %478 = vmatprep.subr.mxu0 0.0
  %479 = vmatpush1.msra.mxu0 0.0
  %480 = vmatprep.subr.mxu0 0.0
  %481 = vmatpush1.msra.mxu0 0.0
  %482 = vmatprep.subr.mxu0 0.0
  %483 = vmatpush1.msra.mxu0 0.0
  %484 = vmatprep.subr.mxu0 0.0
  %485 = vmatpush1.msra.mxu0 0.0
  %486 = vmatprep.mubr.f32.mxu0 0.0
  %487 = vmatmul.mubr.f32.gmra.mrb[0].mxu0 %v278
  %v488 = vpop.f32.mrb[0].mxu0
  %v489 = vadd.f32 %v273, %v488
  %v490 = vpop.f32.mrb[0].mxu0
  %v491 = vadd.f32 %v275, %v490
  %492 = vdwg.mxu0
  %493 = vrot.lane.b32.xlu0 %v30, 126
  %v494 = vpop.permute.xlu0 %493
  %495 = vrot.lane.b32.xlu0 %v31, 126
  %v496 = vpop.permute.xlu0 %495
  %497 = vrot.lane.b32.xlu0 %v32, 126
  %v498 = vpop.permute.xlu0 %497
  %499 = vrot.lane.b32.xlu0 %v33, 126
  %v500 = vpop.permute.xlu0 %499
  %501 = vrot.lane.b32.xlu0 %v34, 126
  %v502 = vpop.permute.xlu0 %501
  %503 = vrot.lane.b32.xlu0 %v35, 126
  %v504 = vpop.permute.xlu0 %503
  %vm505 = vcmp.lt.s32.totalorder %v50, 126
  %v506 = vsel %vm505, %v502, %v504
  %v507 = vsel %vm505, %v500, %v502
  %v508 = vsel %vm505, %v498, %v500
  %v509 = vsel %vm505, %v496, %v498
  %v510 = vsel %vm505, %v494, %v496
  %v511 = vsel %vm505, %v504, %v494
  %s512 = scalar_lea.vmem %s1, 16
  %v513 = vld [vmem:[%s512] sm:$0xff]
  %v515 = vsel %vm60, %v513, 0
  %517 = vmatprep.subr.mxu0 %v509
  %518 = vmatpush1.msra.mxu0 %v510
  %519 = vmatprep.subr.mxu0 0.0
  %520 = vmatpush1.msra.mxu0 0.0
  %521 = vmatprep.subr.mxu0 0.0
  %522 = vmatpush1.msra.mxu0 0.0
  %523 = vmatprep.subr.mxu0 0.0
  %524 = vmatpush1.msra.mxu0 0.0
  %525 = vmatprep.subr.mxu0 0.0
  %526 = vmatpush1.msra.mxu0 0.0
  %527 = vmatprep.subr.mxu0 0.0
  %528 = vmatpush1.msra.mxu0 0.0
  %529 = vmatprep.subr.mxu0 0.0
  %530 = vmatpush1.msra.mxu0 0.0
  %531 = vmatprep.subr.mxu0 0.0
  %532 = vmatpush1.msra.mxu0 0.0
  %533 = vmatprep.subr.mxu0 0.0
  %534 = vmatpush1.msra.mxu0 0.0
  %535 = vmatprep.subr.mxu0 0.0
  %536 = vmatpush1.msra.mxu0 0.0
  %537 = vmatprep.subr.mxu0 0.0
  %538 = vmatpush1.msra.mxu0 0.0
  %539 = vmatprep.subr.mxu0 0.0
  %540 = vmatpush1.msra.mxu0 0.0
  %541 = vmatprep.subr.mxu0 0.0
  %542 = vmatpush1.msra.mxu0 0.0
  %543 = vmatprep.subr.mxu0 0.0
  %544 = vmatpush1.msra.mxu0 0.0
  %545 = vmatprep.subr.mxu0 0.0
  %546 = vmatpush1.msra.mxu0 0.0
  %547 = vmatprep.subr.mxu0 0.0
  %548 = vmatpush1.msra.mxu0 0.0
  %549 = vmatprep.subr.mxu0 0.0
  %550 = vmatpush1.msra.mxu0 0.0
  %551 = vmatprep.subr.mxu0 0.0
  %552 = vmatpush1.msra.mxu0 0.0
  %553 = vmatprep.subr.mxu0 0.0
  %554 = vmatpush1.msra.mxu0 0.0
  %555 = vmatprep.subr.mxu0 0.0
  %556 = vmatpush1.msra.mxu0 0.0
  %557 = vmatprep.subr.mxu0 0.0
  %558 = vmatpush1.msra.mxu0 0.0
  %559 = vmatprep.subr.mxu0 0.0
  %560 = vmatpush1.msra.mxu0 0.0
  %561 = vmatprep.subr.mxu0 0.0
  %562 = vmatpush1.msra.mxu0 0.0
  %563 = vmatprep.subr.mxu0 0.0
  %564 = vmatpush1.msra.mxu0 0.0
  %565 = vmatprep.subr.mxu0 0.0
  %566 = vmatpush1.msra.mxu0 0.0
  %567 = vmatprep.subr.mxu0 0.0
  %568 = vmatpush1.msra.mxu0 0.0
  %569 = vmatprep.subr.mxu0 0.0
  %570 = vmatpush1.msra.mxu0 0.0
  %571 = vmatprep.subr.mxu0 0.0
  %572 = vmatpush1.msra.mxu0 0.0
  %573 = vmatprep.subr.mxu0 0.0
  %574 = vmatpush1.msra.mxu0 0.0
  %575 = vmatprep.subr.mxu0 0.0
  %576 = vmatpush1.msra.mxu0 0.0
  %577 = vmatprep.subr.mxu0 0.0
  %578 = vmatpush1.msra.mxu0 0.0
  %579 = vmatprep.subr.mxu0 0.0
  %580 = vmatpush1.msra.mxu0 0.0
  %581 = vmatprep.mubr.f32.mxu0 0.0
  %582 = vmatmul.mubr.f32.gmra.mrb[0].mxu0 %v515
  %v583 = vpop.f32.mrb[0].mxu0
  %v584 = vadd.f32 0.0, %v583
  %v585 = vpop.f32.mrb[0].mxu0
  %v586 = vadd.f32 0.0, %v585
  %587 = vdwg.mxu0
  %588 = vmatprep.subr.mxu0 %v507
  %589 = vmatpush1.msra.mxu0 %v508
  %590 = vmatprep.subr.mxu0 0.0
  %591 = vmatpush1.msra.mxu0 0.0
  %592 = vmatprep.subr.mxu0 0.0
  %593 = vmatpush1.msra.mxu0 0.0
  %594 = vmatprep.subr.mxu0 0.0
  %595 = vmatpush1.msra.mxu0 0.0
  %596 = vmatprep.subr.mxu0 0.0
  %597 = vmatpush1.msra.mxu0 0.0
  %598 = vmatprep.subr.mxu0 0.0
  %599 = vmatpush1.msra.mxu0 0.0
  %600 = vmatprep.subr.mxu0 0.0
  %601 = vmatpush1.msra.mxu0 0.0
  %602 = vmatprep.subr.mxu0 0.0
  %603 = vmatpush1.msra.mxu0 0.0
  %604 = vmatprep.subr.mxu0 0.0
  %605 = vmatpush1.msra.mxu0 0.0
  %606 = vmatprep.subr.mxu0 0.0
  %607 = vmatpush1.msra.mxu0 0.0
  %608 = vmatprep.subr.mxu0 0.0
  %609 = vmatpush1.msra.mxu0 0.0
  %610 = vmatprep.subr.mxu0 0.0
  %611 = vmatpush1.msra.mxu0 0.0
  %612 = vmatprep.subr.mxu0 0.0
  %613 = vmatpush1.msra.mxu0 0.0
  %614 = vmatprep.subr.mxu0 0.0
  %615 = vmatpush1.msra.mxu0 0.0
  %616 = vmatprep.subr.mxu0 0.0
  %617 = vmatpush1.msra.mxu0 0.0
  %618 = vmatprep.subr.mxu0 0.0
  %619 = vmatpush1.msra.mxu0 0.0
  %620 = vmatprep.subr.mxu0 0.0
  %621 = vmatpush1.msra.mxu0 0.0
  %622 = vmatprep.subr.mxu0 0.0
  %623 = vmatpush1.msra.mxu0 0.0
  %624 = vmatprep.subr.mxu0 0.0
  %625 = vmatpush1.msra.mxu0 0.0
  %626 = vmatprep.subr.mxu0 0.0
  %627 = vmatpush1.msra.mxu0 0.0
  %628 = vmatprep.subr.mxu0 0.0
  %629 = vmatpush1.msra.mxu0 0.0
  %630 = vmatprep.subr.mxu0 0.0
  %631 = vmatpush1.msra.mxu0 0.0
  %632 = vmatprep.subr.mxu0 0.0
  %633 = vmatpush1.msra.mxu0 0.0
  %634 = vmatprep.subr.mxu0 0.0
  %635 = vmatpush1.msra.mxu0 0.0
  %636 = vmatprep.subr.mxu0 0.0
  %637 = vmatpush1.msra.mxu0 0.0
  %638 = vmatprep.subr.mxu0 0.0
  %639 = vmatpush1.msra.mxu0 0.0
  %640 = vmatprep.subr.mxu0 0.0
  %641 = vmatpush1.msra.mxu0 0.0
  %642 = vmatprep.subr.mxu0 0.0
  %643 = vmatpush1.msra.mxu0 0.0
  %644 = vmatprep.subr.mxu0 0.0
  %645 = vmatpush1.msra.mxu0 0.0
  %646 = vmatprep.subr.mxu0 0.0
  %647 = vmatpush1.msra.mxu0 0.0
  %648 = vmatprep.subr.mxu0 0.0
  %649 = vmatpush1.msra.mxu0 0.0
  %650 = vmatprep.subr.mxu0 0.0
  %651 = vmatpush1.msra.mxu0 0.0
  %652 = vmatprep.mubr.f32.mxu0 0.0
  %653 = vmatmul.mubr.f32.gmra.mrb[0].mxu0 %v515
  %v654 = vpop.f32.mrb[0].mxu0
  %v655 = vadd.f32 0.0, %v654
  %v656 = vpop.f32.mrb[0].mxu0
  %v657 = vadd.f32 0.0, %v656
  %658 = vdwg.mxu0
  %659 = vmatprep.subr.mxu0 %v511
  %660 = vmatpush1.msra.mxu0 %v506
  %661 = vmatprep.subr.mxu0 0.0
  %662 = vmatpush1.msra.mxu0 0.0
  %663 = vmatprep.subr.mxu0 0.0
  %664 = vmatpush1.msra.mxu0 0.0
  %665 = vmatprep.subr.mxu0 0.0
  %666 = vmatpush1.msra.mxu0 0.0
  %667 = vmatprep.subr.mxu0 0.0
  %668 = vmatpush1.msra.mxu0 0.0
  %669 = vmatprep.subr.mxu0 0.0
  %670 = vmatpush1.msra.mxu0 0.0
  %671 = vmatprep.subr.mxu0 0.0
  %672 = vmatpush1.msra.mxu0 0.0
  %673 = vmatprep.subr.mxu0 0.0
  %674 = vmatpush1.msra.mxu0 0.0
  %675 = vmatprep.subr.mxu0 0.0
  %676 = vmatpush1.msra.mxu0 0.0
  %677 = vmatprep.subr.mxu0 0.0
  %678 = vmatpush1.msra.mxu0 0.0
  %679 = vmatprep.subr.mxu0 0.0
  %680 = vmatpush1.msra.mxu0 0.0
  %681 = vmatprep.subr.mxu0 0.0
  %682 = vmatpush1.msra.mxu0 0.0
  %683 = vmatprep.subr.mxu0 0.0
  %684 = vmatpush1.msra.mxu0 0.0
  %685 = vmatprep.subr.mxu0 0.0
  %686 = vmatpush1.msra.mxu0 0.0
  %687 = vmatprep.subr.mxu0 0.0
  %688 = vmatpush1.msra.mxu0 0.0
  %689 = vmatprep.subr.mxu0 0.0
  %690 = vmatpush1.msra.mxu0 0.0
  %691 = vmatprep.subr.mxu0 0.0
  %692 = vmatpush1.msra.mxu0 0.0
  %693 = vmatprep.subr.mxu0 0.0
  %694 = vmatpush1.msra.mxu0 0.0
  %695 = vmatprep.subr.mxu0 0.0
  %696 = vmatpush1.msra.mxu0 0.0
  %697 = vmatprep.subr.mxu0 0.0
  %698 = vmatpush1.msra.mxu0 0.0
  %699 = vmatprep.subr.mxu0 0.0
  %700 = vmatpush1.msra.mxu0 0.0
  %701 = vmatprep.subr.mxu0 0.0
  %702 = vmatpush1.msra.mxu0 0.0
  %703 = vmatprep.subr.mxu0 0.0
  %704 = vmatpush1.msra.mxu0 0.0
  %705 = vmatprep.subr.mxu0 0.0
  %706 = vmatpush1.msra.mxu0 0.0
  %707 = vmatprep.subr.mxu0 0.0
  %708 = vmatpush1.msra.mxu0 0.0
  %709 = vmatprep.subr.mxu0 0.0
  %710 = vmatpush1.msra.mxu0 0.0
  %711 = vmatprep.subr.mxu0 0.0
  %712 = vmatpush1.msra.mxu0 0.0
  %713 = vmatprep.subr.mxu0 0.0
  %714 = vmatpush1.msra.mxu0 0.0
  %715 = vmatprep.subr.mxu0 0.0
  %716 = vmatpush1.msra.mxu0 0.0
  %717 = vmatprep.subr.mxu0 0.0
  %718 = vmatpush1.msra.mxu0 0.0
  %719 = vmatprep.subr.mxu0 0.0
  %720 = vmatpush1.msra.mxu0 0.0
  %721 = vmatprep.subr.mxu0 0.0
  %722 = vmatpush1.msra.mxu0 0.0
  %723 = vmatprep.mubr.f32.mxu0 0.0
  %724 = vmatmul.mubr.f32.gmra.mrb[0].mxu0 %v515
  %v725 = vpop.f32.mrb[0].mxu0
  %v726 = vadd.f32 0.0, %v725
  %v727 = vpop.f32.mrb[0].mxu0
  %v728 = vadd.f32 0.0, %v727
  %729 = vdwg.mxu0
  %v730 = vadd.f32 %v347, %v584
  %v731 = vadd.f32 %v349, %v586
  %v732 = vadd.f32 %v418, %v655
  %v733 = vadd.f32 %v420, %v657
  %v734 = vadd.f32 %v489, %v726
  %v735 = vadd.f32 %v491, %v728
  %736 = vrot.lane.b32.xlu0 %v30, 110
  %v737 = vpop.permute.xlu0 %736
  %738 = vrot.lane.b32.xlu0 %v31, 110
  %v739 = vpop.permute.xlu0 %738
  %740 = vrot.lane.b32.xlu0 %v32, 110
  %v741 = vpop.permute.xlu0 %740
  %742 = vrot.lane.b32.xlu0 %v33, 110
  %v743 = vpop.permute.xlu0 %742
  %744 = vrot.lane.b32.xlu0 %v34, 110
  %v745 = vpop.permute.xlu0 %744
  %746 = vrot.lane.b32.xlu0 %v35, 110
  %v747 = vpop.permute.xlu0 %746
  %vm748 = vcmp.lt.s32.totalorder %v50, 110
  %v749 = vsel %vm748, %v745, %v747
  %v750 = vsel %vm748, %v743, %v745
  %v751 = vsel %vm748, %v741, %v743
  %v752 = vsel %vm748, %v739, %v741
  %v753 = vsel %vm748, %v737, %v739
  %v754 = vsel %vm748, %v747, %v737
  %s755 = scalar_lea.vmem %s1, 24
  %v756 = vld [vmem:[%s755] sm:$0xff]
  %v758 = vsel %vm60, %v756, 0
  %760 = vmatprep.subr.mxu0 %v752
  %761 = vmatpush1.msra.mxu0 %v753
  %762 = vmatprep.subr.mxu0 0.0
  %763 = vmatpush1.msra.mxu0 0.0
  %764 = vmatprep.subr.mxu0 0.0
  %765 = vmatpush1.msra.mxu0 0.0
  %766 = vmatprep.subr.mxu0 0.0
  %767 = vmatpush1.msra.mxu0 0.0
  %768 = vmatprep.subr.mxu0 0.0
  %769 = vmatpush1.msra.mxu0 0.0
  %770 = vmatprep.subr.mxu0 0.0
  %771 = vmatpush1.msra.mxu0 0.0
  %772 = vmatprep.subr.mxu0 0.0
  %773 = vmatpush1.msra.mxu0 0.0
  %774 = vmatprep.subr.mxu0 0.0
  %775 = vmatpush1.msra.mxu0 0.0
  %776 = vmatprep.subr.mxu0 0.0
  %777 = vmatpush1.msra.mxu0 0.0
  %778 = vmatprep.subr.mxu0 0.0
  %779 = vmatpush1.msra.mxu0 0.0
  %780 = vmatprep.subr.mxu0 0.0
  %781 = vmatpush1.msra.mxu0 0.0
  %782 = vmatprep.subr.mxu0 0.0
  %783 = vmatpush1.msra.mxu0 0.0
  %784 = vmatprep.subr.mxu0 0.0
  %785 = vmatpush1.msra.mxu0 0.0
  %786 = vmatprep.subr.mxu0 0.0
  %787 = vmatpush1.msra.mxu0 0.0
  %788 = vmatprep.subr.mxu0 0.0
  %789 = vmatpush1.msra.mxu0 0.0
  %790 = vmatprep.subr.mxu0 0.0
  %791 = vmatpush1.msra.mxu0 0.0
  %792 = vmatprep.subr.mxu0 0.0
  %793 = vmatpush1.msra.mxu0 0.0
  %794 = vmatprep.subr.mxu0 0.0
  %795 = vmatpush1.msra.mxu0 0.0
  %796 = vmatprep.subr.mxu0 0.0
  %797 = vmatpush1.msra.mxu0 0.0
  %798 = vmatprep.subr.mxu0 0.0
  %799 = vmatpush1.msra.mxu0 0.0
  %800 = vmatprep.subr.mxu0 0.0
  %801 = vmatpush1.msra.mxu0 0.0
  %802 = vmatprep.subr.mxu0 0.0
  %803 = vmatpush1.msra.mxu0 0.0
  %804 = vmatprep.subr.mxu0 0.0
  %805 = vmatpush1.msra.mxu0 0.0
  %806 = vmatprep.subr.mxu0 0.0
  %807 = vmatpush1.msra.mxu0 0.0
  %808 = vmatprep.subr.mxu0 0.0
  %809 = vmatpush1.msra.mxu0 0.0
  %810 = vmatprep.subr.mxu0 0.0
  %811 = vmatpush1.msra.mxu0 0.0
  %812 = vmatprep.subr.mxu0 0.0
  %813 = vmatpush1.msra.mxu0 0.0
  %814 = vmatprep.subr.mxu0 0.0
  %815 = vmatpush1.msra.mxu0 0.0
  %816 = vmatprep.subr.mxu0 0.0
  %817 = vmatpush1.msra.mxu0 0.0
  %818 = vmatprep.subr.mxu0 0.0
  %819 = vmatpush1.msra.mxu0 0.0
  %820 = vmatprep.subr.mxu0 0.0
  %821 = vmatpush1.msra.mxu0 0.0
  %822 = vmatprep.subr.mxu0 0.0
  %823 = vmatpush1.msra.mxu0 0.0
  %824 = vmatprep.mubr.f32.mxu0 0.0
  %825 = vmatmul.mubr.f32.gmra.mrb[0].mxu0 %v758
  %v826 = vpop.f32.mrb[0].mxu0
  %v827 = vadd.f32 0.0, %v826
  %v828 = vpop.f32.mrb[0].mxu0
  %v829 = vadd.f32 0.0, %v828
  %830 = vdwg.mxu0
  %831 = vmatprep.subr.mxu0 %v750
  %832 = vmatpush1.msra.mxu0 %v751
  %833 = vmatprep.subr.mxu0 0.0
  %834 = vmatpush1.msra.mxu0 0.0
  %835 = vmatprep.subr.mxu0 0.0
  %836 = vmatpush1.msra.mxu0 0.0
  %837 = vmatprep.subr.mxu0 0.0
  %838 = vmatpush1.msra.mxu0 0.0
  %839 = vmatprep.subr.mxu0 0.0
  %840 = vmatpush1.msra.mxu0 0.0
  %841 = vmatprep.subr.mxu0 0.0
  %842 = vmatpush1.msra.mxu0 0.0
  %843 = vmatprep.subr.mxu0 0.0
  %844 = vmatpush1.msra.mxu0 0.0
  %845 = vmatprep.subr.mxu0 0.0
  %846 = vmatpush1.msra.mxu0 0.0
  %847 = vmatprep.subr.mxu0 0.0
  %848 = vmatpush1.msra.mxu0 0.0
  %849 = vmatprep.subr.mxu0 0.0
  %850 = vmatpush1.msra.mxu0 0.0
  %851 = vmatprep.subr.mxu0 0.0
  %852 = vmatpush1.msra.mxu0 0.0
  %853 = vmatprep.subr.mxu0 0.0
  %854 = vmatpush1.msra.mxu0 0.0
  %855 = vmatprep.subr.mxu0 0.0
  %856 = vmatpush1.msra.mxu0 0.0
  %857 = vmatprep.subr.mxu0 0.0
  %858 = vmatpush1.msra.mxu0 0.0
  %859 = vmatprep.subr.mxu0 0.0
  %860 = vmatpush1.msra.mxu0 0.0
  %861 = vmatprep.subr.mxu0 0.0
  %862 = vmatpush1.msra.mxu0 0.0
  %863 = vmatprep.subr.mxu0 0.0
  %864 = vmatpush1.msra.mxu0 0.0
  %865 = vmatprep.subr.mxu0 0.0
  %866 = vmatpush1.msra.mxu0 0.0
  %867 = vmatprep.subr.mxu0 0.0
  %868 = vmatpush1.msra.mxu0 0.0
  %869 = vmatprep.subr.mxu0 0.0
  %870 = vmatpush1.msra.mxu0 0.0
  %871 = vmatprep.subr.mxu0 0.0
  %872 = vmatpush1.msra.mxu0 0.0
  %873 = vmatprep.subr.mxu0 0.0
  %874 = vmatpush1.msra.mxu0 0.0
  %875 = vmatprep.subr.mxu0 0.0
  %876 = vmatpush1.msra.mxu0 0.0
  %877 = vmatprep.subr.mxu0 0.0
  %878 = vmatpush1.msra.mxu0 0.0
  %879 = vmatprep.subr.mxu0 0.0
  %880 = vmatpush1.msra.mxu0 0.0
  %881 = vmatprep.subr.mxu0 0.0
  %882 = vmatpush1.msra.mxu0 0.0
  %883 = vmatprep.subr.mxu0 0.0
  %884 = vmatpush1.msra.mxu0 0.0
  %885 = vmatprep.subr.mxu0 0.0
  %886 = vmatpush1.msra.mxu0 0.0
  %887 = vmatprep.subr.mxu0 0.0
  %888 = vmatpush1.msra.mxu0 0.0
  %889 = vmatprep.subr.mxu0 0.0
  %890 = vmatpush1.msra.mxu0 0.0
  %891 = vmatprep.subr.mxu0 0.0
  %892 = vmatpush1.msra.mxu0 0.0
  %893 = vmatprep.subr.mxu0 0.0
  %894 = vmatpush1.msra.mxu0 0.0
  %895 = vmatprep.mubr.f32.mxu0 0.0
  %896 = vmatmul.mubr.f32.gmra.mrb[0].mxu0 %v758
  %v897 = vpop.f32.mrb[0].mxu0
  %v898 = vadd.f32 0.0, %v897
  %v899 = vpop.f32.mrb[0].mxu0
  %v900 = vadd.f32 0.0, %v899
  %901 = vdwg.mxu0
  %902 = vmatprep.subr.mxu0 %v754
  %903 = vmatpush1.msra.mxu0 %v749
  %904 = vmatprep.subr.mxu0 0.0
  %905 = vmatpush1.msra.mxu0 0.0
  %906 = vmatprep.subr.mxu0 0.0
  %907 = vmatpush1.msra.mxu0 0.0
  %908 = vmatprep.subr.mxu0 0.0
  %909 = vmatpush1.msra.mxu0 0.0
  %910 = vmatprep.subr.mxu0 0.0
  %911 = vmatpush1.msra.mxu0 0.0
  %912 = vmatprep.subr.mxu0 0.0
  %913 = vmatpush1.msra.mxu0 0.0
  %914 = vmatprep.subr.mxu0 0.0
  %915 = vmatpush1.msra.mxu0 0.0
  %916 = vmatprep.subr.mxu0 0.0
  %917 = vmatpush1.msra.mxu0 0.0
  %918 = vmatprep.subr.mxu0 0.0
  %919 = vmatpush1.msra.mxu0 0.0
  %920 = vmatprep.subr.mxu0 0.0
  %921 = vmatpush1.msra.mxu0 0.0
  %922 = vmatprep.subr.mxu0 0.0
  %923 = vmatpush1.msra.mxu0 0.0
  %924 = vmatprep.subr.mxu0 0.0
  %925 = vmatpush1.msra.mxu0 0.0
  %926 = vmatprep.subr.mxu0 0.0
  %927 = vmatpush1.msra.mxu0 0.0
  %928 = vmatprep.subr.mxu0 0.0
  %929 = vmatpush1.msra.mxu0 0.0
  %930 = vmatprep.subr.mxu0 0.0
  %931 = vmatpush1.msra.mxu0 0.0
  %932 = vmatprep.subr.mxu0 0.0
  %933 = vmatpush1.msra.mxu0 0.0
  %934 = vmatprep.subr.mxu0 0.0
  %935 = vmatpush1.msra.mxu0 0.0
  %936 = vmatprep.subr.mxu0 0.0
  %937 = vmatpush1.msra.mxu0 0.0
  %938 = vmatprep.subr.mxu0 0.0
  %939 = vmatpush1.msra.mxu0 0.0
  %940 = vmatprep.subr.mxu0 0.0
  %941 = vmatpush1.msra.mxu0 0.0
  %942 = vmatprep.subr.mxu0 0.0
  %943 = vmatpush1.msra.mxu0 0.0
  %944 = vmatprep.subr.mxu0 0.0
  %945 = vmatpush1.msra.mxu0 0.0
  %946 = vmatprep.subr.mxu0 0.0
  %947 = vmatpush1.msra.mxu0 0.0
  %948 = vmatprep.subr.mxu0 0.0
  %949 = vmatpush1.msra.mxu0 0.0
  %950 = vmatprep.subr.mxu0 0.0
  %951 = vmatpush1.msra.mxu0 0.0
  %952 = vmatprep.subr.mxu0 0.0
  %953 = vmatpush1.msra.mxu0 0.0
  %954 = vmatprep.subr.mxu0 0.0
  %955 = vmatpush1.msra.mxu0 0.0
  %956 = vmatprep.subr.mxu0 0.0
  %957 = vmatpush1.msra.mxu0 0.0
  %958 = vmatprep.subr.mxu0 0.0
  %959 = vmatpush1.msra.mxu0 0.0
  %960 = vmatprep.subr.mxu0 0.0
  %961 = vmatpush1.msra.mxu0 0.0
  %962 = vmatprep.subr.mxu0 0.0
  %963 = vmatpush1.msra.mxu0 0.0
  %964 = vmatprep.subr.mxu0 0.0
  %965 = vmatpush1.msra.mxu0 0.0
  %966 = vmatprep.mubr.f32.mxu0 0.0
  %967 = vmatmul.mubr.f32.gmra.mrb[0].mxu0 %v758
  %v968 = vpop.f32.mrb[0].mxu0
  %v969 = vadd.f32 0.0, %v968
  %v970 = vpop.f32.mrb[0].mxu0
  %v971 = vadd.f32 0.0, %v970
  %972 = vdwg.mxu0
  %v973 = vadd.f32 %v730, %v827
  %v974 = vadd.f32 %v731, %v829
  %v975 = vadd.f32 %v732, %v898
  %v976 = vadd.f32 %v733, %v900
  %v977 = vadd.f32 %v734, %v969
  %v978 = vadd.f32 %v735, %v971
  %979 = vrot.lane.b32.xlu0 %v30, 109
  %v980 = vpop.permute.xlu0 %979
  %981 = vrot.lane.b32.xlu0 %v31, 109
  %v982 = vpop.permute.xlu0 %981
  %983 = vrot.lane.b32.xlu0 %v32, 109
  %v984 = vpop.permute.xlu0 %983
  %985 = vrot.lane.b32.xlu0 %v33, 109
  %v986 = vpop.permute.xlu0 %985
  %987 = vrot.lane.b32.xlu0 %v34, 109
  %v988 = vpop.permute.xlu0 %987
  %989 = vrot.lane.b32.xlu0 %v35, 109
  %v990 = vpop.permute.xlu0 %989
  %vm991 = vcmp.lt.s32.totalorder %v50, 109
  %v992 = vsel %vm991, %v988, %v990
  %v993 = vsel %vm991, %v986, %v988
  %v994 = vsel %vm991, %v984, %v986
  %v995 = vsel %vm991, %v982, %v984
  %v996 = vsel %vm991, %v980, %v982
  %v997 = vsel %vm991, %v990, %v980
  %s998 = scalar_lea.vmem %s1, 32
  %v999 = vld [vmem:[%s998] sm:$0xff]
  %v1001 = vsel %vm60, %v999, 0
  %1003 = vmatprep.subr.mxu0 %v995
  %1004 = vmatpush1.msra.mxu0 %v996
  %1005 = vmatprep.subr.mxu0 0.0
  %1006 = vmatpush1.msra.mxu0 0.0
  %1007 = vmatprep.subr.mxu0 0.0
  %1008 = vmatpush1.msra.mxu0 0.0
  %1009 = vmatprep.subr.mxu0 0.0
  %1010 = vmatpush1.msra.mxu0 0.0
  %1011 = vmatprep.subr.mxu0 0.0
  %1012 = vmatpush1.msra.mxu0 0.0
  %1013 = vmatprep.subr.mxu0 0.0
  %1014 = vmatpush1.msra.mxu0 0.0
  %1015 = vmatprep.subr.mxu0 0.0
  %1016 = vmatpush1.msra.mxu0 0.0
  %1017 = vmatprep.subr.mxu0 0.0
  %1018 = vmatpush1.msra.mxu0 0.0
  %1019 = vmatprep.subr.mxu0 0.0
  %1020 = vmatpush1.msra.mxu0 0.0
  %1021 = vmatprep.subr.mxu0 0.0
  %1022 = vmatpush1.msra.mxu0 0.0
  %1023 = vmatprep.subr.mxu0 0.0
  %1024 = vmatpush1.msra.mxu0 0.0
  %1025 = vmatprep.subr.mxu0 0.0
  %1026 = vmatpush1.msra.mxu0 0.0
  %1027 = vmatprep.subr.mxu0 0.0
  %1028 = vmatpush1.msra.mxu0 0.0
  %1029 = vmatprep.subr.mxu0 0.0
  %1030 = vmatpush1.msra.mxu0 0.0
  %1031 = vmatprep.subr.mxu0 0.0
  %1032 = vmatpush1.msra.mxu0 0.0
  %1033 = vmatprep.subr.mxu0 0.0
  %1034 = vmatpush1.msra.mxu0 0.0
  %1035 = vmatprep.subr.mxu0 0.0
  %1036 = vmatpush1.msra.mxu0 0.0
  %1037 = vmatprep.subr.mxu0 0.0
  %1038 = vmatpush1.msra.mxu0 0.0
  %1039 = vmatprep.subr.mxu0 0.0
  %1040 = vmatpush1.msra.mxu0 0.0
  %1041 = vmatprep.subr.mxu0 0.0
  %1042 = vmatpush1.msra.mxu0 0.0
  %1043 = vmatprep.subr.mxu0 0.0
  %1044 = vmatpush1.msra.mxu0 0.0
  %1045 = vmatprep.subr.mxu0 0.0
  %1046 = vmatpush1.msra.mxu0 0.0
  %1047 = vmatprep.subr.mxu0 0.0
  %1048 = vmatpush1.msra.mxu0 0.0
  %1049 = vmatprep.subr.mxu0 0.0
  %1050 = vmatpush1.msra.mxu0 0.0
  %1051 = vmatprep.subr.mxu0 0.0
  %1052 = vmatpush1.msra.mxu0 0.0
  %1053 = vmatprep.subr.mxu0 0.0
  %1054 = vmatpush1.msra.mxu0 0.0
  %1055 = vmatprep.subr.mxu0 0.0
  %1056 = vmatpush1.msra.mxu0 0.0
  %1057 = vmatprep.subr.mxu0 0.0
  %1058 = vmatpush1.msra.mxu0 0.0
  %1059 = vmatprep.subr.mxu0 0.0
  %1060 = vmatpush1.msra.mxu0 0.0
  %1061 = vmatprep.subr.mxu0 0.0
  %1062 = vmatpush1.msra.mxu0 0.0
  %1063 = vmatprep.subr.mxu0 0.0
  %1064 = vmatpush1.msra.mxu0 0.0
  %1065 = vmatprep.subr.mxu0 0.0
  %1066 = vmatpush1.msra.mxu0 0.0
  %1067 = vmatprep.mubr.f32.mxu0 0.0
  %1068 = vmatmul.mubr.f32.gmra.mrb[0].mxu0 %v1001
  %v1069 = vpop.f32.mrb[0].mxu0
  %v1070 = vadd.f32 0.0, %v1069
  %v1071 = vpop.f32.mrb[0].mxu0
  %v1072 = vadd.f32 0.0, %v1071
  %1073 = vdwg.mxu0
  %1074 = vmatprep.subr.mxu0 %v993
  %1075 = vmatpush1.msra.mxu0 %v994
  %1076 = vmatprep.subr.mxu0 0.0
  %1077 = vmatpush1.msra.mxu0 0.0
  %1078 = vmatprep.subr.mxu0 0.0
  %1079 = vmatpush1.msra.mxu0 0.0
  %1080 = vmatprep.subr.mxu0 0.0
  %1081 = vmatpush1.msra.mxu0 0.0
  %1082 = vmatprep.subr.mxu0 0.0
  %1083 = vmatpush1.msra.mxu0 0.0
  %1084 = vmatprep.subr.mxu0 0.0
  %1085 = vmatpush1.msra.mxu0 0.0
  %1086 = vmatprep.subr.mxu0 0.0
  %1087 = vmatpush1.msra.mxu0 0.0
  %1088 = vmatprep.subr.mxu0 0.0
  %1089 = vmatpush1.msra.mxu0 0.0
  %1090 = vmatprep.subr.mxu0 0.0
  %1091 = vmatpush1.msra.mxu0 0.0
  %1092 = vmatprep.subr.mxu0 0.0
  %1093 = vmatpush1.msra.mxu0 0.0
  %1094 = vmatprep.subr.mxu0 0.0
  %1095 = vmatpush1.msra.mxu0 0.0
  %1096 = vmatprep.subr.mxu0 0.0
  %1097 = vmatpush1.msra.mxu0 0.0
  %1098 = vmatprep.subr.mxu0 0.0
  %1099 = vmatpush1.msra.mxu0 0.0
  %1100 = vmatprep.subr.mxu0 0.0
  %1101 = vmatpush1.msra.mxu0 0.0
  %1102 = vmatprep.subr.mxu0 0.0
  %1103 = vmatpush1.msra.mxu0 0.0
  %1104 = vmatprep.subr.mxu0 0.0
  %1105 = vmatpush1.msra.mxu0 0.0
  %1106 = vmatprep.subr.mxu0 0.0
  %1107 = vmatpush1.msra.mxu0 0.0
  %1108 = vmatprep.subr.mxu0 0.0
  %1109 = vmatpush1.msra.mxu0 0.0
  %1110 = vmatprep.subr.mxu0 0.0
  %1111 = vmatpush1.msra.mxu0 0.0
  %1112 = vmatprep.subr.mxu0 0.0
  %1113 = vmatpush1.msra.mxu0 0.0
  %1114 = vmatprep.subr.mxu0 0.0
  %1115 = vmatpush1.msra.mxu0 0.0
  %1116 = vmatprep.subr.mxu0 0.0
  %1117 = vmatpush1.msra.mxu0 0.0
  %1118 = vmatprep.subr.mxu0 0.0
  %1119 = vmatpush1.msra.mxu0 0.0
  %1120 = vmatprep.subr.mxu0 0.0
  %1121 = vmatpush1.msra.mxu0 0.0
  %1122 = vmatprep.subr.mxu0 0.0
  %1123 = vmatpush1.msra.mxu0 0.0
  %1124 = vmatprep.subr.mxu0 0.0
  %1125 = vmatpush1.msra.mxu0 0.0
  %1126 = vmatprep.subr.mxu0 0.0
  %1127 = vmatpush1.msra.mxu0 0.0
  %1128 = vmatprep.subr.mxu0 0.0
  %1129 = vmatpush1.msra.mxu0 0.0
  %1130 = vmatprep.subr.mxu0 0.0
  %1131 = vmatpush1.msra.mxu0 0.0
  %1132 = vmatprep.subr.mxu0 0.0
  %1133 = vmatpush1.msra.mxu0 0.0
  %1134 = vmatprep.subr.mxu0 0.0
  %1135 = vmatpush1.msra.mxu0 0.0
  %1136 = vmatprep.subr.mxu0 0.0
  %1137 = vmatpush1.msra.mxu0 0.0
  %1138 = vmatprep.mubr.f32.mxu0 0.0
  %1139 = vmatmul.mubr.f32.gmra.mrb[0].mxu0 %v1001
  %v1140 = vpop.f32.mrb[0].mxu0
  %v1141 = vadd.f32 0.0, %v1140
  %v1142 = vpop.f32.mrb[0].mxu0
  %v1143 = vadd.f32 0.0, %v1142
  %1144 = vdwg.mxu0
  %1145 = vmatprep.subr.mxu0 %v997
  %1146 = vmatpush1.msra.mxu0 %v992
  %1147 = vmatprep.subr.mxu0 0.0
  %1148 = vmatpush1.msra.mxu0 0.0
  %1149 = vmatprep.subr.mxu0 0.0
  %1150 = vmatpush1.msra.mxu0 0.0
  %1151 = vmatprep.subr.mxu0 0.0
  %1152 = vmatpush1.msra.mxu0 0.0
  %1153 = vmatprep.subr.mxu0 0.0
  %1154 = vmatpush1.msra.mxu0 0.0
  %1155 = vmatprep.subr.mxu0 0.0
  %1156 = vmatpush1.msra.mxu0 0.0
  %1157 = vmatprep.subr.mxu0 0.0
  %1158 = vmatpush1.msra.mxu0 0.0
  %1159 = vmatprep.subr.mxu0 0.0
  %1160 = vmatpush1.msra.mxu0 0.0
  %1161 = vmatprep.subr.mxu0 0.0
  %1162 = vmatpush1.msra.mxu0 0.0
  %1163 = vmatprep.subr.mxu0 0.0
  %1164 = vmatpush1.msra.mxu0 0.0
  %1165 = vmatprep.subr.mxu0 0.0
  %1166 = vmatpush1.msra.mxu0 0.0
  %1167 = vmatprep.subr.mxu0 0.0
  %1168 = vmatpush1.msra.mxu0 0.0
  %1169 = vmatprep.subr.mxu0 0.0
  %1170 = vmatpush1.msra.mxu0 0.0
  %1171 = vmatprep.subr.mxu0 0.0
  %1172 = vmatpush1.msra.mxu0 0.0
  %1173 = vmatprep.subr.mxu0 0.0
  %1174 = vmatpush1.msra.mxu0 0.0
  %1175 = vmatprep.subr.mxu0 0.0
  %1176 = vmatpush1.msra.mxu0 0.0
  %1177 = vmatprep.subr.mxu0 0.0
  %1178 = vmatpush1.msra.mxu0 0.0
  %1179 = vmatprep.subr.mxu0 0.0
  %1180 = vmatpush1.msra.mxu0 0.0
  %1181 = vmatprep.subr.mxu0 0.0
  %1182 = vmatpush1.msra.mxu0 0.0
  %1183 = vmatprep.subr.mxu0 0.0
  %1184 = vmatpush1.msra.mxu0 0.0
  %1185 = vmatprep.subr.mxu0 0.0
  %1186 = vmatpush1.msra.mxu0 0.0
  %1187 = vmatprep.subr.mxu0 0.0
  %1188 = vmatpush1.msra.mxu0 0.0
  %1189 = vmatprep.subr.mxu0 0.0
  %1190 = vmatpush1.msra.mxu0 0.0
  %1191 = vmatprep.subr.mxu0 0.0
  %1192 = vmatpush1.msra.mxu0 0.0
  %1193 = vmatprep.subr.mxu0 0.0
  %1194 = vmatpush1.msra.mxu0 0.0
  %1195 = vmatprep.subr.mxu0 0.0
  %1196 = vmatpush1.msra.mxu0 0.0
  %1197 = vmatprep.subr.mxu0 0.0
  %1198 = vmatpush1.msra.mxu0 0.0
  %1199 = vmatprep.subr.mxu0 0.0
  %1200 = vmatpush1.msra.mxu0 0.0
  %1201 = vmatprep.subr.mxu0 0.0
  %1202 = vmatpush1.msra.mxu0 0.0
  %1203 = vmatprep.subr.mxu0 0.0
  %1204 = vmatpush1.msra.mxu0 0.0
  %1205 = vmatprep.subr.mxu0 0.0
  %1206 = vmatpush1.msra.mxu0 0.0
  %1207 = vmatprep.subr.mxu0 0.0
  %1208 = vmatpush1.msra.mxu0 0.0
  %1209 = vmatprep.mubr.f32.mxu0 0.0
  %1210 = vmatmul.mubr.f32.gmra.mrb[0].mxu0 %v1001
  %v1211 = vpop.f32.mrb[0].mxu0
  %v1212 = vadd.f32 0.0, %v1211
  %v1213 = vpop.f32.mrb[0].mxu0
  %v1214 = vadd.f32 0.0, %v1213
  %1215 = vdwg.mxu0
  %v1216 = vadd.f32 %v973, %v1070
  %v1217 = vadd.f32 %v974, %v1072
  %v1218 = vadd.f32 %v975, %v1141
  %v1219 = vadd.f32 %v976, %v1143
  %v1220 = vadd.f32 %v977, %v1212
  %v1221 = vadd.f32 %v978, %v1214
  %1222 = vrot.lane.b32.xlu0 %v30, 108
  %v1223 = vpop.permute.xlu0 %1222
  %1224 = vrot.lane.b32.xlu0 %v31, 108
  %v1225 = vpop.permute.xlu0 %1224
  %1226 = vrot.lane.b32.xlu0 %v32, 108
  %v1227 = vpop.permute.xlu0 %1226
  %1228 = vrot.lane.b32.xlu0 %v33, 108
  %v1229 = vpop.permute.xlu0 %1228
  %1230 = vrot.lane.b32.xlu0 %v34, 108
  %v1231 = vpop.permute.xlu0 %1230
  %1232 = vrot.lane.b32.xlu0 %v35, 108
  %v1233 = vpop.permute.xlu0 %1232
  %vm1234 = vcmp.lt.s32.totalorder %v50, 108
  %v1235 = vsel %vm1234, %v1231, %v1233
  %v1236 = vsel %vm1234, %v1229, %v1231
  %v1237 = vsel %vm1234, %v1227, %v1229
  %v1238 = vsel %vm1234, %v1225, %v1227
  %v1239 = vsel %vm1234, %v1223, %v1225
  %v1240 = vsel %vm1234, %v1233, %v1223
  %s1241 = scalar_lea.vmem %s1, 40
  %v1242 = vld [vmem:[%s1241] sm:$0xff]
  %v1244 = vsel %vm60, %v1242, 0
  %1246 = vmatprep.subr.mxu0 %v1238
  %1247 = vmatpush1.msra.mxu0 %v1239
  %1248 = vmatprep.subr.mxu0 0.0
  %1249 = vmatpush1.msra.mxu0 0.0
  %1250 = vmatprep.subr.mxu0 0.0
  %1251 = vmatpush1.msra.mxu0 0.0
  %1252 = vmatprep.subr.mxu0 0.0
  %1253 = vmatpush1.msra.mxu0 0.0
  %1254 = vmatprep.subr.mxu0 0.0
  %1255 = vmatpush1.msra.mxu0 0.0
  %1256 = vmatprep.subr.mxu0 0.0
  %1257 = vmatpush1.msra.mxu0 0.0
  %1258 = vmatprep.subr.mxu0 0.0
  %1259 = vmatpush1.msra.mxu0 0.0
  %1260 = vmatprep.subr.mxu0 0.0
  %1261 = vmatpush1.msra.mxu0 0.0
  %1262 = vmatprep.subr.mxu0 0.0
  %1263 = vmatpush1.msra.mxu0 0.0
  %1264 = vmatprep.subr.mxu0 0.0
  %1265 = vmatpush1.msra.mxu0 0.0
  %1266 = vmatprep.subr.mxu0 0.0
  %1267 = vmatpush1.msra.mxu0 0.0
  %1268 = vmatprep.subr.mxu0 0.0
  %1269 = vmatpush1.msra.mxu0 0.0
  %1270 = vmatprep.subr.mxu0 0.0
  %1271 = vmatpush1.msra.mxu0 0.0
  %1272 = vmatprep.subr.mxu0 0.0
  %1273 = vmatpush1.msra.mxu0 0.0
  %1274 = vmatprep.subr.mxu0 0.0
  %1275 = vmatpush1.msra.mxu0 0.0
  %1276 = vmatprep.subr.mxu0 0.0
  %1277 = vmatpush1.msra.mxu0 0.0
  %1278 = vmatprep.subr.mxu0 0.0
  %1279 = vmatpush1.msra.mxu0 0.0
  %1280 = vmatprep.subr.mxu0 0.0
  %1281 = vmatpush1.msra.mxu0 0.0
  %1282 = vmatprep.subr.mxu0 0.0
  %1283 = vmatpush1.msra.mxu0 0.0
  %1284 = vmatprep.subr.mxu0 0.0
  %1285 = vmatpush1.msra.mxu0 0.0
  %1286 = vmatprep.subr.mxu0 0.0
  %1287 = vmatpush1.msra.mxu0 0.0
  %1288 = vmatprep.subr.mxu0 0.0
  %1289 = vmatpush1.msra.mxu0 0.0
  %1290 = vmatprep.subr.mxu0 0.0
  %1291 = vmatpush1.msra.mxu0 0.0
  %1292 = vmatprep.subr.mxu0 0.0
  %1293 = vmatpush1.msra.mxu0 0.0
  %1294 = vmatprep.subr.mxu0 0.0
  %1295 = vmatpush1.msra.mxu0 0.0
  %1296 = vmatprep.subr.mxu0 0.0
  %1297 = vmatpush1.msra.mxu0 0.0
  %1298 = vmatprep.subr.mxu0 0.0
  %1299 = vmatpush1.msra.mxu0 0.0
  %1300 = vmatprep.subr.mxu0 0.0
  %1301 = vmatpush1.msra.mxu0 0.0
  %1302 = vmatprep.subr.mxu0 0.0
  %1303 = vmatpush1.msra.mxu0 0.0
  %1304 = vmatprep.subr.mxu0 0.0
  %1305 = vmatpush1.msra.mxu0 0.0
  %1306 = vmatprep.subr.mxu0 0.0
  %1307 = vmatpush1.msra.mxu0 0.0
  %1308 = vmatprep.subr.mxu0 0.0
  %1309 = vmatpush1.msra.mxu0 0.0
  %1310 = vmatprep.mubr.f32.mxu0 0.0
  %1311 = vmatmul.mubr.f32.gmra.mrb[0].mxu0 %v1244
  %v1312 = vpop.f32.mrb[0].mxu0
  %v1313 = vadd.f32 0.0, %v1312
  %v1314 = vpop.f32.mrb[0].mxu0
  %v1315 = vadd.f32 0.0, %v1314
  %1316 = vdwg.mxu0
  %1317 = vmatprep.subr.mxu0 %v1236
  %1318 = vmatpush1.msra.mxu0 %v1237
  %1319 = vmatprep.subr.mxu0 0.0
  %1320 = vmatpush1.msra.mxu0 0.0
  %1321 = vmatprep.subr.mxu0 0.0
  %1322 = vmatpush1.msra.mxu0 0.0
  %1323 = vmatprep.subr.mxu0 0.0
  %1324 = vmatpush1.msra.mxu0 0.0
  %1325 = vmatprep.subr.mxu0 0.0
  %1326 = vmatpush1.msra.mxu0 0.0
  %1327 = vmatprep.subr.mxu0 0.0
  %1328 = vmatpush1.msra.mxu0 0.0
  %1329 = vmatprep.subr.mxu0 0.0
  %1330 = vmatpush1.msra.mxu0 0.0
  %1331 = vmatprep.subr.mxu0 0.0
  %1332 = vmatpush1.msra.mxu0 0.0
  %1333 = vmatprep.subr.mxu0 0.0
  %1334 = vmatpush1.msra.mxu0 0.0
  %1335 = vmatprep.subr.mxu0 0.0
  %1336 = vmatpush1.msra.mxu0 0.0
  %1337 = vmatprep.subr.mxu0 0.0
  %1338 = vmatpush1.msra.mxu0 0.0
  %1339 = vmatprep.subr.mxu0 0.0
  %1340 = vmatpush1.msra.mxu0 0.0
  %1341 = vmatprep.subr.mxu0 0.0
  %1342 = vmatpush1.msra.mxu0 0.0
  %1343 = vmatprep.subr.mxu0 0.0
  %1344 = vmatpush1.msra.mxu0 0.0
  %1345 = vmatprep.subr.mxu0 0.0
  %1346 = vmatpush1.msra.mxu0 0.0
  %1347 = vmatprep.subr.mxu0 0.0
  %1348 = vmatpush1.msra.mxu0 0.0
  %1349 = vmatprep.subr.mxu0 0.0
  %1350 = vmatpush1.msra.mxu0 0.0
  %1351 = vmatprep.subr.mxu0 0.0
  %1352 = vmatpush1.msra.mxu0 0.0
  %1353 = vmatprep.subr.mxu0 0.0
  %1354 = vmatpush1.msra.mxu0 0.0
  %1355 = vmatprep.subr.mxu0 0.0
  %1356 = vmatpush1.msra.mxu0 0.0
  %1357 = vmatprep.subr.mxu0 0.0
  %1358 = vmatpush1.msra.mxu0 0.0
  %1359 = vmatprep.subr.mxu0 0.0
  %1360 = vmatpush1.msra.mxu0 0.0
  %1361 = vmatprep.subr.mxu0 0.0
  %1362 = vmatpush1.msra.mxu0 0.0
  %1363 = vmatprep.subr.mxu0 0.0
  %1364 = vmatpush1.msra.mxu0 0.0
  %1365 = vmatprep.subr.mxu0 0.0
  %1366 = vmatpush1.msra.mxu0 0.0
  %1367 = vmatprep.subr.mxu0 0.0
  %1368 = vmatpush1.msra.mxu0 0.0
  %1369 = vmatprep.subr.mxu0 0.0
  %1370 = vmatpush1.msra.mxu0 0.0
  %1371 = vmatprep.subr.mxu0 0.0
  %1372 = vmatpush1.msra.mxu0 0.0
  %1373 = vmatprep.subr.mxu0 0.0
  %1374 = vmatpush1.msra.mxu0 0.0
  %1375 = vmatprep.subr.mxu0 0.0
  %1376 = vmatpush1.msra.mxu0 0.0
  %1377 = vmatprep.subr.mxu0 0.0
  %1378 = vmatpush1.msra.mxu0 0.0
  %1379 = vmatprep.subr.mxu0 0.0
  %1380 = vmatpush1.msra.mxu0 0.0
  %1381 = vmatprep.mubr.f32.mxu0 0.0
  %1382 = vmatmul.mubr.f32.gmra.mrb[0].mxu0 %v1244
  %v1383 = vpop.f32.mrb[0].mxu0
  %v1384 = vadd.f32 0.0, %v1383
  %v1385 = vpop.f32.mrb[0].mxu0
  %v1386 = vadd.f32 0.0, %v1385
  %1387 = vdwg.mxu0
  %1388 = vmatprep.subr.mxu0 %v1240
  %1389 = vmatpush1.msra.mxu0 %v1235
  %1390 = vmatprep.subr.mxu0 0.0
  %1391 = vmatpush1.msra.mxu0 0.0
  %1392 = vmatprep.subr.mxu0 0.0
  %1393 = vmatpush1.msra.mxu0 0.0
  %1394 = vmatprep.subr.mxu0 0.0
  %1395 = vmatpush1.msra.mxu0 0.0
  %1396 = vmatprep.subr.mxu0 0.0
  %1397 = vmatpush1.msra.mxu0 0.0
  %1398 = vmatprep.subr.mxu0 0.0
  %1399 = vmatpush1.msra.mxu0 0.0
  %1400 = vmatprep.subr.mxu0 0.0
  %1401 = vmatpush1.msra.mxu0 0.0
  %1402 = vmatprep.subr.mxu0 0.0
  %1403 = vmatpush1.msra.mxu0 0.0
  %1404 = vmatprep.subr.mxu0 0.0
  %1405 = vmatpush1.msra.mxu0 0.0
  %1406 = vmatprep.subr.mxu0 0.0
  %1407 = vmatpush1.msra.mxu0 0.0
  %1408 = vmatprep.subr.mxu0 0.0
  %1409 = vmatpush1.msra.mxu0 0.0
  %1410 = vmatprep.subr.mxu0 0.0
  %1411 = vmatpush1.msra.mxu0 0.0
  %1412 = vmatprep.subr.mxu0 0.0
  %1413 = vmatpush1.msra.mxu0 0.0
  %1414 = vmatprep.subr.mxu0 0.0
  %1415 = vmatpush1.msra.mxu0 0.0
  %1416 = vmatprep.subr.mxu0 0.0
  %1417 = vmatpush1.msra.mxu0 0.0
  %1418 = vmatprep.subr.mxu0 0.0
  %1419 = vmatpush1.msra.mxu0 0.0
  %1420 = vmatprep.subr.mxu0 0.0
  %1421 = vmatpush1.msra.mxu0 0.0
  %1422 = vmatprep.subr.mxu0 0.0
  %1423 = vmatpush1.msra.mxu0 0.0
  %1424 = vmatprep.subr.mxu0 0.0
  %1425 = vmatpush1.msra.mxu0 0.0
  %1426 = vmatprep.subr.mxu0 0.0
  %1427 = vmatpush1.msra.mxu0 0.0
  %1428 = vmatprep.subr.mxu0 0.0
  %1429 = vmatpush1.msra.mxu0 0.0
  %1430 = vmatprep.subr.mxu0 0.0
  %1431 = vmatpush1.msra.mxu0 0.0
  %1432 = vmatprep.subr.mxu0 0.0
  %1433 = vmatpush1.msra.mxu0 0.0
  %1434 = vmatprep.subr.mxu0 0.0
  %1435 = vmatpush1.msra.mxu0 0.0
  %1436 = vmatprep.subr.mxu0 0.0
  %1437 = vmatpush1.msra.mxu0 0.0
  %1438 = vmatprep.subr.mxu0 0.0
  %1439 = vmatpush1.msra.mxu0 0.0
  %1440 = vmatprep.subr.mxu0 0.0
  %1441 = vmatpush1.msra.mxu0 0.0
  %1442 = vmatprep.subr.mxu0 0.0
  %1443 = vmatpush1.msra.mxu0 0.0
  %1444 = vmatprep.subr.mxu0 0.0
  %1445 = vmatpush1.msra.mxu0 0.0
  %1446 = vmatprep.subr.mxu0 0.0
  %1447 = vmatpush1.msra.mxu0 0.0
  %1448 = vmatprep.subr.mxu0 0.0
  %1449 = vmatpush1.msra.mxu0 0.0
  %1450 = vmatprep.subr.mxu0 0.0
  %1451 = vmatpush1.msra.mxu0 0.0
  %1452 = vmatprep.mubr.f32.mxu0 0.0
  %1453 = vmatmul.mubr.f32.gmra.mrb[0].mxu0 %v1244
  %v1454 = vpop.f32.mrb[0].mxu0
  %v1455 = vadd.f32 0.0, %v1454
  %v1456 = vpop.f32.mrb[0].mxu0
  %v1457 = vadd.f32 0.0, %v1456
  %1458 = vdwg.mxu0
  %v1459 = vadd.f32 %v1216, %v1313
  %v1460 = vadd.f32 %v1217, %v1315
  %v1461 = vadd.f32 %v1218, %v1384
  %v1462 = vadd.f32 %v1219, %v1386
  %v1463 = vadd.f32 %v1220, %v1455
  %v1464 = vadd.f32 %v1221, %v1457
  %1465 = vrot.lane.b32.xlu0 %v30, 92
  %v1466 = vpop.permute.xlu0 %1465
  %1467 = vrot.lane.b32.xlu0 %v31, 92
  %v1468 = vpop.permute.xlu0 %1467
  %1469 = vrot.lane.b32.xlu0 %v32, 92
  %v1470 = vpop.permute.xlu0 %1469
  %1471 = vrot.lane.b32.xlu0 %v33, 92
  %v1472 = vpop.permute.xlu0 %1471
  %1473 = vrot.lane.b32.xlu0 %v34, 92
  %v1474 = vpop.permute.xlu0 %1473
  %1475 = vrot.lane.b32.xlu0 %v35, 92
  %v1476 = vpop.permute.xlu0 %1475
  %vm1477 = vcmp.lt.s32.totalorder %v50, 92
  %v1478 = vsel %vm1477, %v1474, %v1476
  %v1479 = vsel %vm1477, %v1472, %v1474
  %v1480 = vsel %vm1477, %v1470, %v1472
  %v1481 = vsel %vm1477, %v1468, %v1470
  %v1482 = vsel %vm1477, %v1466, %v1468
  %v1483 = vsel %vm1477, %v1476, %v1466
  %s1484 = scalar_lea.vmem %s1, 48
  %v1485 = vld [vmem:[%s1484] sm:$0xff]
  %v1487 = vsel %vm60, %v1485, 0
  %1489 = vmatprep.subr.mxu0 %v1481
  %1490 = vmatpush1.msra.mxu0 %v1482
  %1491 = vmatprep.subr.mxu0 0.0
  %1492 = vmatpush1.msra.mxu0 0.0
  %1493 = vmatprep.subr.mxu0 0.0
  %1494 = vmatpush1.msra.mxu0 0.0
  %1495 = vmatprep.subr.mxu0 0.0
  %1496 = vmatpush1.msra.mxu0 0.0
  %1497 = vmatprep.subr.mxu0 0.0
  %1498 = vmatpush1.msra.mxu0 0.0
  %1499 = vmatprep.subr.mxu0 0.0
  %1500 = vmatpush1.msra.mxu0 0.0
  %1501 = vmatprep.subr.mxu0 0.0
  %1502 = vmatpush1.msra.mxu0 0.0
  %1503 = vmatprep.subr.mxu0 0.0
  %1504 = vmatpush1.msra.mxu0 0.0
  %1505 = vmatprep.subr.mxu0 0.0
  %1506 = vmatpush1.msra.mxu0 0.0
  %1507 = vmatprep.subr.mxu0 0.0
  %1508 = vmatpush1.msra.mxu0 0.0
  %1509 = vmatprep.subr.mxu0 0.0
  %1510 = vmatpush1.msra.mxu0 0.0
  %1511 = vmatprep.subr.mxu0 0.0
  %1512 = vmatpush1.msra.mxu0 0.0
  %1513 = vmatprep.subr.mxu0 0.0
  %1514 = vmatpush1.msra.mxu0 0.0
  %1515 = vmatprep.subr.mxu0 0.0
  %1516 = vmatpush1.msra.mxu0 0.0
  %1517 = vmatprep.subr.mxu0 0.0
  %1518 = vmatpush1.msra.mxu0 0.0
  %1519 = vmatprep.subr.mxu0 0.0
  %1520 = vmatpush1.msra.mxu0 0.0
  %1521 = vmatprep.subr.mxu0 0.0
  %1522 = vmatpush1.msra.mxu0 0.0
  %1523 = vmatprep.subr.mxu0 0.0
  %1524 = vmatpush1.msra.mxu0 0.0
  %1525 = vmatprep.subr.mxu0 0.0
  %1526 = vmatpush1.msra.mxu0 0.0
  %1527 = vmatprep.subr.mxu0 0.0
  %1528 = vmatpush1.msra.mxu0 0.0
  %1529 = vmatprep.subr.mxu0 0.0
  %1530 = vmatpush1.msra.mxu0 0.0
  %1531 = vmatprep.subr.mxu0 0.0
  %1532 = vmatpush1.msra.mxu0 0.0
  %1533 = vmatprep.subr.mxu0 0.0
  %1534 = vmatpush1.msra.mxu0 0.0
  %1535 = vmatprep.subr.mxu0 0.0
  %1536 = vmatpush1.msra.mxu0 0.0
  %1537 = vmatprep.subr.mxu0 0.0
  %1538 = vmatpush1.msra.mxu0 0.0
  %1539 = vmatprep.subr.mxu0 0.0
  %1540 = vmatpush1.msra.mxu0 0.0
  %1541 = vmatprep.subr.mxu0 0.0
  %1542 = vmatpush1.msra.mxu0 0.0
  %1543 = vmatprep.subr.mxu0 0.0
  %1544 = vmatpush1.msra.mxu0 0.0
  %1545 = vmatprep.subr.mxu0 0.0
  %1546 = vmatpush1.msra.mxu0 0.0
  %1547 = vmatprep.subr.mxu0 0.0
  %1548 = vmatpush1.msra.mxu0 0.0
  %1549 = vmatprep.subr.mxu0 0.0
  %1550 = vmatpush1.msra.mxu0 0.0
  %1551 = vmatprep.subr.mxu0 0.0
  %1552 = vmatpush1.msra.mxu0 0.0
  %1553 = vmatprep.mubr.f32.mxu0 0.0
  %1554 = vmatmul.mubr.f32.gmra.mrb[0].mxu0 %v1487
  %v1555 = vpop.f32.mrb[0].mxu0
  %v1556 = vadd.f32 0.0, %v1555
  %v1557 = vpop.f32.mrb[0].mxu0
  %v1558 = vadd.f32 0.0, %v1557
  %1559 = vdwg.mxu0
  %1560 = vmatprep.subr.mxu0 %v1479
  %1561 = vmatpush1.msra.mxu0 %v1480
  %1562 = vmatprep.subr.mxu0 0.0
  %1563 = vmatpush1.msra.mxu0 0.0
  %1564 = vmatprep.subr.mxu0 0.0
  %1565 = vmatpush1.msra.mxu0 0.0
  %1566 = vmatprep.subr.mxu0 0.0
  %1567 = vmatpush1.msra.mxu0 0.0
  %1568 = vmatprep.subr.mxu0 0.0
  %1569 = vmatpush1.msra.mxu0 0.0
  %1570 = vmatprep.subr.mxu0 0.0
  %1571 = vmatpush1.msra.mxu0 0.0
  %1572 = vmatprep.subr.mxu0 0.0
  %1573 = vmatpush1.msra.mxu0 0.0
  %1574 = vmatprep.subr.mxu0 0.0
  %1575 = vmatpush1.msra.mxu0 0.0
  %1576 = vmatprep.subr.mxu0 0.0
  %1577 = vmatpush1.msra.mxu0 0.0
  %1578 = vmatprep.subr.mxu0 0.0
  %1579 = vmatpush1.msra.mxu0 0.0
  %1580 = vmatprep.subr.mxu0 0.0
  %1581 = vmatpush1.msra.mxu0 0.0
  %1582 = vmatprep.subr.mxu0 0.0
  %1583 = vmatpush1.msra.mxu0 0.0
  %1584 = vmatprep.subr.mxu0 0.0
  %1585 = vmatpush1.msra.mxu0 0.0
  %1586 = vmatprep.subr.mxu0 0.0
  %1587 = vmatpush1.msra.mxu0 0.0
  %1588 = vmatprep.subr.mxu0 0.0
  %1589 = vmatpush1.msra.mxu0 0.0
  %1590 = vmatprep.subr.mxu0 0.0
  %1591 = vmatpush1.msra.mxu0 0.0
  %1592 = vmatprep.subr.mxu0 0.0
  %1593 = vmatpush1.msra.mxu0 0.0
  %1594 = vmatprep.subr.mxu0 0.0
  %1595 = vmatpush1.msra.mxu0 0.0
  %1596 = vmatprep.subr.mxu0 0.0
  %1597 = vmatpush1.msra.mxu0 0.0
  %1598 = vmatprep.subr.mxu0 0.0
  %1599 = vmatpush1.msra.mxu0 0.0
  %1600 = vmatprep.subr.mxu0 0.0
  %1601 = vmatpush1.msra.mxu0 0.0
  %1602 = vmatprep.subr.mxu0 0.0
  %1603 = vmatpush1.msra.mxu0 0.0
  %1604 = vmatprep.subr.mxu0 0.0
  %1605 = vmatpush1.msra.mxu0 0.0
  %1606 = vmatprep.subr.mxu0 0.0
  %1607 = vmatpush1.msra.mxu0 0.0
  %1608 = vmatprep.subr.mxu0 0.0
  %1609 = vmatpush1.msra.mxu0 0.0
  %1610 = vmatprep.subr.mxu0 0.0
  %1611 = vmatpush1.msra.mxu0 0.0
  %1612 = vmatprep.subr.mxu0 0.0
  %1613 = vmatpush1.msra.mxu0 0.0
  %1614 = vmatprep.subr.mxu0 0.0
  %1615 = vmatpush1.msra.mxu0 0.0
  %1616 = vmatprep.subr.mxu0 0.0
  %1617 = vmatpush1.msra.mxu0 0.0
  %1618 = vmatprep.subr.mxu0 0.0
  %1619 = vmatpush1.msra.mxu0 0.0
  %1620 = vmatprep.subr.mxu0 0.0
  %1621 = vmatpush1.msra.mxu0 0.0
  %1622 = vmatprep.subr.mxu0 0.0
  %1623 = vmatpush1.msra.mxu0 0.0
  %1624 = vmatprep.mubr.f32.mxu0 0.0
  %1625 = vmatmul.mubr.f32.gmra.mrb[0].mxu0 %v1487
  %v1626 = vpop.f32.mrb[0].mxu0
  %v1627 = vadd.f32 0.0, %v1626
  %v1628 = vpop.f32.mrb[0].mxu0
  %v1629 = vadd.f32 0.0, %v1628
  %1630 = vdwg.mxu0
  %1631 = vmatprep.subr.mxu0 %v1483
  %1632 = vmatpush1.msra.mxu0 %v1478
  %1633 = vmatprep.subr.mxu0 0.0
  %1634 = vmatpush1.msra.mxu0 0.0
  %1635 = vmatprep.subr.mxu0 0.0
  %1636 = vmatpush1.msra.mxu0 0.0
  %1637 = vmatprep.subr.mxu0 0.0
  %1638 = vmatpush1.msra.mxu0 0.0
  %1639 = vmatprep.subr.mxu0 0.0
  %1640 = vmatpush1.msra.mxu0 0.0
  %1641 = vmatprep.subr.mxu0 0.0
  %1642 = vmatpush1.msra.mxu0 0.0
  %1643 = vmatprep.subr.mxu0 0.0
  %1644 = vmatpush1.msra.mxu0 0.0
  %1645 = vmatprep.subr.mxu0 0.0
  %1646 = vmatpush1.msra.mxu0 0.0
  %1647 = vmatprep.subr.mxu0 0.0
  %1648 = vmatpush1.msra.mxu0 0.0
  %1649 = vmatprep.subr.mxu0 0.0
  %1650 = vmatpush1.msra.mxu0 0.0
  %1651 = vmatprep.subr.mxu0 0.0
  %1652 = vmatpush1.msra.mxu0 0.0
  %1653 = vmatprep.subr.mxu0 0.0
  %1654 = vmatpush1.msra.mxu0 0.0
  %1655 = vmatprep.subr.mxu0 0.0
  %1656 = vmatpush1.msra.mxu0 0.0
  %1657 = vmatprep.subr.mxu0 0.0
  %1658 = vmatpush1.msra.mxu0 0.0
  %1659 = vmatprep.subr.mxu0 0.0
  %1660 = vmatpush1.msra.mxu0 0.0
  %1661 = vmatprep.subr.mxu0 0.0
  %1662 = vmatpush1.msra.mxu0 0.0
  %1663 = vmatprep.subr.mxu0 0.0
  %1664 = vmatpush1.msra.mxu0 0.0
  %1665 = vmatprep.subr.mxu0 0.0
  %1666 = vmatpush1.msra.mxu0 0.0
  %1667 = vmatprep.subr.mxu0 0.0
  %1668 = vmatpush1.msra.mxu0 0.0
  %1669 = vmatprep.subr.mxu0 0.0
  %1670 = vmatpush1.msra.mxu0 0.0
  %1671 = vmatprep.subr.mxu0 0.0
  %1672 = vmatpush1.msra.mxu0 0.0
  %1673 = vmatprep.subr.mxu0 0.0
  %1674 = vmatpush1.msra.mxu0 0.0
  %1675 = vmatprep.subr.mxu0 0.0
  %1676 = vmatpush1.msra.mxu0 0.0
  %1677 = vmatprep.subr.mxu0 0.0
  %1678 = vmatpush1.msra.mxu0 0.0
  %1679 = vmatprep.subr.mxu0 0.0
  %1680 = vmatpush1.msra.mxu0 0.0
  %1681 = vmatprep.subr.mxu0 0.0
  %1682 = vmatpush1.msra.mxu0 0.0
  %1683 = vmatprep.subr.mxu0 0.0
  %1684 = vmatpush1.msra.mxu0 0.0
  %1685 = vmatprep.subr.mxu0 0.0
  %1686 = vmatpush1.msra.mxu0 0.0
  %1687 = vmatprep.subr.mxu0 0.0
  %1688 = vmatpush1.msra.mxu0 0.0
  %1689 = vmatprep.subr.mxu0 0.0
  %1690 = vmatpush1.msra.mxu0 0.0
  %1691 = vmatprep.subr.mxu0 0.0
  %1692 = vmatpush1.msra.mxu0 0.0
  %1693 = vmatprep.subr.mxu0 0.0
  %1694 = vmatpush1.msra.mxu0 0.0
  %1695 = vmatprep.mubr.f32.mxu0 0.0
  %1696 = vmatmul.mubr.f32.gmra.mrb[0].mxu0 %v1487
  %v1697 = vpop.f32.mrb[0].mxu0
  %v1698 = vadd.f32 0.0, %v1697
  %v1699 = vpop.f32.mrb[0].mxu0
  %v1700 = vadd.f32 0.0, %v1699
  %1701 = vdwg.mxu0
  %v1702 = vadd.f32 %v1459, %v1556
  %v1703 = vadd.f32 %v1460, %v1558
  %v1704 = vadd.f32 %v1461, %v1627
  %v1705 = vadd.f32 %v1462, %v1629
  %v1706 = vadd.f32 %v1463, %v1698
  %v1707 = vadd.f32 %v1464, %v1700
  %1708 = vrot.lane.b32.xlu0 %v30, 91
  %v1709 = vpop.permute.xlu0 %1708
  %1710 = vrot.lane.b32.xlu0 %v31, 91
  %v1711 = vpop.permute.xlu0 %1710
  %1712 = vrot.lane.b32.xlu0 %v32, 91
  %v1713 = vpop.permute.xlu0 %1712
  %1714 = vrot.lane.b32.xlu0 %v33, 91
  %v1715 = vpop.permute.xlu0 %1714
  %1716 = vrot.lane.b32.xlu0 %v34, 91
  %v1717 = vpop.permute.xlu0 %1716
  %1718 = vrot.lane.b32.xlu0 %v35, 91
  %v1719 = vpop.permute.xlu0 %1718
  %vm1720 = vcmp.lt.s32.totalorder %v50, 91
  %v1721 = vsel %vm1720, %v1717, %v1719
  %v1722 = vsel %vm1720, %v1715, %v1717
  %v1723 = vsel %vm1720, %v1713, %v1715
  %v1724 = vsel %vm1720, %v1711, %v1713
  %v1725 = vsel %vm1720, %v1709, %v1711
  %v1726 = vsel %vm1720, %v1719, %v1709
  %s1727 = scalar_lea.vmem %s1, 56
  %v1728 = vld [vmem:[%s1727] sm:$0xff]
  %v1730 = vsel %vm60, %v1728, 0
  %1732 = vmatprep.subr.mxu0 %v1724
  %1733 = vmatpush1.msra.mxu0 %v1725
  %1734 = vmatprep.subr.mxu0 0.0
  %1735 = vmatpush1.msra.mxu0 0.0
  %1736 = vmatprep.subr.mxu0 0.0
  %1737 = vmatpush1.msra.mxu0 0.0
  %1738 = vmatprep.subr.mxu0 0.0
  %1739 = vmatpush1.msra.mxu0 0.0
  %1740 = vmatprep.subr.mxu0 0.0
  %1741 = vmatpush1.msra.mxu0 0.0
  %1742 = vmatprep.subr.mxu0 0.0
  %1743 = vmatpush1.msra.mxu0 0.0
  %1744 = vmatprep.subr.mxu0 0.0
  %1745 = vmatpush1.msra.mxu0 0.0
  %1746 = vmatprep.subr.mxu0 0.0
  %1747 = vmatpush1.msra.mxu0 0.0
  %1748 = vmatprep.subr.mxu0 0.0
  %1749 = vmatpush1.msra.mxu0 0.0
  %1750 = vmatprep.subr.mxu0 0.0
  %1751 = vmatpush1.msra.mxu0 0.0
  %1752 = vmatprep.subr.mxu0 0.0
  %1753 = vmatpush1.msra.mxu0 0.0
  %1754 = vmatprep.subr.mxu0 0.0
  %1755 = vmatpush1.msra.mxu0 0.0
  %1756 = vmatprep.subr.mxu0 0.0
  %1757 = vmatpush1.msra.mxu0 0.0
  %1758 = vmatprep.subr.mxu0 0.0
  %1759 = vmatpush1.msra.mxu0 0.0
  %1760 = vmatprep.subr.mxu0 0.0
  %1761 = vmatpush1.msra.mxu0 0.0
  %1762 = vmatprep.subr.mxu0 0.0
  %1763 = vmatpush1.msra.mxu0 0.0
  %1764 = vmatprep.subr.mxu0 0.0
  %1765 = vmatpush1.msra.mxu0 0.0
  %1766 = vmatprep.subr.mxu0 0.0
  %1767 = vmatpush1.msra.mxu0 0.0
  %1768 = vmatprep.subr.mxu0 0.0
  %1769 = vmatpush1.msra.mxu0 0.0
  %1770 = vmatprep.subr.mxu0 0.0
  %1771 = vmatpush1.msra.mxu0 0.0
  %1772 = vmatprep.subr.mxu0 0.0
  %1773 = vmatpush1.msra.mxu0 0.0
  %1774 = vmatprep.subr.mxu0 0.0
  %1775 = vmatpush1.msra.mxu0 0.0
  %1776 = vmatprep.subr.mxu0 0.0
  %1777 = vmatpush1.msra.mxu0 0.0
  %1778 = vmatprep.subr.mxu0 0.0
  %1779 = vmatpush1.msra.mxu0 0.0
  %1780 = vmatprep.subr.mxu0 0.0
  %1781 = vmatpush1.msra.mxu0 0.0
  %1782 = vmatprep.subr.mxu0 0.0
  %1783 = vmatpush1.msra.mxu0 0.0
  %1784 = vmatprep.subr.mxu0 0.0
  %1785 = vmatpush1.msra.mxu0 0.0
  %1786 = vmatprep.subr.mxu0 0.0
  %1787 = vmatpush1.msra.mxu0 0.0
  %1788 = vmatprep.subr.mxu0 0.0
  %1789 = vmatpush1.msra.mxu0 0.0
  %1790 = vmatprep.subr.mxu0 0.0
  %1791 = vmatpush1.msra.mxu0 0.0
  %1792 = vmatprep.subr.mxu0 0.0
  %1793 = vmatpush1.msra.mxu0 0.0
  %1794 = vmatprep.subr.mxu0 0.0
  %1795 = vmatpush1.msra.mxu0 0.0
  %1796 = vmatprep.mubr.f32.mxu0 0.0
  %1797 = vmatmul.mubr.f32.gmra.mrb[0].mxu0 %v1730
  %v1798 = vpop.f32.mrb[0].mxu0
  %v1799 = vadd.f32 0.0, %v1798
  %v1800 = vpop.f32.mrb[0].mxu0
  %v1801 = vadd.f32 0.0, %v1800
  %1802 = vdwg.mxu0
  %1803 = vmatprep.subr.mxu0 %v1722
  %1804 = vmatpush1.msra.mxu0 %v1723
  %1805 = vmatprep.subr.mxu0 0.0
  %1806 = vmatpush1.msra.mxu0 0.0
  %1807 = vmatprep.subr.mxu0 0.0
  %1808 = vmatpush1.msra.mxu0 0.0
  %1809 = vmatprep.subr.mxu0 0.0
  %1810 = vmatpush1.msra.mxu0 0.0
  %1811 = vmatprep.subr.mxu0 0.0
  %1812 = vmatpush1.msra.mxu0 0.0
  %1813 = vmatprep.subr.mxu0 0.0
  %1814 = vmatpush1.msra.mxu0 0.0
  %1815 = vmatprep.subr.mxu0 0.0
  %1816 = vmatpush1.msra.mxu0 0.0
  %1817 = vmatprep.subr.mxu0 0.0
  %1818 = vmatpush1.msra.mxu0 0.0
  %1819 = vmatprep.subr.mxu0 0.0
  %1820 = vmatpush1.msra.mxu0 0.0
  %1821 = vmatprep.subr.mxu0 0.0
  %1822 = vmatpush1.msra.mxu0 0.0
  %1823 = vmatprep.subr.mxu0 0.0
  %1824 = vmatpush1.msra.mxu0 0.0
  %1825 = vmatprep.subr.mxu0 0.0
  %1826 = vmatpush1.msra.mxu0 0.0
  %1827 = vmatprep.subr.mxu0 0.0
  %1828 = vmatpush1.msra.mxu0 0.0
  %1829 = vmatprep.subr.mxu0 0.0
  %1830 = vmatpush1.msra.mxu0 0.0
  %1831 = vmatprep.subr.mxu0 0.0
  %1832 = vmatpush1.msra.mxu0 0.0
  %1833 = vmatprep.subr.mxu0 0.0
  %1834 = vmatpush1.msra.mxu0 0.0
  %1835 = vmatprep.subr.mxu0 0.0
  %1836 = vmatpush1.msra.mxu0 0.0
  %1837 = vmatprep.subr.mxu0 0.0
  %1838 = vmatpush1.msra.mxu0 0.0
  %1839 = vmatprep.subr.mxu0 0.0
  %1840 = vmatpush1.msra.mxu0 0.0
  %1841 = vmatprep.subr.mxu0 0.0
  %1842 = vmatpush1.msra.mxu0 0.0
  %1843 = vmatprep.subr.mxu0 0.0
  %1844 = vmatpush1.msra.mxu0 0.0
  %1845 = vmatprep.subr.mxu0 0.0
  %1846 = vmatpush1.msra.mxu0 0.0
  %1847 = vmatprep.subr.mxu0 0.0
  %1848 = vmatpush1.msra.mxu0 0.0
  %1849 = vmatprep.subr.mxu0 0.0
  %1850 = vmatpush1.msra.mxu0 0.0
  %1851 = vmatprep.subr.mxu0 0.0
  %1852 = vmatpush1.msra.mxu0 0.0
  %1853 = vmatprep.subr.mxu0 0.0
  %1854 = vmatpush1.msra.mxu0 0.0
  %1855 = vmatprep.subr.mxu0 0.0
  %1856 = vmatpush1.msra.mxu0 0.0
  %1857 = vmatprep.subr.mxu0 0.0
  %1858 = vmatpush1.msra.mxu0 0.0
  %1859 = vmatprep.subr.mxu0 0.0
  %1860 = vmatpush1.msra.mxu0 0.0
  %1861 = vmatprep.subr.mxu0 0.0
  %1862 = vmatpush1.msra.mxu0 0.0
  %1863 = vmatprep.subr.mxu0 0.0
  %1864 = vmatpush1.msra.mxu0 0.0
  %1865 = vmatprep.subr.mxu0 0.0
  %1866 = vmatpush1.msra.mxu0 0.0
  %1867 = vmatprep.mubr.f32.mxu0 0.0
  %1868 = vmatmul.mubr.f32.gmra.mrb[0].mxu0 %v1730
  %v1869 = vpop.f32.mrb[0].mxu0
  %v1870 = vadd.f32 0.0, %v1869
  %v1871 = vpop.f32.mrb[0].mxu0
  %v1872 = vadd.f32 0.0, %v1871
  %1873 = vdwg.mxu0
  %1874 = vmatprep.subr.mxu0 %v1726
  %1875 = vmatpush1.msra.mxu0 %v1721
  %1876 = vmatprep.subr.mxu0 0.0
  %1877 = vmatpush1.msra.mxu0 0.0
  %1878 = vmatprep.subr.mxu0 0.0
  %1879 = vmatpush1.msra.mxu0 0.0
  %1880 = vmatprep.subr.mxu0 0.0
  %1881 = vmatpush1.msra.mxu0 0.0
  %1882 = vmatprep.subr.mxu0 0.0
  %1883 = vmatpush1.msra.mxu0 0.0
  %1884 = vmatprep.subr.mxu0 0.0
  %1885 = vmatpush1.msra.mxu0 0.0
  %1886 = vmatprep.subr.mxu0 0.0
  %1887 = vmatpush1.msra.mxu0 0.0
  %1888 = vmatprep.subr.mxu0 0.0
  %1889 = vmatpush1.msra.mxu0 0.0
  %1890 = vmatprep.subr.mxu0 0.0
  %1891 = vmatpush1.msra.mxu0 0.0
  %1892 = vmatprep.subr.mxu0 0.0
  %1893 = vmatpush1.msra.mxu0 0.0
  %1894 = vmatprep.subr.mxu0 0.0
  %1895 = vmatpush1.msra.mxu0 0.0
  %1896 = vmatprep.subr.mxu0 0.0
  %1897 = vmatpush1.msra.mxu0 0.0
  %1898 = vmatprep.subr.mxu0 0.0
  %1899 = vmatpush1.msra.mxu0 0.0
  %1900 = vmatprep.subr.mxu0 0.0
  %1901 = vmatpush1.msra.mxu0 0.0
  %1902 = vmatprep.subr.mxu0 0.0
  %1903 = vmatpush1.msra.mxu0 0.0
  %1904 = vmatprep.subr.mxu0 0.0
  %1905 = vmatpush1.msra.mxu0 0.0
  %1906 = vmatprep.subr.mxu0 0.0
  %1907 = vmatpush1.msra.mxu0 0.0
  %1908 = vmatprep.subr.mxu0 0.0
  %1909 = vmatpush1.msra.mxu0 0.0
  %1910 = vmatprep.subr.mxu0 0.0
  %1911 = vmatpush1.msra.mxu0 0.0
  %1912 = vmatprep.subr.mxu0 0.0
  %1913 = vmatpush1.msra.mxu0 0.0
  %1914 = vmatprep.subr.mxu0 0.0
  %1915 = vmatpush1.msra.mxu0 0.0
  %1916 = vmatprep.subr.mxu0 0.0
  %1917 = vmatpush1.msra.mxu0 0.0
  %1918 = vmatprep.subr.mxu0 0.0
  %1919 = vmatpush1.msra.mxu0 0.0
  %1920 = vmatprep.subr.mxu0 0.0
  %1921 = vmatpush1.msra.mxu0 0.0
  %1922 = vmatprep.subr.mxu0 0.0
  %1923 = vmatpush1.msra.mxu0 0.0
  %1924 = vmatprep.subr.mxu0 0.0
  %1925 = vmatpush1.msra.mxu0 0.0
  %1926 = vmatprep.subr.mxu0 0.0
  %1927 = vmatpush1.msra.mxu0 0.0
  %1928 = vmatprep.subr.mxu0 0.0
  %1929 = vmatpush1.msra.mxu0 0.0
  %1930 = vmatprep.subr.mxu0 0.0
  %1931 = vmatpush1.msra.mxu0 0.0
  %1932 = vmatprep.subr.mxu0 0.0
  %1933 = vmatpush1.msra.mxu0 0.0
  %1934 = vmatprep.subr.mxu0 0.0
  %1935 = vmatpush1.msra.mxu0 0.0
  %1936 = vmatprep.subr.mxu0 0.0
  %1937 = vmatpush1.msra.mxu0 0.0
  %1938 = vmatprep.mubr.f32.mxu0 0.0
  %1939 = vmatmul.mubr.f32.gmra.mrb[0].mxu0 %v1730
  %v1940 = vpop.f32.mrb[0].mxu0
  %v1941 = vadd.f32 0.0, %v1940
  %v1942 = vpop.f32.mrb[0].mxu0
  %v1943 = vadd.f32 0.0, %v1942
  %1944 = vdwg.mxu0
  %v1945 = vadd.f32 %v1702, %v1799
  %v1946 = vadd.f32 %v1703, %v1801
  %v1947 = vadd.f32 %v1704, %v1870
  %v1948 = vadd.f32 %v1705, %v1872
  %v1949 = vadd.f32 %v1706, %v1941
  %v1950 = vadd.f32 %v1707, %v1943
  %1951 = vrot.lane.b32.xlu0 %v30, 90
  %v1952 = vpop.permute.xlu0 %1951
  %1953 = vrot.lane.b32.xlu0 %v31, 90
  %v1954 = vpop.permute.xlu0 %1953
  %1955 = vrot.lane.b32.xlu0 %v32, 90
  %v1956 = vpop.permute.xlu0 %1955
  %1957 = vrot.lane.b32.xlu0 %v33, 90
  %v1958 = vpop.permute.xlu0 %1957
  %1959 = vrot.lane.b32.xlu0 %v34, 90
  %v1960 = vpop.permute.xlu0 %1959
  %1961 = vrot.lane.b32.xlu0 %v35, 90
  %v1962 = vpop.permute.xlu0 %1961
  %vm1963 = vcmp.lt.s32.totalorder %v50, 90
  %v1964 = vsel %vm1963, %v1960, %v1962
  %v1965 = vsel %vm1963, %v1958, %v1960
  %v1966 = vsel %vm1963, %v1956, %v1958
  %v1967 = vsel %vm1963, %v1954, %v1956
  %v1968 = vsel %vm1963, %v1952, %v1954
  %v1969 = vsel %vm1963, %v1962, %v1952
  %s1970 = scalar_lea.vmem %s1, 64
  %v1971 = vld [vmem:[%s1970] sm:$0xff]
  %v1973 = vsel %vm60, %v1971, 0
  %1975 = vmatprep.subr.mxu0 %v1967
  %1976 = vmatpush1.msra.mxu0 %v1968
  %1977 = vmatprep.subr.mxu0 0.0
  %1978 = vmatpush1.msra.mxu0 0.0
  %1979 = vmatprep.subr.mxu0 0.0
  %1980 = vmatpush1.msra.mxu0 0.0
  %1981 = vmatprep.subr.mxu0 0.0
  %1982 = vmatpush1.msra.mxu0 0.0
  %1983 = vmatprep.subr.mxu0 0.0
  %1984 = vmatpush1.msra.mxu0 0.0
  %1985 = vmatprep.subr.mxu0 0.0
  %1986 = vmatpush1.msra.mxu0 0.0
  %1987 = vmatprep.subr.mxu0 0.0
  %1988 = vmatpush1.msra.mxu0 0.0
  %1989 = vmatprep.subr.mxu0 0.0
  %1990 = vmatpush1.msra.mxu0 0.0
  %1991 = vmatprep.subr.mxu0 0.0
  %1992 = vmatpush1.msra.mxu0 0.0
  %1993 = vmatprep.subr.mxu0 0.0
  %1994 = vmatpush1.msra.mxu0 0.0
  %1995 = vmatprep.subr.mxu0 0.0
  %1996 = vmatpush1.msra.mxu0 0.0
  %1997 = vmatprep.subr.mxu0 0.0
  %1998 = vmatpush1.msra.mxu0 0.0
  %1999 = vmatprep.subr.mxu0 0.0
  %2000 = vmatpush1.msra.mxu0 0.0
  %2001 = vmatprep.subr.mxu0 0.0
  %2002 = vmatpush1.msra.mxu0 0.0
  %2003 = vmatprep.subr.mxu0 0.0
  %2004 = vmatpush1.msra.mxu0 0.0
  %2005 = vmatprep.subr.mxu0 0.0
  %2006 = vmatpush1.msra.mxu0 0.0
  %2007 = vmatprep.subr.mxu0 0.0
  %2008 = vmatpush1.msra.mxu0 0.0
  %2009 = vmatprep.subr.mxu0 0.0
  %2010 = vmatpush1.msra.mxu0 0.0
  %2011 = vmatprep.subr.mxu0 0.0
  %2012 = vmatpush1.msra.mxu0 0.0
  %2013 = vmatprep.subr.mxu0 0.0
  %2014 = vmatpush1.msra.mxu0 0.0
  %2015 = vmatprep.subr.mxu0 0.0
  %2016 = vmatpush1.msra.mxu0 0.0
  %2017 = vmatprep.subr.mxu0 0.0
  %2018 = vmatpush1.msra.mxu0 0.0
  %2019 = vmatprep.subr.mxu0 0.0
  %2020 = vmatpush1.msra.mxu0 0.0
  %2021 = vmatprep.subr.mxu0 0.0
  %2022 = vmatpush1.msra.mxu0 0.0
  %2023 = vmatprep.subr.mxu0 0.0
  %2024 = vmatpush1.msra.mxu0 0.0
  %2025 = vmatprep.subr.mxu0 0.0
  %2026 = vmatpush1.msra.mxu0 0.0
  %2027 = vmatprep.subr.mxu0 0.0
  %2028 = vmatpush1.msra.mxu0 0.0
  %2029 = vmatprep.subr.mxu0 0.0
  %2030 = vmatpush1.msra.mxu0 0.0
  %2031 = vmatprep.subr.mxu0 0.0
  %2032 = vmatpush1.msra.mxu0 0.0
  %2033 = vmatprep.subr.mxu0 0.0
  %2034 = vmatpush1.msra.mxu0 0.0
  %2035 = vmatprep.subr.mxu0 0.0
  %2036 = vmatpush1.msra.mxu0 0.0
  %2037 = vmatprep.subr.mxu0 0.0
  %2038 = vmatpush1.msra.mxu0 0.0
  %2039 = vmatprep.mubr.f32.mxu0 0.0
  %2040 = vmatmul.mubr.f32.gmra.mrb[0].mxu0 %v1973
  %v2041 = vpop.f32.mrb[0].mxu0
  %v2042 = vadd.f32 0.0, %v2041
  %v2043 = vpop.f32.mrb[0].mxu0
  %v2044 = vadd.f32 0.0, %v2043
  %2045 = vdwg.mxu0
  %2046 = vmatprep.subr.mxu0 %v1965
  %2047 = vmatpush1.msra.mxu0 %v1966
  %2048 = vmatprep.subr.mxu0 0.0
  %2049 = vmatpush1.msra.mxu0 0.0
  %2050 = vmatprep.subr.mxu0 0.0
  %2051 = vmatpush1.msra.mxu0 0.0
  %2052 = vmatprep.subr.mxu0 0.0
  %2053 = vmatpush1.msra.mxu0 0.0
  %2054 = vmatprep.subr.mxu0 0.0
  %2055 = vmatpush1.msra.mxu0 0.0
  %2056 = vmatprep.subr.mxu0 0.0
  %2057 = vmatpush1.msra.mxu0 0.0
  %2058 = vmatprep.subr.mxu0 0.0
  %2059 = vmatpush1.msra.mxu0 0.0
  %2060 = vmatprep.subr.mxu0 0.0
  %2061 = vmatpush1.msra.mxu0 0.0
  %2062 = vmatprep.subr.mxu0 0.0
  %2063 = vmatpush1.msra.mxu0 0.0
  %2064 = vmatprep.subr.mxu0 0.0
  %2065 = vmatpush1.msra.mxu0 0.0
  %2066 = vmatprep.subr.mxu0 0.0
  %2067 = vmatpush1.msra.mxu0 0.0
  %2068 = vmatprep.subr.mxu0 0.0
  %2069 = vmatpush1.msra.mxu0 0.0
  %2070 = vmatprep.subr.mxu0 0.0
  %2071 = vmatpush1.msra.mxu0 0.0
  %2072 = vmatprep.subr.mxu0 0.0
  %2073 = vmatpush1.msra.mxu0 0.0
  %2074 = vmatprep.subr.mxu0 0.0
  %2075 = vmatpush1.msra.mxu0 0.0
  %2076 = vmatprep.subr.mxu0 0.0
  %2077 = vmatpush1.msra.mxu0 0.0
  %2078 = vmatprep.subr.mxu0 0.0
  %2079 = vmatpush1.msra.mxu0 0.0
  %2080 = vmatprep.subr.mxu0 0.0
  %2081 = vmatpush1.msra.mxu0 0.0
  %2082 = vmatprep.subr.mxu0 0.0
  %2083 = vmatpush1.msra.mxu0 0.0
  %2084 = vmatprep.subr.mxu0 0.0
  %2085 = vmatpush1.msra.mxu0 0.0
  %2086 = vmatprep.subr.mxu0 0.0
  %2087 = vmatpush1.msra.mxu0 0.0
  %2088 = vmatprep.subr.mxu0 0.0
  %2089 = vmatpush1.msra.mxu0 0.0
  %2090 = vmatprep.subr.mxu0 0.0
  %2091 = vmatpush1.msra.mxu0 0.0
  %2092 = vmatprep.subr.mxu0 0.0
  %2093 = vmatpush1.msra.mxu0 0.0
  %2094 = vmatprep.subr.mxu0 0.0
  %2095 = vmatpush1.msra.mxu0 0.0
  %2096 = vmatprep.subr.mxu0 0.0
  %2097 = vmatpush1.msra.mxu0 0.0
  %2098 = vmatprep.subr.mxu0 0.0
  %2099 = vmatpush1.msra.mxu0 0.0
  %2100 = vmatprep.subr.mxu0 0.0
  %2101 = vmatpush1.msra.mxu0 0.0
  %2102 = vmatprep.subr.mxu0 0.0
  %2103 = vmatpush1.msra.mxu0 0.0
  %2104 = vmatprep.subr.mxu0 0.0
  %2105 = vmatpush1.msra.mxu0 0.0
  %2106 = vmatprep.subr.mxu0 0.0
  %2107 = vmatpush1.msra.mxu0 0.0
  %2108 = vmatprep.subr.mxu0 0.0
  %2109 = vmatpush1.msra.mxu0 0.0
  %2110 = vmatprep.mubr.f32.mxu0 0.0
  %2111 = vmatmul.mubr.f32.gmra.mrb[0].mxu0 %v1973
  %v2112 = vpop.f32.mrb[0].mxu0
  %v2113 = vadd.f32 0.0, %v2112
  %v2114 = vpop.f32.mrb[0].mxu0
  %v2115 = vadd.f32 0.0, %v2114
  %2116 = vdwg.mxu0
  %2117 = vmatprep.subr.mxu0 %v1969
  %2118 = vmatpush1.msra.mxu0 %v1964
  %2119 = vmatprep.subr.mxu0 0.0
  %2120 = vmatpush1.msra.mxu0 0.0
  %2121 = vmatprep.subr.mxu0 0.0
  %2122 = vmatpush1.msra.mxu0 0.0
  %2123 = vmatprep.subr.mxu0 0.0
  %2124 = vmatpush1.msra.mxu0 0.0
  %2125 = vmatprep.subr.mxu0 0.0
  %2126 = vmatpush1.msra.mxu0 0.0
  %2127 = vmatprep.subr.mxu0 0.0
  %2128 = vmatpush1.msra.mxu0 0.0
  %2129 = vmatprep.subr.mxu0 0.0
  %2130 = vmatpush1.msra.mxu0 0.0
  %2131 = vmatprep.subr.mxu0 0.0
  %2132 = vmatpush1.msra.mxu0 0.0
  %2133 = vmatprep.subr.mxu0 0.0
  %2134 = vmatpush1.msra.mxu0 0.0
  %2135 = vmatprep.subr.mxu0 0.0
  %2136 = vmatpush1.msra.mxu0 0.0
  %2137 = vmatprep.subr.mxu0 0.0
  %2138 = vmatpush1.msra.mxu0 0.0
  %2139 = vmatprep.subr.mxu0 0.0
  %2140 = vmatpush1.msra.mxu0 0.0
  %2141 = vmatprep.subr.mxu0 0.0
  %2142 = vmatpush1.msra.mxu0 0.0
  %2143 = vmatprep.subr.mxu0 0.0
  %2144 = vmatpush1.msra.mxu0 0.0
  %2145 = vmatprep.subr.mxu0 0.0
  %2146 = vmatpush1.msra.mxu0 0.0
  %2147 = vmatprep.subr.mxu0 0.0
  %2148 = vmatpush1.msra.mxu0 0.0
  %2149 = vmatprep.subr.mxu0 0.0
  %2150 = vmatpush1.msra.mxu0 0.0
  %2151 = vmatprep.subr.mxu0 0.0
  %2152 = vmatpush1.msra.mxu0 0.0
  %2153 = vmatprep.subr.mxu0 0.0
  %2154 = vmatpush1.msra.mxu0 0.0
  %2155 = vmatprep.subr.mxu0 0.0
  %2156 = vmatpush1.msra.mxu0 0.0
  %2157 = vmatprep.subr.mxu0 0.0
  %2158 = vmatpush1.msra.mxu0 0.0
  %2159 = vmatprep.subr.mxu0 0.0
  %2160 = vmatpush1.msra.mxu0 0.0
  %2161 = vmatprep.subr.mxu0 0.0
  %2162 = vmatpush1.msra.mxu0 0.0
  %2163 = vmatprep.subr.mxu0 0.0
  %2164 = vmatpush1.msra.mxu0 0.0
  %2165 = vmatprep.subr.mxu0 0.0
  %2166 = vmatpush1.msra.mxu0 0.0
  %2167 = vmatprep.subr.mxu0 0.0
  %2168 = vmatpush1.msra.mxu0 0.0
  %2169 = vmatprep.subr.mxu0 0.0
  %2170 = vmatpush1.msra.mxu0 0.0
  %2171 = vmatprep.subr.mxu0 0.0
  %2172 = vmatpush1.msra.mxu0 0.0
  %2173 = vmatprep.subr.mxu0 0.0
  %2174 = vmatpush1.msra.mxu0 0.0
  %2175 = vmatprep.subr.mxu0 0.0
  %2176 = vmatpush1.msra.mxu0 0.0
  %2177 = vmatprep.subr.mxu0 0.0
  %2178 = vmatpush1.msra.mxu0 0.0
  %2179 = vmatprep.subr.mxu0 0.0
  %2180 = vmatpush1.msra.mxu0 0.0
  %2181 = vmatprep.mubr.f32.mxu0 0.0
  %2182 = vmatmul.mubr.f32.gmra.mrb[0].mxu0 %v1973
  %v2183 = vpop.f32.mrb[0].mxu0
  %v2184 = vadd.f32 0.0, %v2183
  %v2185 = vpop.f32.mrb[0].mxu0
  %v2186 = vadd.f32 0.0, %v2185
  %2187 = vdwg.mxu0
  %v2188 = vadd.f32 %v1945, %v2042
  %v2189 = vadd.f32 %v1946, %v2044
  %v2190 = vadd.f32 %v1947, %v2113
  %v2191 = vadd.f32 %v1948, %v2115
  %v2192 = vadd.f32 %v1949, %v2184
  %v2193 = vadd.f32 %v1950, %v2186
  %v2194 = vld [vmem:[%s2] sm:$0xff]
  %v2195 = vld [vmem:[%s3] sm:$0xff]
  %v2197 = vlaneseq
  %v2198 = vshrl.u32 %v2197, 7
  %v2199 = vsub.s32 0, %v2198
  %v2200 = vrot.slane %v29, %v2199
  %v2201 = vlaneseq
  %v2202 = vshrl.u32 %v2201, 7
  %v2203 = vsub.s32 1, %v2202
  %v2204 = vrot.slane %v29, %v2203
  %v2205 = vlaneseq
  %v2206 = vshrl.u32 %v2205, 7
  %v2207 = vsub.s32 2, %v2206
  %v2208 = vrot.slane %v29, %v2207
  %v2209 = vlaneseq
  %v2210 = vshrl.u32 %v2209, 7
  %v2211 = vsub.s32 3, %v2210
  %v2212 = vrot.slane %v29, %v2211
  %v2213 = vlaneseq
  %v2214 = vshrl.u32 %v2213, 7
  %v2215 = vsub.s32 4, %v2214
  %v2216 = vrot.slane %v29, %v2215
  %v2217 = vlaneseq
  %v2218 = vshrl.u32 %v2217, 7
  %v2219 = vsub.s32 5, %v2218
  %v2220 = vrot.slane %v29, %v2219
  %v2227 = vmul.f32 %v2188, %v2200
  %v2228 = vmul.f32 %v2189, %v2204
  %v2229 = vmul.f32 %v2190, %v2208
  %v2230 = vmul.f32 %v2191, %v2212
  %v2231 = vmul.f32 %v2192, %v2216
  %v2232 = vmul.f32 %v2193, %v2220
  %v2233 = vadd.f32 %v2227, %v2228
  %v2234 = vadd.f32 %v2233, %v2229
  %v2235 = vadd.f32 %v2234, %v2230
  %v2236 = vadd.f32 %v2235, %v2231
  %v2237 = vadd.f32 %v2236, %v2232
  %2238 = vadd.xlane.f32.xlu0 %v2237
  %v2239 = vpop.xlane.xlu0 %2238
  %v2240 = vmul.f32 %v2239, 0.001953125
  %v2241 = vsub.f32 %v2188, %v2240
  %v2242 = vsub.f32 %v2189, %v2240
  %v2243 = vsub.f32 %v2190, %v2240
  %v2244 = vsub.f32 %v2191, %v2240
  %v2245 = vsub.f32 %v2192, %v2240
  %v2246 = vsub.f32 %v2193, %v2240
  %v2247 = vmul.f32 %v2241, %v2200
  %v2248 = vmul.f32 %v2242, %v2204
  %v2249 = vmul.f32 %v2243, %v2208
  %v2250 = vmul.f32 %v2244, %v2212
  %v2251 = vmul.f32 %v2245, %v2216
  %v2252 = vmul.f32 %v2246, %v2220
  %v2253 = vmul.f32 %v2247, %v2247
  %v2254 = vmul.f32 %v2248, %v2248
  %v2255 = vmul.f32 %v2249, %v2249
  %v2256 = vmul.f32 %v2250, %v2250
  %v2257 = vmul.f32 %v2251, %v2251
  %v2258 = vmul.f32 %v2252, %v2252
  %v2259 = vadd.f32 %v2253, %v2254
  %v2260 = vadd.f32 %v2259, %v2255
  %v2261 = vadd.f32 %v2260, %v2256
  %v2262 = vadd.f32 %v2261, %v2257
  %v2263 = vadd.f32 %v2262, %v2258
  %2264 = vadd.xlane.f32.xlu0 %v2263
  %v2265 = vpop.xlane.xlu0 %2264
  %v2266 = vmul.f32 %v2265, 0.001953125
  %v2267 = vadd.f32 %v2266, 1e-05
  %v2268 = vrsqrt.pop %v2267
  %v2269 = vmul.f32 %v2194, %v2268
  %v2270 = vmul.f32 %v2240, %v2269
  %v2271 = vsub.f32 %v2195, %v2270
  %2273 = vset.pattern.permute.xlu0 0
  %2274 = vperm.xlu0 %2273, %v2269
  %v2275 = vpop.permute.xlu0 %2274
  %v2277 = vmul.f32 %v2188, %v2275
  %v2278 = vmul.f32 %v2189, %v2275
  %v2279 = vmul.f32 %v2190, %v2275
  %v2280 = vmul.f32 %v2191, %v2275
  %v2281 = vmul.f32 %v2192, %v2275
  %v2282 = vmul.f32 %v2193, %v2275
  %2284 = vset.pattern.permute.xlu0 0
  %2285 = vperm.xlu0 %2284, %v2271
  %v2286 = vpop.permute.xlu0 %2285
  %v2288 = vadd.f32 %v2277, %v2286
  %v2289 = vadd.f32 %v2278, %v2286
  %v2290 = vadd.f32 %v2279, %v2286
  %v2291 = vadd.f32 %v2280, %v2286
  %v2292 = vadd.f32 %v2281, %v2286
  %v2293 = vadd.f32 %v2282, %v2286
  %v2294 = vmax.f32 %v2288, 0.0
  %v2295 = vmax.f32 %v2289, 0.0
  %v2296 = vmax.f32 %v2290, 0.0
  %v2297 = vmax.f32 %v2291, 0.0
  %v2298 = vmax.f32 %v2292, 0.0
  %v2299 = vmax.f32 %v2293, 0.0
  %v2300 = vmul.f32 %v2294, %v2200
  %v2301 = vmul.f32 %v2295, %v2204
  %v2302 = vmul.f32 %v2296, %v2208
  %v2303 = vmul.f32 %v2297, %v2212
  %v2304 = vmul.f32 %v2298, %v2216
  %v2305 = vmul.f32 %v2299, %v2220
  %2306 = vrot.lane.b32.xlu0 %v2300, 19
  %v2307 = vpop.permute.xlu0 %2306
  %2308 = vrot.lane.b32.xlu0 %v2301, 19
  %v2309 = vpop.permute.xlu0 %2308
  %2310 = vrot.lane.b32.xlu0 %v2302, 19
  %v2311 = vpop.permute.xlu0 %2310
  %2312 = vrot.lane.b32.xlu0 %v2303, 19
  %v2313 = vpop.permute.xlu0 %2312
  %2314 = vrot.lane.b32.xlu0 %v2304, 19
  %v2315 = vpop.permute.xlu0 %2314
  %2316 = vrot.lane.b32.xlu0 %v2305, 19
  %v2317 = vpop.permute.xlu0 %2316
  %vm2318 = vcmp.lt.s32.totalorder %v50, 19
  %v2319 = vsel %vm2318, %v2315, %v2317
  %v2320 = vsel %vm2318, %v2313, %v2315
  %v2321 = vsel %vm2318, %v2311, %v2313
  %v2322 = vsel %vm2318, %v2309, %v2311
  %v2323 = vsel %vm2318, %v2307, %v2309
  %v2324 = vsel %vm2318, %v2317, %v2307
  %v2325 = vld [vmem:[%s4] sm:$0xff]
  %2326 = vrot.lane.b32.xlu0 %v2300, 18
  %v2327 = vpop.permute.xlu0 %2326
  %2328 = vrot.lane.b32.xlu0 %v2301, 18
  %v2329 = vpop.permute.xlu0 %2328
  %2330 = vrot.lane.b32.xlu0 %v2302, 18
  %v2331 = vpop.permute.xlu0 %2330
  %2332 = vrot.lane.b32.xlu0 %v2303, 18
  %v2333 = vpop.permute.xlu0 %2332
  %2334 = vrot.lane.b32.xlu0 %v2304, 18
  %v2335 = vpop.permute.xlu0 %2334
  %2336 = vrot.lane.b32.xlu0 %v2305, 18
  %v2337 = vpop.permute.xlu0 %2336
  %vm2338 = vcmp.lt.s32.totalorder %v50, 18
  %v2339 = vsel %vm2338, %v2335, %v2337
  %v2340 = vsel %vm2338, %v2333, %v2335
  %v2341 = vsel %vm2338, %v2331, %v2333
  %v2342 = vsel %vm2338, %v2329, %v2331
  %v2343 = vsel %vm2338, %v2327, %v2329
  %v2344 = vsel %vm2338, %v2337, %v2327
  %s2345 = scalar_lea.vmem %s4, 8
  %v2346 = vld [vmem:[%s2345] sm:$0xff]
  %v2348 = vsel %vm60, %v2346, 0
  %2350 = vmatprep.subr.mxu0 %v2343
  %2351 = vmatpush1.msra.mxu0 %v2344
  %2352 = vmatprep.subr.mxu0 0.0
  %2353 = vmatpush1.msra.mxu0 0.0
  %2354 = vmatprep.subr.mxu0 0.0
  %2355 = vmatpush1.msra.mxu0 0.0
  %2356 = vmatprep.subr.mxu0 0.0
  %2357 = vmatpush1.msra.mxu0 0.0
  %2358 = vmatprep.subr.mxu0 0.0
  %2359 = vmatpush1.msra.mxu0 0.0
  %2360 = vmatprep.subr.mxu0 0.0
  %2361 = vmatpush1.msra.mxu0 0.0
  %2362 = vmatprep.subr.mxu0 0.0
  %2363 = vmatpush1.msra.mxu0 0.0
  %2364 = vmatprep.subr.mxu0 0.0
  %2365 = vmatpush1.msra.mxu0 0.0
  %2366 = vmatprep.subr.mxu0 0.0
  %2367 = vmatpush1.msra.mxu0 0.0
  %2368 = vmatprep.subr.mxu0 0.0
  %2369 = vmatpush1.msra.mxu0 0.0
  %2370 = vmatprep.subr.mxu0 0.0
  %2371 = vmatpush1.msra.mxu0 0.0
  %2372 = vmatprep.subr.mxu0 0.0
  %2373 = vmatpush1.msra.mxu0 0.0
  %2374 = vmatprep.subr.mxu0 0.0
  %2375 = vmatpush1.msra.mxu0 0.0
  %2376 = vmatprep.subr.mxu0 0.0
  %2377 = vmatpush1.msra.mxu0 0.0
  %2378 = vmatprep.subr.mxu0 0.0
  %2379 = vmatpush1.msra.mxu0 0.0
  %2380 = vmatprep.subr.mxu0 0.0
  %2381 = vmatpush1.msra.mxu0 0.0
  %2382 = vmatprep.subr.mxu0 0.0
  %2383 = vmatpush1.msra.mxu0 0.0
  %2384 = vmatprep.subr.mxu0 0.0
  %2385 = vmatpush1.msra.mxu0 0.0
  %2386 = vmatprep.subr.mxu0 0.0
  %2387 = vmatpush1.msra.mxu0 0.0
  %2388 = vmatprep.subr.mxu0 0.0
  %2389 = vmatpush1.msra.mxu0 0.0
  %2390 = vmatprep.subr.mxu0 0.0
  %2391 = vmatpush1.msra.mxu0 0.0
  %2392 = vmatprep.subr.mxu0 0.0
  %2393 = vmatpush1.msra.mxu0 0.0
  %2394 = vmatprep.subr.mxu0 0.0
  %2395 = vmatpush1.msra.mxu0 0.0
  %2396 = vmatprep.subr.mxu0 0.0
  %2397 = vmatpush1.msra.mxu0 0.0
  %2398 = vmatprep.subr.mxu0 0.0
  %2399 = vmatpush1.msra.mxu0 0.0
  %2400 = vmatprep.subr.mxu0 0.0
  %2401 = vmatpush1.msra.mxu0 0.0
  %2402 = vmatprep.subr.mxu0 0.0
  %2403 = vmatpush1.msra.mxu0 0.0
  %2404 = vmatprep.subr.mxu0 0.0
  %2405 = vmatpush1.msra.mxu0 0.0
  %2406 = vmatprep.subr.mxu0 0.0
  %2407 = vmatpush1.msra.mxu0 0.0
  %2408 = vmatprep.subr.mxu0 0.0
  %2409 = vmatpush1.msra.mxu0 0.0
  %2410 = vmatprep.subr.mxu0 0.0
  %2411 = vmatpush1.msra.mxu0 0.0
  %2412 = vmatprep.subr.mxu0 0.0
  %2413 = vmatpush1.msra.mxu0 0.0
  %2414 = vmatprep.mubr.f32.mxu0 0.0
  %2415 = vmatmul.mubr.f32.gmra.mrb[0].mxu0 %v2348
  %v2416 = vpop.f32.mrb[0].mxu0
  %v2417 = vadd.f32 0.0, %v2416
  %v2418 = vpop.f32.mrb[0].mxu0
  %v2419 = vadd.f32 0.0, %v2418
  %2420 = vdwg.mxu0
  %2421 = vmatprep.subr.mxu0 %v2341
  %2422 = vmatpush1.msra.mxu0 %v2342
  %2423 = vmatprep.subr.mxu0 0.0
  %2424 = vmatpush1.msra.mxu0 0.0
  %2425 = vmatprep.subr.mxu0 0.0
  %2426 = vmatpush1.msra.mxu0 0.0
  %2427 = vmatprep.subr.mxu0 0.0
  %2428 = vmatpush1.msra.mxu0 0.0
  %2429 = vmatprep.subr.mxu0 0.0
  %2430 = vmatpush1.msra.mxu0 0.0
  %2431 = vmatprep.subr.mxu0 0.0
  %2432 = vmatpush1.msra.mxu0 0.0
  %2433 = vmatprep.subr.mxu0 0.0
  %2434 = vmatpush1.msra.mxu0 0.0
  %2435 = vmatprep.subr.mxu0 0.0
  %2436 = vmatpush1.msra.mxu0 0.0
  %2437 = vmatprep.subr.mxu0 0.0
  %2438 = vmatpush1.msra.mxu0 0.0
  %2439 = vmatprep.subr.mxu0 0.0
  %2440 = vmatpush1.msra.mxu0 0.0
  %2441 = vmatprep.subr.mxu0 0.0
  %2442 = vmatpush1.msra.mxu0 0.0
  %2443 = vmatprep.subr.mxu0 0.0
  %2444 = vmatpush1.msra.mxu0 0.0
  %2445 = vmatprep.subr.mxu0 0.0
  %2446 = vmatpush1.msra.mxu0 0.0
  %2447 = vmatprep.subr.mxu0 0.0
  %2448 = vmatpush1.msra.mxu0 0.0
  %2449 = vmatprep.subr.mxu0 0.0
  %2450 = vmatpush1.msra.mxu0 0.0
  %2451 = vmatprep.subr.mxu0 0.0
  %2452 = vmatpush1.msra.mxu0 0.0
  %2453 = vmatprep.subr.mxu0 0.0
  %2454 = vmatpush1.msra.mxu0 0.0
  %2455 = vmatprep.subr.mxu0 0.0
  %2456 = vmatpush1.msra.mxu0 0.0
  %2457 = vmatprep.subr.mxu0 0.0
  %2458 = vmatpush1.msra.mxu0 0.0
  %2459 = vmatprep.subr.mxu0 0.0
  %2460 = vmatpush1.msra.mxu0 0.0
  %2461 = vmatprep.subr.mxu0 0.0
  %2462 = vmatpush1.msra.mxu0 0.0
  %2463 = vmatprep.subr.mxu0 0.0
  %2464 = vmatpush1.msra.mxu0 0.0
  %2465 = vmatprep.subr.mxu0 0.0
  %2466 = vmatpush1.msra.mxu0 0.0
  %2467 = vmatprep.subr.mxu0 0.0
  %2468 = vmatpush1.msra.mxu0 0.0
  %2469 = vmatprep.subr.mxu0 0.0
  %2470 = vmatpush1.msra.mxu0 0.0
  %2471 = vmatprep.subr.mxu0 0.0
  %2472 = vmatpush1.msra.mxu0 0.0
  %2473 = vmatprep.subr.mxu0 0.0
  %2474 = vmatpush1.msra.mxu0 0.0
  %2475 = vmatprep.subr.mxu0 0.0
  %2476 = vmatpush1.msra.mxu0 0.0
  %2477 = vmatprep.subr.mxu0 0.0
  %2478 = vmatpush1.msra.mxu0 0.0
  %2479 = vmatprep.subr.mxu0 0.0
  %2480 = vmatpush1.msra.mxu0 0.0
  %2481 = vmatprep.subr.mxu0 0.0
  %2482 = vmatpush1.msra.mxu0 0.0
  %2483 = vmatprep.subr.mxu0 0.0
  %2484 = vmatpush1.msra.mxu0 0.0
  %2485 = vmatprep.mubr.f32.mxu0 0.0
  %2486 = vmatmul.mubr.f32.gmra.mrb[0].mxu0 %v2348
  %v2487 = vpop.f32.mrb[0].mxu0
  %v2488 = vadd.f32 0.0, %v2487
  %v2489 = vpop.f32.mrb[0].mxu0
  %v2490 = vadd.f32 0.0, %v2489
  %2491 = vdwg.mxu0
  %2492 = vmatprep.subr.mxu0 %v2339
  %2493 = vmatpush1.msra.mxu0 %v2340
  %2494 = vmatprep.subr.mxu0 0.0
  %2495 = vmatpush1.msra.mxu0 0.0
  %2496 = vmatprep.subr.mxu0 0.0
  %2497 = vmatpush1.msra.mxu0 0.0
  %2498 = vmatprep.subr.mxu0 0.0
  %2499 = vmatpush1.msra.mxu0 0.0
  %2500 = vmatprep.subr.mxu0 0.0
  %2501 = vmatpush1.msra.mxu0 0.0
  %2502 = vmatprep.subr.mxu0 0.0
  %2503 = vmatpush1.msra.mxu0 0.0
  %2504 = vmatprep.subr.mxu0 0.0
  %2505 = vmatpush1.msra.mxu0 0.0
  %2506 = vmatprep.subr.mxu0 0.0
  %2507 = vmatpush1.msra.mxu0 0.0
  %2508 = vmatprep.subr.mxu0 0.0
  %2509 = vmatpush1.msra.mxu0 0.0
  %2510 = vmatprep.subr.mxu0 0.0
  %2511 = vmatpush1.msra.mxu0 0.0
  %2512 = vmatprep.subr.mxu0 0.0
  %2513 = vmatpush1.msra.mxu0 0.0
  %2514 = vmatprep.subr.mxu0 0.0
  %2515 = vmatpush1.msra.mxu0 0.0
  %2516 = vmatprep.subr.mxu0 0.0
  %2517 = vmatpush1.msra.mxu0 0.0
  %2518 = vmatprep.subr.mxu0 0.0
  %2519 = vmatpush1.msra.mxu0 0.0
  %2520 = vmatprep.subr.mxu0 0.0
  %2521 = vmatpush1.msra.mxu0 0.0
  %2522 = vmatprep.subr.mxu0 0.0
  %2523 = vmatpush1.msra.mxu0 0.0
  %2524 = vmatprep.subr.mxu0 0.0
  %2525 = vmatpush1.msra.mxu0 0.0
  %2526 = vmatprep.subr.mxu0 0.0
  %2527 = vmatpush1.msra.mxu0 0.0
  %2528 = vmatprep.subr.mxu0 0.0
  %2529 = vmatpush1.msra.mxu0 0.0
  %2530 = vmatprep.subr.mxu0 0.0
  %2531 = vmatpush1.msra.mxu0 0.0
  %2532 = vmatprep.subr.mxu0 0.0
  %2533 = vmatpush1.msra.mxu0 0.0
  %2534 = vmatprep.subr.mxu0 0.0
  %2535 = vmatpush1.msra.mxu0 0.0
  %2536 = vmatprep.subr.mxu0 0.0
  %2537 = vmatpush1.msra.mxu0 0.0
  %2538 = vmatprep.subr.mxu0 0.0
  %2539 = vmatpush1.msra.mxu0 0.0
  %2540 = vmatprep.subr.mxu0 0.0
  %2541 = vmatpush1.msra.mxu0 0.0
  %2542 = vmatprep.subr.mxu0 0.0
  %2543 = vmatpush1.msra.mxu0 0.0
  %2544 = vmatprep.subr.mxu0 0.0
  %2545 = vmatpush1.msra.mxu0 0.0
  %2546 = vmatprep.subr.mxu0 0.0
  %2547 = vmatpush1.msra.mxu0 0.0
  %2548 = vmatprep.subr.mxu0 0.0
  %2549 = vmatpush1.msra.mxu0 0.0
  %2550 = vmatprep.subr.mxu0 0.0
  %2551 = vmatpush1.msra.mxu0 0.0
  %2552 = vmatprep.subr.mxu0 0.0
  %2553 = vmatpush1.msra.mxu0 0.0
  %2554 = vmatprep.subr.mxu0 0.0
  %2555 = vmatpush1.msra.mxu0 0.0
  %2556 = vmatprep.mubr.f32.mxu0 0.0
  %2557 = vmatmul.mubr.f32.gmra.mrb[0].mxu0 %v2348
  %v2558 = vpop.f32.mrb[0].mxu0
  %v2559 = vadd.f32 0.0, %v2558
  %v2560 = vpop.f32.mrb[0].mxu0
  %v2561 = vadd.f32 0.0, %v2560
  %2562 = vdwg.mxu0
  %v2564 = vsel %vm60, %v2325, 0
  %2566 = vmatprep.subr.mxu0 %v2323
  %2567 = vmatpush1.msra.mxu0 %v2324
  %2568 = vmatprep.subr.mxu0 0.0
  %2569 = vmatpush1.msra.mxu0 0.0
  %2570 = vmatprep.subr.mxu0 0.0
  %2571 = vmatpush1.msra.mxu0 0.0
  %2572 = vmatprep.subr.mxu0 0.0
  %2573 = vmatpush1.msra.mxu0 0.0
  %2574 = vmatprep.subr.mxu0 0.0
  %2575 = vmatpush1.msra.mxu0 0.0
  %2576 = vmatprep.subr.mxu0 0.0
  %2577 = vmatpush1.msra.mxu0 0.0
  %2578 = vmatprep.subr.mxu0 0.0
  %2579 = vmatpush1.msra.mxu0 0.0
  %2580 = vmatprep.subr.mxu0 0.0
  %2581 = vmatpush1.msra.mxu0 0.0
  %2582 = vmatprep.subr.mxu0 0.0
  %2583 = vmatpush1.msra.mxu0 0.0
  %2584 = vmatprep.subr.mxu0 0.0
  %2585 = vmatpush1.msra.mxu0 0.0
  %2586 = vmatprep.subr.mxu0 0.0
  %2587 = vmatpush1.msra.mxu0 0.0
  %2588 = vmatprep.subr.mxu0 0.0
  %2589 = vmatpush1.msra.mxu0 0.0
  %2590 = vmatprep.subr.mxu0 0.0
  %2591 = vmatpush1.msra.mxu0 0.0
  %2592 = vmatprep.subr.mxu0 0.0
  %2593 = vmatpush1.msra.mxu0 0.0
  %2594 = vmatprep.subr.mxu0 0.0
  %2595 = vmatpush1.msra.mxu0 0.0
  %2596 = vmatprep.subr.mxu0 0.0
  %2597 = vmatpush1.msra.mxu0 0.0
  %2598 = vmatprep.subr.mxu0 0.0
  %2599 = vmatpush1.msra.mxu0 0.0
  %2600 = vmatprep.subr.mxu0 0.0
  %2601 = vmatpush1.msra.mxu0 0.0
  %2602 = vmatprep.subr.mxu0 0.0
  %2603 = vmatpush1.msra.mxu0 0.0
  %2604 = vmatprep.subr.mxu0 0.0
  %2605 = vmatpush1.msra.mxu0 0.0
  %2606 = vmatprep.subr.mxu0 0.0
  %2607 = vmatpush1.msra.mxu0 0.0
  %2608 = vmatprep.subr.mxu0 0.0
  %2609 = vmatpush1.msra.mxu0 0.0
  %2610 = vmatprep.subr.mxu0 0.0
  %2611 = vmatpush1.msra.mxu0 0.0
  %2612 = vmatprep.subr.mxu0 0.0
  %2613 = vmatpush1.msra.mxu0 0.0
  %2614 = vmatprep.subr.mxu0 0.0
  %2615 = vmatpush1.msra.mxu0 0.0
  %2616 = vmatprep.subr.mxu0 0.0
  %2617 = vmatpush1.msra.mxu0 0.0
  %2618 = vmatprep.subr.mxu0 0.0
  %2619 = vmatpush1.msra.mxu0 0.0
  %2620 = vmatprep.subr.mxu0 0.0
  %2621 = vmatpush1.msra.mxu0 0.0
  %2622 = vmatprep.subr.mxu0 0.0
  %2623 = vmatpush1.msra.mxu0 0.0
  %2624 = vmatprep.subr.mxu0 0.0
  %2625 = vmatpush1.msra.mxu0 0.0
  %2626 = vmatprep.subr.mxu0 0.0
  %2627 = vmatpush1.msra.mxu0 0.0
  %2628 = vmatprep.subr.mxu0 0.0
  %2629 = vmatpush1.msra.mxu0 0.0
  %2630 = vmatprep.mubr.f32.mxu0 0.0
  %2631 = vmatmul.mubr.f32.gmra.mrb[0].mxu0 %v2564
  %v2632 = vpop.f32.mrb[0].mxu0
  %v2633 = vadd.f32 %v2417, %v2632
  %v2634 = vpop.f32.mrb[0].mxu0
  %v2635 = vadd.f32 %v2419, %v2634
  %2636 = vdwg.mxu0
  %2637 = vmatprep.subr.mxu0 %v2321
  %2638 = vmatpush1.msra.mxu0 %v2322
  %2639 = vmatprep.subr.mxu0 0.0
  %2640 = vmatpush1.msra.mxu0 0.0
  %2641 = vmatprep.subr.mxu0 0.0
  %2642 = vmatpush1.msra.mxu0 0.0
  %2643 = vmatprep.subr.mxu0 0.0
  %2644 = vmatpush1.msra.mxu0 0.0
  %2645 = vmatprep.subr.mxu0 0.0
  %2646 = vmatpush1.msra.mxu0 0.0
  %2647 = vmatprep.subr.mxu0 0.0
  %2648 = vmatpush1.msra.mxu0 0.0
  %2649 = vmatprep.subr.mxu0 0.0
  %2650 = vmatpush1.msra.mxu0 0.0
  %2651 = vmatprep.subr.mxu0 0.0
  %2652 = vmatpush1.msra.mxu0 0.0
  %2653 = vmatprep.subr.mxu0 0.0
  %2654 = vmatpush1.msra.mxu0 0.0
  %2655 = vmatprep.subr.mxu0 0.0
  %2656 = vmatpush1.msra.mxu0 0.0
  %2657 = vmatprep.subr.mxu0 0.0
  %2658 = vmatpush1.msra.mxu0 0.0
  %2659 = vmatprep.subr.mxu0 0.0
  %2660 = vmatpush1.msra.mxu0 0.0
  %2661 = vmatprep.subr.mxu0 0.0
  %2662 = vmatpush1.msra.mxu0 0.0
  %2663 = vmatprep.subr.mxu0 0.0
  %2664 = vmatpush1.msra.mxu0 0.0
  %2665 = vmatprep.subr.mxu0 0.0
  %2666 = vmatpush1.msra.mxu0 0.0
  %2667 = vmatprep.subr.mxu0 0.0
  %2668 = vmatpush1.msra.mxu0 0.0
  %2669 = vmatprep.subr.mxu0 0.0
  %2670 = vmatpush1.msra.mxu0 0.0
  %2671 = vmatprep.subr.mxu0 0.0
  %2672 = vmatpush1.msra.mxu0 0.0
  %2673 = vmatprep.subr.mxu0 0.0
  %2674 = vmatpush1.msra.mxu0 0.0
  %2675 = vmatprep.subr.mxu0 0.0
  %2676 = vmatpush1.msra.mxu0 0.0
  %2677 = vmatprep.subr.mxu0 0.0
  %2678 = vmatpush1.msra.mxu0 0.0
  %2679 = vmatprep.subr.mxu0 0.0
  %2680 = vmatpush1.msra.mxu0 0.0
  %2681 = vmatprep.subr.mxu0 0.0
  %2682 = vmatpush1.msra.mxu0 0.0
  %2683 = vmatprep.subr.mxu0 0.0
  %2684 = vmatpush1.msra.mxu0 0.0
  %2685 = vmatprep.subr.mxu0 0.0
  %2686 = vmatpush1.msra.mxu0 0.0
  %2687 = vmatprep.subr.mxu0 0.0
  %2688 = vmatpush1.msra.mxu0 0.0
  %2689 = vmatprep.subr.mxu0 0.0
  %2690 = vmatpush1.msra.mxu0 0.0
  %2691 = vmatprep.subr.mxu0 0.0
  %2692 = vmatpush1.msra.mxu0 0.0
  %2693 = vmatprep.subr.mxu0 0.0
  %2694 = vmatpush1.msra.mxu0 0.0
  %2695 = vmatprep.subr.mxu0 0.0
  %2696 = vmatpush1.msra.mxu0 0.0
  %2697 = vmatprep.subr.mxu0 0.0
  %2698 = vmatpush1.msra.mxu0 0.0
  %2699 = vmatprep.subr.mxu0 0.0
  %2700 = vmatpush1.msra.mxu0 0.0
  %2701 = vmatprep.mubr.f32.mxu0 0.0
  %2702 = vmatmul.mubr.f32.gmra.mrb[0].mxu0 %v2564
  %v2703 = vpop.f32.mrb[0].mxu0
  %v2704 = vadd.f32 %v2488, %v2703
  %v2705 = vpop.f32.mrb[0].mxu0
  %v2706 = vadd.f32 %v2490, %v2705
  %2707 = vdwg.mxu0
  %2708 = vmatprep.subr.mxu0 %v2319
  %2709 = vmatpush1.msra.mxu0 %v2320
  %2710 = vmatprep.subr.mxu0 0.0
  %2711 = vmatpush1.msra.mxu0 0.0
  %2712 = vmatprep.subr.mxu0 0.0
  %2713 = vmatpush1.msra.mxu0 0.0
  %2714 = vmatprep.subr.mxu0 0.0
  %2715 = vmatpush1.msra.mxu0 0.0
  %2716 = vmatprep.subr.mxu0 0.0
  %2717 = vmatpush1.msra.mxu0 0.0
  %2718 = vmatprep.subr.mxu0 0.0
  %2719 = vmatpush1.msra.mxu0 0.0
  %2720 = vmatprep.subr.mxu0 0.0
  %2721 = vmatpush1.msra.mxu0 0.0
  %2722 = vmatprep.subr.mxu0 0.0
  %2723 = vmatpush1.msra.mxu0 0.0
  %2724 = vmatprep.subr.mxu0 0.0
  %2725 = vmatpush1.msra.mxu0 0.0
  %2726 = vmatprep.subr.mxu0 0.0
  %2727 = vmatpush1.msra.mxu0 0.0
  %2728 = vmatprep.subr.mxu0 0.0
  %2729 = vmatpush1.msra.mxu0 0.0
  %2730 = vmatprep.subr.mxu0 0.0
  %2731 = vmatpush1.msra.mxu0 0.0
  %2732 = vmatprep.subr.mxu0 0.0
  %2733 = vmatpush1.msra.mxu0 0.0
  %2734 = vmatprep.subr.mxu0 0.0
  %2735 = vmatpush1.msra.mxu0 0.0
  %2736 = vmatprep.subr.mxu0 0.0
  %2737 = vmatpush1.msra.mxu0 0.0
  %2738 = vmatprep.subr.mxu0 0.0
  %2739 = vmatpush1.msra.mxu0 0.0
  %2740 = vmatprep.subr.mxu0 0.0
  %2741 = vmatpush1.msra.mxu0 0.0
  %2742 = vmatprep.subr.mxu0 0.0
  %2743 = vmatpush1.msra.mxu0 0.0
  %2744 = vmatprep.subr.mxu0 0.0
  %2745 = vmatpush1.msra.mxu0 0.0
  %2746 = vmatprep.subr.mxu0 0.0
  %2747 = vmatpush1.msra.mxu0 0.0
  %2748 = vmatprep.subr.mxu0 0.0
  %2749 = vmatpush1.msra.mxu0 0.0
  %2750 = vmatprep.subr.mxu0 0.0
  %2751 = vmatpush1.msra.mxu0 0.0
  %2752 = vmatprep.subr.mxu0 0.0
  %2753 = vmatpush1.msra.mxu0 0.0
  %2754 = vmatprep.subr.mxu0 0.0
  %2755 = vmatpush1.msra.mxu0 0.0
  %2756 = vmatprep.subr.mxu0 0.0
  %2757 = vmatpush1.msra.mxu0 0.0
  %2758 = vmatprep.subr.mxu0 0.0
  %2759 = vmatpush1.msra.mxu0 0.0
  %2760 = vmatprep.subr.mxu0 0.0
  %2761 = vmatpush1.msra.mxu0 0.0
  %2762 = vmatprep.subr.mxu0 0.0
  %2763 = vmatpush1.msra.mxu0 0.0
  %2764 = vmatprep.subr.mxu0 0.0
  %2765 = vmatpush1.msra.mxu0 0.0
  %2766 = vmatprep.subr.mxu0 0.0
  %2767 = vmatpush1.msra.mxu0 0.0
  %2768 = vmatprep.subr.mxu0 0.0
  %2769 = vmatpush1.msra.mxu0 0.0
  %2770 = vmatprep.subr.mxu0 0.0
  %2771 = vmatpush1.msra.mxu0 0.0
  %2772 = vmatprep.mubr.f32.mxu0 0.0
  %2773 = vmatmul.mubr.f32.gmra.mrb[0].mxu0 %v2564
  %v2774 = vpop.f32.mrb[0].mxu0
  %v2775 = vadd.f32 %v2559, %v2774
  %v2776 = vpop.f32.mrb[0].mxu0
  %v2777 = vadd.f32 %v2561, %v2776
  %2778 = vdwg.mxu0
  %2779 = vrot.lane.b32.xlu0 %v2300, 17
  %v2780 = vpop.permute.xlu0 %2779
  %2781 = vrot.lane.b32.xlu0 %v2301, 17
  %v2782 = vpop.permute.xlu0 %2781
  %2783 = vrot.lane.b32.xlu0 %v2302, 17
  %v2784 = vpop.permute.xlu0 %2783
  %2785 = vrot.lane.b32.xlu0 %v2303, 17
  %v2786 = vpop.permute.xlu0 %2785
  %2787 = vrot.lane.b32.xlu0 %v2304, 17
  %v2788 = vpop.permute.xlu0 %2787
  %2789 = vrot.lane.b32.xlu0 %v2305, 17
  %v2790 = vpop.permute.xlu0 %2789
  %vm2791 = vcmp.lt.s32.totalorder %v50, 17
  %v2792 = vsel %vm2791, %v2788, %v2790
  %v2793 = vsel %vm2791, %v2786, %v2788
  %v2794 = vsel %vm2791, %v2784, %v2786
  %v2795 = vsel %vm2791, %v2782, %v2784
  %v2796 = vsel %vm2791, %v2780, %v2782
  %v2797 = vsel %vm2791, %v2790, %v2780
  %s2798 = scalar_lea.vmem %s4, 16
  %v2799 = vld [vmem:[%s2798] sm:$0xff]
  %v2801 = vsel %vm60, %v2799, 0
  %2803 = vmatprep.subr.mxu0 %v2796
  %2804 = vmatpush1.msra.mxu0 %v2797
  %2805 = vmatprep.subr.mxu0 0.0
  %2806 = vmatpush1.msra.mxu0 0.0
  %2807 = vmatprep.subr.mxu0 0.0
  %2808 = vmatpush1.msra.mxu0 0.0
  %2809 = vmatprep.subr.mxu0 0.0
  %2810 = vmatpush1.msra.mxu0 0.0
  %2811 = vmatprep.subr.mxu0 0.0
  %2812 = vmatpush1.msra.mxu0 0.0
  %2813 = vmatprep.subr.mxu0 0.0
  %2814 = vmatpush1.msra.mxu0 0.0
  %2815 = vmatprep.subr.mxu0 0.0
  %2816 = vmatpush1.msra.mxu0 0.0
  %2817 = vmatprep.subr.mxu0 0.0
  %2818 = vmatpush1.msra.mxu0 0.0
  %2819 = vmatprep.subr.mxu0 0.0
  %2820 = vmatpush1.msra.mxu0 0.0
  %2821 = vmatprep.subr.mxu0 0.0
  %2822 = vmatpush1.msra.mxu0 0.0
  %2823 = vmatprep.subr.mxu0 0.0
  %2824 = vmatpush1.msra.mxu0 0.0
  %2825 = vmatprep.subr.mxu0 0.0
  %2826 = vmatpush1.msra.mxu0 0.0
  %2827 = vmatprep.subr.mxu0 0.0
  %2828 = vmatpush1.msra.mxu0 0.0
  %2829 = vmatprep.subr.mxu0 0.0
  %2830 = vmatpush1.msra.mxu0 0.0
  %2831 = vmatprep.subr.mxu0 0.0
  %2832 = vmatpush1.msra.mxu0 0.0
  %2833 = vmatprep.subr.mxu0 0.0
  %2834 = vmatpush1.msra.mxu0 0.0
  %2835 = vmatprep.subr.mxu0 0.0
  %2836 = vmatpush1.msra.mxu0 0.0
  %2837 = vmatprep.subr.mxu0 0.0
  %2838 = vmatpush1.msra.mxu0 0.0
  %2839 = vmatprep.subr.mxu0 0.0
  %2840 = vmatpush1.msra.mxu0 0.0
  %2841 = vmatprep.subr.mxu0 0.0
  %2842 = vmatpush1.msra.mxu0 0.0
  %2843 = vmatprep.subr.mxu0 0.0
  %2844 = vmatpush1.msra.mxu0 0.0
  %2845 = vmatprep.subr.mxu0 0.0
  %2846 = vmatpush1.msra.mxu0 0.0
  %2847 = vmatprep.subr.mxu0 0.0
  %2848 = vmatpush1.msra.mxu0 0.0
  %2849 = vmatprep.subr.mxu0 0.0
  %2850 = vmatpush1.msra.mxu0 0.0
  %2851 = vmatprep.subr.mxu0 0.0
  %2852 = vmatpush1.msra.mxu0 0.0
  %2853 = vmatprep.subr.mxu0 0.0
  %2854 = vmatpush1.msra.mxu0 0.0
  %2855 = vmatprep.subr.mxu0 0.0
  %2856 = vmatpush1.msra.mxu0 0.0
  %2857 = vmatprep.subr.mxu0 0.0
  %2858 = vmatpush1.msra.mxu0 0.0
  %2859 = vmatprep.subr.mxu0 0.0
  %2860 = vmatpush1.msra.mxu0 0.0
  %2861 = vmatprep.subr.mxu0 0.0
  %2862 = vmatpush1.msra.mxu0 0.0
  %2863 = vmatprep.subr.mxu0 0.0
  %2864 = vmatpush1.msra.mxu0 0.0
  %2865 = vmatprep.subr.mxu0 0.0
  %2866 = vmatpush1.msra.mxu0 0.0
  %2867 = vmatprep.mubr.f32.mxu0 0.0
  %2868 = vmatmul.mubr.f32.gmra.mrb[0].mxu0 %v2801
  %v2869 = vpop.f32.mrb[0].mxu0
  %v2870 = vadd.f32 0.0, %v2869
  %v2871 = vpop.f32.mrb[0].mxu0
  %v2872 = vadd.f32 0.0, %v2871
  %2873 = vdwg.mxu0
  %2874 = vmatprep.subr.mxu0 %v2794
  %2875 = vmatpush1.msra.mxu0 %v2795
  %2876 = vmatprep.subr.mxu0 0.0
  %2877 = vmatpush1.msra.mxu0 0.0
  %2878 = vmatprep.subr.mxu0 0.0
  %2879 = vmatpush1.msra.mxu0 0.0
  %2880 = vmatprep.subr.mxu0 0.0
  %2881 = vmatpush1.msra.mxu0 0.0
  %2882 = vmatprep.subr.mxu0 0.0
  %2883 = vmatpush1.msra.mxu0 0.0
  %2884 = vmatprep.subr.mxu0 0.0
  %2885 = vmatpush1.msra.mxu0 0.0
  %2886 = vmatprep.subr.mxu0 0.0
  %2887 = vmatpush1.msra.mxu0 0.0
  %2888 = vmatprep.subr.mxu0 0.0
  %2889 = vmatpush1.msra.mxu0 0.0
  %2890 = vmatprep.subr.mxu0 0.0
  %2891 = vmatpush1.msra.mxu0 0.0
  %2892 = vmatprep.subr.mxu0 0.0
  %2893 = vmatpush1.msra.mxu0 0.0
  %2894 = vmatprep.subr.mxu0 0.0
  %2895 = vmatpush1.msra.mxu0 0.0
  %2896 = vmatprep.subr.mxu0 0.0
  %2897 = vmatpush1.msra.mxu0 0.0
  %2898 = vmatprep.subr.mxu0 0.0
  %2899 = vmatpush1.msra.mxu0 0.0
  %2900 = vmatprep.subr.mxu0 0.0
  %2901 = vmatpush1.msra.mxu0 0.0
  %2902 = vmatprep.subr.mxu0 0.0
  %2903 = vmatpush1.msra.mxu0 0.0
  %2904 = vmatprep.subr.mxu0 0.0
  %2905 = vmatpush1.msra.mxu0 0.0
  %2906 = vmatprep.subr.mxu0 0.0
  %2907 = vmatpush1.msra.mxu0 0.0
  %2908 = vmatprep.subr.mxu0 0.0
  %2909 = vmatpush1.msra.mxu0 0.0
  %2910 = vmatprep.subr.mxu0 0.0
  %2911 = vmatpush1.msra.mxu0 0.0
  %2912 = vmatprep.subr.mxu0 0.0
  %2913 = vmatpush1.msra.mxu0 0.0
  %2914 = vmatprep.subr.mxu0 0.0
  %2915 = vmatpush1.msra.mxu0 0.0
  %2916 = vmatprep.subr.mxu0 0.0
  %2917 = vmatpush1.msra.mxu0 0.0
  %2918 = vmatprep.subr.mxu0 0.0
  %2919 = vmatpush1.msra.mxu0 0.0
  %2920 = vmatprep.subr.mxu0 0.0
  %2921 = vmatpush1.msra.mxu0 0.0
  %2922 = vmatprep.subr.mxu0 0.0
  %2923 = vmatpush1.msra.mxu0 0.0
  %2924 = vmatprep.subr.mxu0 0.0
  %2925 = vmatpush1.msra.mxu0 0.0
  %2926 = vmatprep.subr.mxu0 0.0
  %2927 = vmatpush1.msra.mxu0 0.0
  %2928 = vmatprep.subr.mxu0 0.0
  %2929 = vmatpush1.msra.mxu0 0.0
  %2930 = vmatprep.subr.mxu0 0.0
  %2931 = vmatpush1.msra.mxu0 0.0
  %2932 = vmatprep.subr.mxu0 0.0
  %2933 = vmatpush1.msra.mxu0 0.0
  %2934 = vmatprep.subr.mxu0 0.0
  %2935 = vmatpush1.msra.mxu0 0.0
  %2936 = vmatprep.subr.mxu0 0.0
  %2937 = vmatpush1.msra.mxu0 0.0
  %2938 = vmatprep.mubr.f32.mxu0 0.0
  %2939 = vmatmul.mubr.f32.gmra.mrb[0].mxu0 %v2801
  %v2940 = vpop.f32.mrb[0].mxu0
  %v2941 = vadd.f32 0.0, %v2940
  %v2942 = vpop.f32.mrb[0].mxu0
  %v2943 = vadd.f32 0.0, %v2942
  %2944 = vdwg.mxu0
  %2945 = vmatprep.subr.mxu0 %v2792
  %2946 = vmatpush1.msra.mxu0 %v2793
  %2947 = vmatprep.subr.mxu0 0.0
  %2948 = vmatpush1.msra.mxu0 0.0
  %2949 = vmatprep.subr.mxu0 0.0
  %2950 = vmatpush1.msra.mxu0 0.0
  %2951 = vmatprep.subr.mxu0 0.0
  %2952 = vmatpush1.msra.mxu0 0.0
  %2953 = vmatprep.subr.mxu0 0.0
  %2954 = vmatpush1.msra.mxu0 0.0
  %2955 = vmatprep.subr.mxu0 0.0
  %2956 = vmatpush1.msra.mxu0 0.0
  %2957 = vmatprep.subr.mxu0 0.0
  %2958 = vmatpush1.msra.mxu0 0.0
  %2959 = vmatprep.subr.mxu0 0.0
  %2960 = vmatpush1.msra.mxu0 0.0
  %2961 = vmatprep.subr.mxu0 0.0
  %2962 = vmatpush1.msra.mxu0 0.0
  %2963 = vmatprep.subr.mxu0 0.0
  %2964 = vmatpush1.msra.mxu0 0.0
  %2965 = vmatprep.subr.mxu0 0.0
  %2966 = vmatpush1.msra.mxu0 0.0
  %2967 = vmatprep.subr.mxu0 0.0
  %2968 = vmatpush1.msra.mxu0 0.0
  %2969 = vmatprep.subr.mxu0 0.0
  %2970 = vmatpush1.msra.mxu0 0.0
  %2971 = vmatprep.subr.mxu0 0.0
  %2972 = vmatpush1.msra.mxu0 0.0
  %2973 = vmatprep.subr.mxu0 0.0
  %2974 = vmatpush1.msra.mxu0 0.0
  %2975 = vmatprep.subr.mxu0 0.0
  %2976 = vmatpush1.msra.mxu0 0.0
  %2977 = vmatprep.subr.mxu0 0.0
  %2978 = vmatpush1.msra.mxu0 0.0
  %2979 = vmatprep.subr.mxu0 0.0
  %2980 = vmatpush1.msra.mxu0 0.0
  %2981 = vmatprep.subr.mxu0 0.0
  %2982 = vmatpush1.msra.mxu0 0.0
  %2983 = vmatprep.subr.mxu0 0.0
  %2984 = vmatpush1.msra.mxu0 0.0
  %2985 = vmatprep.subr.mxu0 0.0
  %2986 = vmatpush1.msra.mxu0 0.0
  %2987 = vmatprep.subr.mxu0 0.0
  %2988 = vmatpush1.msra.mxu0 0.0
  %2989 = vmatprep.subr.mxu0 0.0
  %2990 = vmatpush1.msra.mxu0 0.0
  %2991 = vmatprep.subr.mxu0 0.0
  %2992 = vmatpush1.msra.mxu0 0.0
  %2993 = vmatprep.subr.mxu0 0.0
  %2994 = vmatpush1.msra.mxu0 0.0
  %2995 = vmatprep.subr.mxu0 0.0
  %2996 = vmatpush1.msra.mxu0 0.0
  %2997 = vmatprep.subr.mxu0 0.0
  %2998 = vmatpush1.msra.mxu0 0.0
  %2999 = vmatprep.subr.mxu0 0.0
  %3000 = vmatpush1.msra.mxu0 0.0
  %3001 = vmatprep.subr.mxu0 0.0
  %3002 = vmatpush1.msra.mxu0 0.0
  %3003 = vmatprep.subr.mxu0 0.0
  %3004 = vmatpush1.msra.mxu0 0.0
  %3005 = vmatprep.subr.mxu0 0.0
  %3006 = vmatpush1.msra.mxu0 0.0
  %3007 = vmatprep.subr.mxu0 0.0
  %3008 = vmatpush1.msra.mxu0 0.0
  %3009 = vmatprep.mubr.f32.mxu0 0.0
  %3010 = vmatmul.mubr.f32.gmra.mrb[0].mxu0 %v2801
  %v3011 = vpop.f32.mrb[0].mxu0
  %v3012 = vadd.f32 0.0, %v3011
  %v3013 = vpop.f32.mrb[0].mxu0
  %v3014 = vadd.f32 0.0, %v3013
  %3015 = vdwg.mxu0
  %v3016 = vadd.f32 %v2633, %v2870
  %v3017 = vadd.f32 %v2635, %v2872
  %v3018 = vadd.f32 %v2704, %v2941
  %v3019 = vadd.f32 %v2706, %v2943
  %v3020 = vadd.f32 %v2775, %v3012
  %v3021 = vadd.f32 %v2777, %v3014
  %3022 = vrot.lane.b32.xlu0 %v2300, 1
  %v3023 = vpop.permute.xlu0 %3022
  %3024 = vrot.lane.b32.xlu0 %v2301, 1
  %v3025 = vpop.permute.xlu0 %3024
  %3026 = vrot.lane.b32.xlu0 %v2302, 1
  %v3027 = vpop.permute.xlu0 %3026
  %3028 = vrot.lane.b32.xlu0 %v2303, 1
  %v3029 = vpop.permute.xlu0 %3028
  %3030 = vrot.lane.b32.xlu0 %v2304, 1
  %v3031 = vpop.permute.xlu0 %3030
  %3032 = vrot.lane.b32.xlu0 %v2305, 1
  %v3033 = vpop.permute.xlu0 %3032
  %vm3034 = vcmp.lt.s32.totalorder %v50, 1
  %v3035 = vsel %vm3034, %v3031, %v3033
  %v3036 = vsel %vm3034, %v3029, %v3031
  %v3037 = vsel %vm3034, %v3027, %v3029
  %v3038 = vsel %vm3034, %v3025, %v3027
  %v3039 = vsel %vm3034, %v3023, %v3025
  %v3040 = vsel %vm3034, %v3033, %v3023
  %s3041 = scalar_lea.vmem %s4, 24
  %v3042 = vld [vmem:[%s3041] sm:$0xff]
  %v3044 = vsel %vm60, %v3042, 0
  %3046 = vmatprep.subr.mxu0 %v3039
  %3047 = vmatpush1.msra.mxu0 %v3040
  %3048 = vmatprep.subr.mxu0 0.0
  %3049 = vmatpush1.msra.mxu0 0.0
  %3050 = vmatprep.subr.mxu0 0.0
  %3051 = vmatpush1.msra.mxu0 0.0
  %3052 = vmatprep.subr.mxu0 0.0
  %3053 = vmatpush1.msra.mxu0 0.0
  %3054 = vmatprep.subr.mxu0 0.0
  %3055 = vmatpush1.msra.mxu0 0.0
  %3056 = vmatprep.subr.mxu0 0.0
  %3057 = vmatpush1.msra.mxu0 0.0
  %3058 = vmatprep.subr.mxu0 0.0
  %3059 = vmatpush1.msra.mxu0 0.0
  %3060 = vmatprep.subr.mxu0 0.0
  %3061 = vmatpush1.msra.mxu0 0.0
  %3062 = vmatprep.subr.mxu0 0.0
  %3063 = vmatpush1.msra.mxu0 0.0
  %3064 = vmatprep.subr.mxu0 0.0
  %3065 = vmatpush1.msra.mxu0 0.0
  %3066 = vmatprep.subr.mxu0 0.0
  %3067 = vmatpush1.msra.mxu0 0.0
  %3068 = vmatprep.subr.mxu0 0.0
  %3069 = vmatpush1.msra.mxu0 0.0
  %3070 = vmatprep.subr.mxu0 0.0
  %3071 = vmatpush1.msra.mxu0 0.0
  %3072 = vmatprep.subr.mxu0 0.0
  %3073 = vmatpush1.msra.mxu0 0.0
  %3074 = vmatprep.subr.mxu0 0.0
  %3075 = vmatpush1.msra.mxu0 0.0
  %3076 = vmatprep.subr.mxu0 0.0
  %3077 = vmatpush1.msra.mxu0 0.0
  %3078 = vmatprep.subr.mxu0 0.0
  %3079 = vmatpush1.msra.mxu0 0.0
  %3080 = vmatprep.subr.mxu0 0.0
  %3081 = vmatpush1.msra.mxu0 0.0
  %3082 = vmatprep.subr.mxu0 0.0
  %3083 = vmatpush1.msra.mxu0 0.0
  %3084 = vmatprep.subr.mxu0 0.0
  %3085 = vmatpush1.msra.mxu0 0.0
  %3086 = vmatprep.subr.mxu0 0.0
  %3087 = vmatpush1.msra.mxu0 0.0
  %3088 = vmatprep.subr.mxu0 0.0
  %3089 = vmatpush1.msra.mxu0 0.0
  %3090 = vmatprep.subr.mxu0 0.0
  %3091 = vmatpush1.msra.mxu0 0.0
  %3092 = vmatprep.subr.mxu0 0.0
  %3093 = vmatpush1.msra.mxu0 0.0
  %3094 = vmatprep.subr.mxu0 0.0
  %3095 = vmatpush1.msra.mxu0 0.0
  %3096 = vmatprep.subr.mxu0 0.0
  %3097 = vmatpush1.msra.mxu0 0.0
  %3098 = vmatprep.subr.mxu0 0.0
  %3099 = vmatpush1.msra.mxu0 0.0
  %3100 = vmatprep.subr.mxu0 0.0
  %3101 = vmatpush1.msra.mxu0 0.0
  %3102 = vmatprep.subr.mxu0 0.0
  %3103 = vmatpush1.msra.mxu0 0.0
  %3104 = vmatprep.subr.mxu0 0.0
  %3105 = vmatpush1.msra.mxu0 0.0
  %3106 = vmatprep.subr.mxu0 0.0
  %3107 = vmatpush1.msra.mxu0 0.0
  %3108 = vmatprep.subr.mxu0 0.0
  %3109 = vmatpush1.msra.mxu0 0.0
  %3110 = vmatprep.mubr.f32.mxu0 0.0
  %3111 = vmatmul.mubr.f32.gmra.mrb[0].mxu0 %v3044
  %v3112 = vpop.f32.mrb[0].mxu0
  %v3113 = vadd.f32 0.0, %v3112
  %v3114 = vpop.f32.mrb[0].mxu0
  %v3115 = vadd.f32 0.0, %v3114
  %3116 = vdwg.mxu0
  %3117 = vmatprep.subr.mxu0 %v3037
  %3118 = vmatpush1.msra.mxu0 %v3038
  %3119 = vmatprep.subr.mxu0 0.0
  %3120 = vmatpush1.msra.mxu0 0.0
  %3121 = vmatprep.subr.mxu0 0.0
  %3122 = vmatpush1.msra.mxu0 0.0
  %3123 = vmatprep.subr.mxu0 0.0
  %3124 = vmatpush1.msra.mxu0 0.0
  %3125 = vmatprep.subr.mxu0 0.0
  %3126 = vmatpush1.msra.mxu0 0.0
  %3127 = vmatprep.subr.mxu0 0.0
  %3128 = vmatpush1.msra.mxu0 0.0
  %3129 = vmatprep.subr.mxu0 0.0
  %3130 = vmatpush1.msra.mxu0 0.0
  %3131 = vmatprep.subr.mxu0 0.0
  %3132 = vmatpush1.msra.mxu0 0.0
  %3133 = vmatprep.subr.mxu0 0.0
  %3134 = vmatpush1.msra.mxu0 0.0
  %3135 = vmatprep.subr.mxu0 0.0
  %3136 = vmatpush1.msra.mxu0 0.0
  %3137 = vmatprep.subr.mxu0 0.0
  %3138 = vmatpush1.msra.mxu0 0.0
  %3139 = vmatprep.subr.mxu0 0.0
  %3140 = vmatpush1.msra.mxu0 0.0
  %3141 = vmatprep.subr.mxu0 0.0
  %3142 = vmatpush1.msra.mxu0 0.0
  %3143 = vmatprep.subr.mxu0 0.0
  %3144 = vmatpush1.msra.mxu0 0.0
  %3145 = vmatprep.subr.mxu0 0.0
  %3146 = vmatpush1.msra.mxu0 0.0
  %3147 = vmatprep.subr.mxu0 0.0
  %3148 = vmatpush1.msra.mxu0 0.0
  %3149 = vmatprep.subr.mxu0 0.0
  %3150 = vmatpush1.msra.mxu0 0.0
  %3151 = vmatprep.subr.mxu0 0.0
  %3152 = vmatpush1.msra.mxu0 0.0
  %3153 = vmatprep.subr.mxu0 0.0
  %3154 = vmatpush1.msra.mxu0 0.0
  %3155 = vmatprep.subr.mxu0 0.0
  %3156 = vmatpush1.msra.mxu0 0.0
  %3157 = vmatprep.subr.mxu0 0.0
  %3158 = vmatpush1.msra.mxu0 0.0
  %3159 = vmatprep.subr.mxu0 0.0
  %3160 = vmatpush1.msra.mxu0 0.0
  %3161 = vmatprep.subr.mxu0 0.0
  %3162 = vmatpush1.msra.mxu0 0.0
  %3163 = vmatprep.subr.mxu0 0.0
  %3164 = vmatpush1.msra.mxu0 0.0
  %3165 = vmatprep.subr.mxu0 0.0
  %3166 = vmatpush1.msra.mxu0 0.0
  %3167 = vmatprep.subr.mxu0 0.0
  %3168 = vmatpush1.msra.mxu0 0.0
  %3169 = vmatprep.subr.mxu0 0.0
  %3170 = vmatpush1.msra.mxu0 0.0
  %3171 = vmatprep.subr.mxu0 0.0
  %3172 = vmatpush1.msra.mxu0 0.0
  %3173 = vmatprep.subr.mxu0 0.0
  %3174 = vmatpush1.msra.mxu0 0.0
  %3175 = vmatprep.subr.mxu0 0.0
  %3176 = vmatpush1.msra.mxu0 0.0
  %3177 = vmatprep.subr.mxu0 0.0
  %3178 = vmatpush1.msra.mxu0 0.0
  %3179 = vmatprep.subr.mxu0 0.0
  %3180 = vmatpush1.msra.mxu0 0.0
  %3181 = vmatprep.mubr.f32.mxu0 0.0
  %3182 = vmatmul.mubr.f32.gmra.mrb[0].mxu0 %v3044
  %v3183 = vpop.f32.mrb[0].mxu0
  %v3184 = vadd.f32 0.0, %v3183
  %v3185 = vpop.f32.mrb[0].mxu0
  %v3186 = vadd.f32 0.0, %v3185
  %3187 = vdwg.mxu0
  %3188 = vmatprep.subr.mxu0 %v3035
  %3189 = vmatpush1.msra.mxu0 %v3036
  %3190 = vmatprep.subr.mxu0 0.0
  %3191 = vmatpush1.msra.mxu0 0.0
  %3192 = vmatprep.subr.mxu0 0.0
  %3193 = vmatpush1.msra.mxu0 0.0
  %3194 = vmatprep.subr.mxu0 0.0
  %3195 = vmatpush1.msra.mxu0 0.0
  %3196 = vmatprep.subr.mxu0 0.0
  %3197 = vmatpush1.msra.mxu0 0.0
  %3198 = vmatprep.subr.mxu0 0.0
  %3199 = vmatpush1.msra.mxu0 0.0
  %3200 = vmatprep.subr.mxu0 0.0
  %3201 = vmatpush1.msra.mxu0 0.0
  %3202 = vmatprep.subr.mxu0 0.0
  %3203 = vmatpush1.msra.mxu0 0.0
  %3204 = vmatprep.subr.mxu0 0.0
  %3205 = vmatpush1.msra.mxu0 0.0
  %3206 = vmatprep.subr.mxu0 0.0
  %3207 = vmatpush1.msra.mxu0 0.0
  %3208 = vmatprep.subr.mxu0 0.0
  %3209 = vmatpush1.msra.mxu0 0.0
  %3210 = vmatprep.subr.mxu0 0.0
  %3211 = vmatpush1.msra.mxu0 0.0
  %3212 = vmatprep.subr.mxu0 0.0
  %3213 = vmatpush1.msra.mxu0 0.0
  %3214 = vmatprep.subr.mxu0 0.0
  %3215 = vmatpush1.msra.mxu0 0.0
  %3216 = vmatprep.subr.mxu0 0.0
  %3217 = vmatpush1.msra.mxu0 0.0
  %3218 = vmatprep.subr.mxu0 0.0
  %3219 = vmatpush1.msra.mxu0 0.0
  %3220 = vmatprep.subr.mxu0 0.0
  %3221 = vmatpush1.msra.mxu0 0.0
  %3222 = vmatprep.subr.mxu0 0.0
  %3223 = vmatpush1.msra.mxu0 0.0
  %3224 = vmatprep.subr.mxu0 0.0
  %3225 = vmatpush1.msra.mxu0 0.0
  %3226 = vmatprep.subr.mxu0 0.0
  %3227 = vmatpush1.msra.mxu0 0.0
  %3228 = vmatprep.subr.mxu0 0.0
  %3229 = vmatpush1.msra.mxu0 0.0
  %3230 = vmatprep.subr.mxu0 0.0
  %3231 = vmatpush1.msra.mxu0 0.0
  %3232 = vmatprep.subr.mxu0 0.0
  %3233 = vmatpush1.msra.mxu0 0.0
  %3234 = vmatprep.subr.mxu0 0.0
  %3235 = vmatpush1.msra.mxu0 0.0
  %3236 = vmatprep.subr.mxu0 0.0
  %3237 = vmatpush1.msra.mxu0 0.0
  %3238 = vmatprep.subr.mxu0 0.0
  %3239 = vmatpush1.msra.mxu0 0.0
  %3240 = vmatprep.subr.mxu0 0.0
  %3241 = vmatpush1.msra.mxu0 0.0
  %3242 = vmatprep.subr.mxu0 0.0
  %3243 = vmatpush1.msra.mxu0 0.0
  %3244 = vmatprep.subr.mxu0 0.0
  %3245 = vmatpush1.msra.mxu0 0.0
  %3246 = vmatprep.subr.mxu0 0.0
  %3247 = vmatpush1.msra.mxu0 0.0
  %3248 = vmatprep.subr.mxu0 0.0
  %3249 = vmatpush1.msra.mxu0 0.0
  %3250 = vmatprep.subr.mxu0 0.0
  %3251 = vmatpush1.msra.mxu0 0.0
  %3252 = vmatprep.mubr.f32.mxu0 0.0
  %3253 = vmatmul.mubr.f32.gmra.mrb[0].mxu0 %v3044
  %v3254 = vpop.f32.mrb[0].mxu0
  %v3255 = vadd.f32 0.0, %v3254
  %v3256 = vpop.f32.mrb[0].mxu0
  %v3257 = vadd.f32 0.0, %v3256
  %3258 = vdwg.mxu0
  %v3259 = vadd.f32 %v3016, %v3113
  %v3260 = vadd.f32 %v3017, %v3115
  %v3261 = vadd.f32 %v3018, %v3184
  %v3262 = vadd.f32 %v3019, %v3186
  %v3263 = vadd.f32 %v3020, %v3255
  %v3264 = vadd.f32 %v3021, %v3257
  %s3265 = scalar_lea.vmem %s4, 32
  %v3266 = vld [vmem:[%s3265] sm:$0xff]
  %v3268 = vsel %vm60, %v3266, 0
  %3270 = vmatprep.subr.mxu0 %v2301
  %3271 = vmatpush1.msra.mxu0 %v2300
  %3272 = vmatprep.subr.mxu0 0.0
  %3273 = vmatpush1.msra.mxu0 0.0
  %3274 = vmatprep.subr.mxu0 0.0
  %3275 = vmatpush1.msra.mxu0 0.0
  %3276 = vmatprep.subr.mxu0 0.0
  %3277 = vmatpush1.msra.mxu0 0.0
  %3278 = vmatprep.subr.mxu0 0.0
  %3279 = vmatpush1.msra.mxu0 0.0
  %3280 = vmatprep.subr.mxu0 0.0
  %3281 = vmatpush1.msra.mxu0 0.0
  %3282 = vmatprep.subr.mxu0 0.0
  %3283 = vmatpush1.msra.mxu0 0.0
  %3284 = vmatprep.subr.mxu0 0.0
  %3285 = vmatpush1.msra.mxu0 0.0
  %3286 = vmatprep.subr.mxu0 0.0
  %3287 = vmatpush1.msra.mxu0 0.0
  %3288 = vmatprep.subr.mxu0 0.0
  %3289 = vmatpush1.msra.mxu0 0.0
  %3290 = vmatprep.subr.mxu0 0.0
  %3291 = vmatpush1.msra.mxu0 0.0
  %3292 = vmatprep.subr.mxu0 0.0
  %3293 = vmatpush1.msra.mxu0 0.0
  %3294 = vmatprep.subr.mxu0 0.0
  %3295 = vmatpush1.msra.mxu0 0.0
  %3296 = vmatprep.subr.mxu0 0.0
  %3297 = vmatpush1.msra.mxu0 0.0
  %3298 = vmatprep.subr.mxu0 0.0
  %3299 = vmatpush1.msra.mxu0 0.0
  %3300 = vmatprep.subr.mxu0 0.0
  %3301 = vmatpush1.msra.mxu0 0.0
  %3302 = vmatprep.subr.mxu0 0.0
  %3303 = vmatpush1.msra.mxu0 0.0
  %3304 = vmatprep.subr.mxu0 0.0
  %3305 = vmatpush1.msra.mxu0 0.0
  %3306 = vmatprep.subr.mxu0 0.0
  %3307 = vmatpush1.msra.mxu0 0.0
  %3308 = vmatprep.subr.mxu0 0.0
  %3309 = vmatpush1.msra.mxu0 0.0
  %3310 = vmatprep.subr.mxu0 0.0
  %3311 = vmatpush1.msra.mxu0 0.0
  %3312 = vmatprep.subr.mxu0 0.0
  %3313 = vmatpush1.msra.mxu0 0.0
  %3314 = vmatprep.subr.mxu0 0.0
  %3315 = vmatpush1.msra.mxu0 0.0
  %3316 = vmatprep.subr.mxu0 0.0
  %3317 = vmatpush1.msra.mxu0 0.0
  %3318 = vmatprep.subr.mxu0 0.0
  %3319 = vmatpush1.msra.mxu0 0.0
  %3320 = vmatprep.subr.mxu0 0.0
  %3321 = vmatpush1.msra.mxu0 0.0
  %3322 = vmatprep.subr.mxu0 0.0
  %3323 = vmatpush1.msra.mxu0 0.0
  %3324 = vmatprep.subr.mxu0 0.0
  %3325 = vmatpush1.msra.mxu0 0.0
  %3326 = vmatprep.subr.mxu0 0.0
  %3327 = vmatpush1.msra.mxu0 0.0
  %3328 = vmatprep.subr.mxu0 0.0
  %3329 = vmatpush1.msra.mxu0 0.0
  %3330 = vmatprep.subr.mxu0 0.0
  %3331 = vmatpush1.msra.mxu0 0.0
  %3332 = vmatprep.subr.mxu0 0.0
  %3333 = vmatpush1.msra.mxu0 0.0
  %3334 = vmatprep.mubr.f32.mxu0 0.0
  %3335 = vmatmul.mubr.f32.gmra.mrb[0].mxu0 %v3268
  %v3336 = vpop.f32.mrb[0].mxu0
  %v3337 = vadd.f32 0.0, %v3336
  %v3338 = vpop.f32.mrb[0].mxu0
  %v3339 = vadd.f32 0.0, %v3338
  %3340 = vdwg.mxu0
  %3341 = vmatprep.subr.mxu0 %v2303
  %3342 = vmatpush1.msra.mxu0 %v2302
  %3343 = vmatprep.subr.mxu0 0.0
  %3344 = vmatpush1.msra.mxu0 0.0
  %3345 = vmatprep.subr.mxu0 0.0
  %3346 = vmatpush1.msra.mxu0 0.0
  %3347 = vmatprep.subr.mxu0 0.0
  %3348 = vmatpush1.msra.mxu0 0.0
  %3349 = vmatprep.subr.mxu0 0.0
  %3350 = vmatpush1.msra.mxu0 0.0
  %3351 = vmatprep.subr.mxu0 0.0
  %3352 = vmatpush1.msra.mxu0 0.0
  %3353 = vmatprep.subr.mxu0 0.0
  %3354 = vmatpush1.msra.mxu0 0.0
  %3355 = vmatprep.subr.mxu0 0.0
  %3356 = vmatpush1.msra.mxu0 0.0
  %3357 = vmatprep.subr.mxu0 0.0
  %3358 = vmatpush1.msra.mxu0 0.0
  %3359 = vmatprep.subr.mxu0 0.0
  %3360 = vmatpush1.msra.mxu0 0.0
  %3361 = vmatprep.subr.mxu0 0.0
  %3362 = vmatpush1.msra.mxu0 0.0
  %3363 = vmatprep.subr.mxu0 0.0
  %3364 = vmatpush1.msra.mxu0 0.0
  %3365 = vmatprep.subr.mxu0 0.0
  %3366 = vmatpush1.msra.mxu0 0.0
  %3367 = vmatprep.subr.mxu0 0.0
  %3368 = vmatpush1.msra.mxu0 0.0
  %3369 = vmatprep.subr.mxu0 0.0
  %3370 = vmatpush1.msra.mxu0 0.0
  %3371 = vmatprep.subr.mxu0 0.0
  %3372 = vmatpush1.msra.mxu0 0.0
  %3373 = vmatprep.subr.mxu0 0.0
  %3374 = vmatpush1.msra.mxu0 0.0
  %3375 = vmatprep.subr.mxu0 0.0
  %3376 = vmatpush1.msra.mxu0 0.0
  %3377 = vmatprep.subr.mxu0 0.0
  %3378 = vmatpush1.msra.mxu0 0.0
  %3379 = vmatprep.subr.mxu0 0.0
  %3380 = vmatpush1.msra.mxu0 0.0
  %3381 = vmatprep.subr.mxu0 0.0
  %3382 = vmatpush1.msra.mxu0 0.0
  %3383 = vmatprep.subr.mxu0 0.0
  %3384 = vmatpush1.msra.mxu0 0.0
  %3385 = vmatprep.subr.mxu0 0.0
  %3386 = vmatpush1.msra.mxu0 0.0
  %3387 = vmatprep.subr.mxu0 0.0
  %3388 = vmatpush1.msra.mxu0 0.0
  %3389 = vmatprep.subr.mxu0 0.0
  %3390 = vmatpush1.msra.mxu0 0.0
  %3391 = vmatprep.subr.mxu0 0.0
  %3392 = vmatpush1.msra.mxu0 0.0
  %3393 = vmatprep.subr.mxu0 0.0
  %3394 = vmatpush1.msra.mxu0 0.0
  %3395 = vmatprep.subr.mxu0 0.0
  %3396 = vmatpush1.msra.mxu0 0.0
  %3397 = vmatprep.subr.mxu0 0.0
  %3398 = vmatpush1.msra.mxu0 0.0
  %3399 = vmatprep.subr.mxu0 0.0
  %3400 = vmatpush1.msra.mxu0 0.0
  %3401 = vmatprep.subr.mxu0 0.0
  %3402 = vmatpush1.msra.mxu0 0.0
  %3403 = vmatprep.subr.mxu0 0.0
  %3404 = vmatpush1.msra.mxu0 0.0
  %3405 = vmatprep.mubr.f32.mxu0 0.0
  %3406 = vmatmul.mubr.f32.gmra.mrb[0].mxu0 %v3268
  %v3407 = vpop.f32.mrb[0].mxu0
  %v3408 = vadd.f32 0.0, %v3407
  %v3409 = vpop.f32.mrb[0].mxu0
  %v3410 = vadd.f32 0.0, %v3409
  %3411 = vdwg.mxu0
  %3412 = vmatprep.subr.mxu0 %v2305
  %3413 = vmatpush1.msra.mxu0 %v2304
  %3414 = vmatprep.subr.mxu0 0.0
  %3415 = vmatpush1.msra.mxu0 0.0
  %3416 = vmatprep.subr.mxu0 0.0
  %3417 = vmatpush1.msra.mxu0 0.0
  %3418 = vmatprep.subr.mxu0 0.0
  %3419 = vmatpush1.msra.mxu0 0.0
  %3420 = vmatprep.subr.mxu0 0.0
  %3421 = vmatpush1.msra.mxu0 0.0
  %3422 = vmatprep.subr.mxu0 0.0
  %3423 = vmatpush1.msra.mxu0 0.0
  %3424 = vmatprep.subr.mxu0 0.0
  %3425 = vmatpush1.msra.mxu0 0.0
  %3426 = vmatprep.subr.mxu0 0.0
  %3427 = vmatpush1.msra.mxu0 0.0
  %3428 = vmatprep.subr.mxu0 0.0
  %3429 = vmatpush1.msra.mxu0 0.0
  %3430 = vmatprep.subr.mxu0 0.0
  %3431 = vmatpush1.msra.mxu0 0.0
  %3432 = vmatprep.subr.mxu0 0.0
  %3433 = vmatpush1.msra.mxu0 0.0
  %3434 = vmatprep.subr.mxu0 0.0
  %3435 = vmatpush1.msra.mxu0 0.0
  %3436 = vmatprep.subr.mxu0 0.0
  %3437 = vmatpush1.msra.mxu0 0.0
  %3438 = vmatprep.subr.mxu0 0.0
  %3439 = vmatpush1.msra.mxu0 0.0
  %3440 = vmatprep.subr.mxu0 0.0
  %3441 = vmatpush1.msra.mxu0 0.0
  %3442 = vmatprep.subr.mxu0 0.0
  %3443 = vmatpush1.msra.mxu0 0.0
  %3444 = vmatprep.subr.mxu0 0.0
  %3445 = vmatpush1.msra.mxu0 0.0
  %3446 = vmatprep.subr.mxu0 0.0
  %3447 = vmatpush1.msra.mxu0 0.0
  %3448 = vmatprep.subr.mxu0 0.0
  %3449 = vmatpush1.msra.mxu0 0.0
  %3450 = vmatprep.subr.mxu0 0.0
  %3451 = vmatpush1.msra.mxu0 0.0
  %3452 = vmatprep.subr.mxu0 0.0
  %3453 = vmatpush1.msra.mxu0 0.0
  %3454 = vmatprep.subr.mxu0 0.0
  %3455 = vmatpush1.msra.mxu0 0.0
  %3456 = vmatprep.subr.mxu0 0.0
  %3457 = vmatpush1.msra.mxu0 0.0
  %3458 = vmatprep.subr.mxu0 0.0
  %3459 = vmatpush1.msra.mxu0 0.0
  %3460 = vmatprep.subr.mxu0 0.0
  %3461 = vmatpush1.msra.mxu0 0.0
  %3462 = vmatprep.subr.mxu0 0.0
  %3463 = vmatpush1.msra.mxu0 0.0
  %3464 = vmatprep.subr.mxu0 0.0
  %3465 = vmatpush1.msra.mxu0 0.0
  %3466 = vmatprep.subr.mxu0 0.0
  %3467 = vmatpush1.msra.mxu0 0.0
  %3468 = vmatprep.subr.mxu0 0.0
  %3469 = vmatpush1.msra.mxu0 0.0
  %3470 = vmatprep.subr.mxu0 0.0
  %3471 = vmatpush1.msra.mxu0 0.0
  %3472 = vmatprep.subr.mxu0 0.0
  %3473 = vmatpush1.msra.mxu0 0.0
  %3474 = vmatprep.subr.mxu0 0.0
  %3475 = vmatpush1.msra.mxu0 0.0
  %3476 = vmatprep.mubr.f32.mxu0 0.0
  %3477 = vmatmul.mubr.f32.gmra.mrb[0].mxu0 %v3268
  %v3478 = vpop.f32.mrb[0].mxu0
  %v3479 = vadd.f32 0.0, %v3478
  %v3480 = vpop.f32.mrb[0].mxu0
  %v3481 = vadd.f32 0.0, %v3480
  %3482 = vdwg.mxu0
  %v3483 = vadd.f32 %v3259, %v3337
  %v3484 = vadd.f32 %v3260, %v3339
  %v3485 = vadd.f32 %v3261, %v3408
  %v3486 = vadd.f32 %v3262, %v3410
  %v3487 = vadd.f32 %v3263, %v3479
  %v3488 = vadd.f32 %v3264, %v3481
  %3489 = vrot.lane.b32.xlu0 %v2300, 127
  %v3490 = vpop.permute.xlu0 %3489
  %3491 = vrot.lane.b32.xlu0 %v2301, 127
  %v3492 = vpop.permute.xlu0 %3491
  %3493 = vrot.lane.b32.xlu0 %v2302, 127
  %v3494 = vpop.permute.xlu0 %3493
  %3495 = vrot.lane.b32.xlu0 %v2303, 127
  %v3496 = vpop.permute.xlu0 %3495
  %3497 = vrot.lane.b32.xlu0 %v2304, 127
  %v3498 = vpop.permute.xlu0 %3497
  %3499 = vrot.lane.b32.xlu0 %v2305, 127
  %v3500 = vpop.permute.xlu0 %3499
  %v3501 = vsel %vm51, %v3498, %v3500
  %v3502 = vsel %vm51, %v3496, %v3498
  %v3503 = vsel %vm51, %v3494, %v3496
  %v3504 = vsel %vm51, %v3492, %v3494
  %v3505 = vsel %vm51, %v3490, %v3492
  %v3506 = vsel %vm51, %v3500, %v3490
  %s3507 = scalar_lea.vmem %s4, 40
  %v3508 = vld [vmem:[%s3507] sm:$0xff]
  %v3510 = vsel %vm60, %v3508, 0
  %3512 = vmatprep.subr.mxu0 %v3504
  %3513 = vmatpush1.msra.mxu0 %v3505
  %3514 = vmatprep.subr.mxu0 0.0
  %3515 = vmatpush1.msra.mxu0 0.0
  %3516 = vmatprep.subr.mxu0 0.0
  %3517 = vmatpush1.msra.mxu0 0.0
  %3518 = vmatprep.subr.mxu0 0.0
  %3519 = vmatpush1.msra.mxu0 0.0
  %3520 = vmatprep.subr.mxu0 0.0
  %3521 = vmatpush1.msra.mxu0 0.0
  %3522 = vmatprep.subr.mxu0 0.0
  %3523 = vmatpush1.msra.mxu0 0.0
  %3524 = vmatprep.subr.mxu0 0.0
  %3525 = vmatpush1.msra.mxu0 0.0
  %3526 = vmatprep.subr.mxu0 0.0
  %3527 = vmatpush1.msra.mxu0 0.0
  %3528 = vmatprep.subr.mxu0 0.0
  %3529 = vmatpush1.msra.mxu0 0.0
  %3530 = vmatprep.subr.mxu0 0.0
  %3531 = vmatpush1.msra.mxu0 0.0
  %3532 = vmatprep.subr.mxu0 0.0
  %3533 = vmatpush1.msra.mxu0 0.0
  %3534 = vmatprep.subr.mxu0 0.0
  %3535 = vmatpush1.msra.mxu0 0.0
  %3536 = vmatprep.subr.mxu0 0.0
  %3537 = vmatpush1.msra.mxu0 0.0
  %3538 = vmatprep.subr.mxu0 0.0
  %3539 = vmatpush1.msra.mxu0 0.0
  %3540 = vmatprep.subr.mxu0 0.0
  %3541 = vmatpush1.msra.mxu0 0.0
  %3542 = vmatprep.subr.mxu0 0.0
  %3543 = vmatpush1.msra.mxu0 0.0
  %3544 = vmatprep.subr.mxu0 0.0
  %3545 = vmatpush1.msra.mxu0 0.0
  %3546 = vmatprep.subr.mxu0 0.0
  %3547 = vmatpush1.msra.mxu0 0.0
  %3548 = vmatprep.subr.mxu0 0.0
  %3549 = vmatpush1.msra.mxu0 0.0
  %3550 = vmatprep.subr.mxu0 0.0
  %3551 = vmatpush1.msra.mxu0 0.0
  %3552 = vmatprep.subr.mxu0 0.0
  %3553 = vmatpush1.msra.mxu0 0.0
  %3554 = vmatprep.subr.mxu0 0.0
  %3555 = vmatpush1.msra.mxu0 0.0
  %3556 = vmatprep.subr.mxu0 0.0
  %3557 = vmatpush1.msra.mxu0 0.0
  %3558 = vmatprep.subr.mxu0 0.0
  %3559 = vmatpush1.msra.mxu0 0.0
  %3560 = vmatprep.subr.mxu0 0.0
  %3561 = vmatpush1.msra.mxu0 0.0
  %3562 = vmatprep.subr.mxu0 0.0
  %3563 = vmatpush1.msra.mxu0 0.0
  %3564 = vmatprep.subr.mxu0 0.0
  %3565 = vmatpush1.msra.mxu0 0.0
  %3566 = vmatprep.subr.mxu0 0.0
  %3567 = vmatpush1.msra.mxu0 0.0
  %3568 = vmatprep.subr.mxu0 0.0
  %3569 = vmatpush1.msra.mxu0 0.0
  %3570 = vmatprep.subr.mxu0 0.0
  %3571 = vmatpush1.msra.mxu0 0.0
  %3572 = vmatprep.subr.mxu0 0.0
  %3573 = vmatpush1.msra.mxu0 0.0
  %3574 = vmatprep.subr.mxu0 0.0
  %3575 = vmatpush1.msra.mxu0 0.0
  %3576 = vmatprep.mubr.f32.mxu0 0.0
  %3577 = vmatmul.mubr.f32.gmra.mrb[0].mxu0 %v3510
  %v3578 = vpop.f32.mrb[0].mxu0
  %v3579 = vadd.f32 0.0, %v3578
  %v3580 = vpop.f32.mrb[0].mxu0
  %v3581 = vadd.f32 0.0, %v3580
  %3582 = vdwg.mxu0
  %3583 = vmatprep.subr.mxu0 %v3502
  %3584 = vmatpush1.msra.mxu0 %v3503
  %3585 = vmatprep.subr.mxu0 0.0
  %3586 = vmatpush1.msra.mxu0 0.0
  %3587 = vmatprep.subr.mxu0 0.0
  %3588 = vmatpush1.msra.mxu0 0.0
  %3589 = vmatprep.subr.mxu0 0.0
  %3590 = vmatpush1.msra.mxu0 0.0
  %3591 = vmatprep.subr.mxu0 0.0
  %3592 = vmatpush1.msra.mxu0 0.0
  %3593 = vmatprep.subr.mxu0 0.0
  %3594 = vmatpush1.msra.mxu0 0.0
  %3595 = vmatprep.subr.mxu0 0.0
  %3596 = vmatpush1.msra.mxu0 0.0
  %3597 = vmatprep.subr.mxu0 0.0
  %3598 = vmatpush1.msra.mxu0 0.0
  %3599 = vmatprep.subr.mxu0 0.0
  %3600 = vmatpush1.msra.mxu0 0.0
  %3601 = vmatprep.subr.mxu0 0.0
  %3602 = vmatpush1.msra.mxu0 0.0
  %3603 = vmatprep.subr.mxu0 0.0
  %3604 = vmatpush1.msra.mxu0 0.0
  %3605 = vmatprep.subr.mxu0 0.0
  %3606 = vmatpush1.msra.mxu0 0.0
  %3607 = vmatprep.subr.mxu0 0.0
  %3608 = vmatpush1.msra.mxu0 0.0
  %3609 = vmatprep.subr.mxu0 0.0
  %3610 = vmatpush1.msra.mxu0 0.0
  %3611 = vmatprep.subr.mxu0 0.0
  %3612 = vmatpush1.msra.mxu0 0.0
  %3613 = vmatprep.subr.mxu0 0.0
  %3614 = vmatpush1.msra.mxu0 0.0
  %3615 = vmatprep.subr.mxu0 0.0
  %3616 = vmatpush1.msra.mxu0 0.0
  %3617 = vmatprep.subr.mxu0 0.0
  %3618 = vmatpush1.msra.mxu0 0.0
  %3619 = vmatprep.subr.mxu0 0.0
  %3620 = vmatpush1.msra.mxu0 0.0
  %3621 = vmatprep.subr.mxu0 0.0
  %3622 = vmatpush1.msra.mxu0 0.0
  %3623 = vmatprep.subr.mxu0 0.0
  %3624 = vmatpush1.msra.mxu0 0.0
  %3625 = vmatprep.subr.mxu0 0.0
  %3626 = vmatpush1.msra.mxu0 0.0
  %3627 = vmatprep.subr.mxu0 0.0
  %3628 = vmatpush1.msra.mxu0 0.0
  %3629 = vmatprep.subr.mxu0 0.0
  %3630 = vmatpush1.msra.mxu0 0.0
  %3631 = vmatprep.subr.mxu0 0.0
  %3632 = vmatpush1.msra.mxu0 0.0
  %3633 = vmatprep.subr.mxu0 0.0
  %3634 = vmatpush1.msra.mxu0 0.0
  %3635 = vmatprep.subr.mxu0 0.0
  %3636 = vmatpush1.msra.mxu0 0.0
  %3637 = vmatprep.subr.mxu0 0.0
  %3638 = vmatpush1.msra.mxu0 0.0
  %3639 = vmatprep.subr.mxu0 0.0
  %3640 = vmatpush1.msra.mxu0 0.0
  %3641 = vmatprep.subr.mxu0 0.0
  %3642 = vmatpush1.msra.mxu0 0.0
  %3643 = vmatprep.subr.mxu0 0.0
  %3644 = vmatpush1.msra.mxu0 0.0
  %3645 = vmatprep.subr.mxu0 0.0
  %3646 = vmatpush1.msra.mxu0 0.0
  %3647 = vmatprep.mubr.f32.mxu0 0.0
  %3648 = vmatmul.mubr.f32.gmra.mrb[0].mxu0 %v3510
  %v3649 = vpop.f32.mrb[0].mxu0
  %v3650 = vadd.f32 0.0, %v3649
  %v3651 = vpop.f32.mrb[0].mxu0
  %v3652 = vadd.f32 0.0, %v3651
  %3653 = vdwg.mxu0
  %3654 = vmatprep.subr.mxu0 %v3506
  %3655 = vmatpush1.msra.mxu0 %v3501
  %3656 = vmatprep.subr.mxu0 0.0
  %3657 = vmatpush1.msra.mxu0 0.0
  %3658 = vmatprep.subr.mxu0 0.0
  %3659 = vmatpush1.msra.mxu0 0.0
  %3660 = vmatprep.subr.mxu0 0.0
  %3661 = vmatpush1.msra.mxu0 0.0
  %3662 = vmatprep.subr.mxu0 0.0
  %3663 = vmatpush1.msra.mxu0 0.0
  %3664 = vmatprep.subr.mxu0 0.0
  %3665 = vmatpush1.msra.mxu0 0.0
  %3666 = vmatprep.subr.mxu0 0.0
  %3667 = vmatpush1.msra.mxu0 0.0
  %3668 = vmatprep.subr.mxu0 0.0
  %3669 = vmatpush1.msra.mxu0 0.0
  %3670 = vmatprep.subr.mxu0 0.0
  %3671 = vmatpush1.msra.mxu0 0.0
  %3672 = vmatprep.subr.mxu0 0.0
  %3673 = vmatpush1.msra.mxu0 0.0
  %3674 = vmatprep.subr.mxu0 0.0
  %3675 = vmatpush1.msra.mxu0 0.0
  %3676 = vmatprep.subr.mxu0 0.0
  %3677 = vmatpush1.msra.mxu0 0.0
  %3678 = vmatprep.subr.mxu0 0.0
  %3679 = vmatpush1.msra.mxu0 0.0
  %3680 = vmatprep.subr.mxu0 0.0
  %3681 = vmatpush1.msra.mxu0 0.0
  %3682 = vmatprep.subr.mxu0 0.0
  %3683 = vmatpush1.msra.mxu0 0.0
  %3684 = vmatprep.subr.mxu0 0.0
  %3685 = vmatpush1.msra.mxu0 0.0
  %3686 = vmatprep.subr.mxu0 0.0
  %3687 = vmatpush1.msra.mxu0 0.0
  %3688 = vmatprep.subr.mxu0 0.0
  %3689 = vmatpush1.msra.mxu0 0.0
  %3690 = vmatprep.subr.mxu0 0.0
  %3691 = vmatpush1.msra.mxu0 0.0
  %3692 = vmatprep.subr.mxu0 0.0
  %3693 = vmatpush1.msra.mxu0 0.0
  %3694 = vmatprep.subr.mxu0 0.0
  %3695 = vmatpush1.msra.mxu0 0.0
  %3696 = vmatprep.subr.mxu0 0.0
  %3697 = vmatpush1.msra.mxu0 0.0
  %3698 = vmatprep.subr.mxu0 0.0
  %3699 = vmatpush1.msra.mxu0 0.0
  %3700 = vmatprep.subr.mxu0 0.0
  %3701 = vmatpush1.msra.mxu0 0.0
  %3702 = vmatprep.subr.mxu0 0.0
  %3703 = vmatpush1.msra.mxu0 0.0
  %3704 = vmatprep.subr.mxu0 0.0
  %3705 = vmatpush1.msra.mxu0 0.0
  %3706 = vmatprep.subr.mxu0 0.0
  %3707 = vmatpush1.msra.mxu0 0.0
  %3708 = vmatprep.subr.mxu0 0.0
  %3709 = vmatpush1.msra.mxu0 0.0
  %3710 = vmatprep.subr.mxu0 0.0
  %3711 = vmatpush1.msra.mxu0 0.0
  %3712 = vmatprep.subr.mxu0 0.0
  %3713 = vmatpush1.msra.mxu0 0.0
  %3714 = vmatprep.subr.mxu0 0.0
  %3715 = vmatpush1.msra.mxu0 0.0
  %3716 = vmatprep.subr.mxu0 0.0
  %3717 = vmatpush1.msra.mxu0 0.0
  %3718 = vmatprep.mubr.f32.mxu0 0.0
  %3719 = vmatmul.mubr.f32.gmra.mrb[0].mxu0 %v3510
  %v3720 = vpop.f32.mrb[0].mxu0
  %v3721 = vadd.f32 0.0, %v3720
  %v3722 = vpop.f32.mrb[0].mxu0
  %v3723 = vadd.f32 0.0, %v3722
  %3724 = vdwg.mxu0
  %v3725 = vadd.f32 %v3483, %v3579
  %v3726 = vadd.f32 %v3484, %v3581
  %v3727 = vadd.f32 %v3485, %v3650
  %v3728 = vadd.f32 %v3486, %v3652
  %v3729 = vadd.f32 %v3487, %v3721
  %v3730 = vadd.f32 %v3488, %v3723
  %3731 = vrot.lane.b32.xlu0 %v2300, 111
  %v3732 = vpop.permute.xlu0 %3731
  %3733 = vrot.lane.b32.xlu0 %v2301, 111
  %v3734 = vpop.permute.xlu0 %3733
  %3735 = vrot.lane.b32.xlu0 %v2302, 111
  %v3736 = vpop.permute.xlu0 %3735
  %3737 = vrot.lane.b32.xlu0 %v2303, 111
  %v3738 = vpop.permute.xlu0 %3737
  %3739 = vrot.lane.b32.xlu0 %v2304, 111
  %v3740 = vpop.permute.xlu0 %3739
  %3741 = vrot.lane.b32.xlu0 %v2305, 111
  %v3742 = vpop.permute.xlu0 %3741
  %vm3743 = vcmp.lt.s32.totalorder %v50, 111
  %v3744 = vsel %vm3743, %v3740, %v3742
  %v3745 = vsel %vm3743, %v3738, %v3740
  %v3746 = vsel %vm3743, %v3736, %v3738
  %v3747 = vsel %vm3743, %v3734, %v3736
  %v3748 = vsel %vm3743, %v3732, %v3734
  %v3749 = vsel %vm3743, %v3742, %v3732
  %s3750 = scalar_lea.vmem %s4, 48
  %v3751 = vld [vmem:[%s3750] sm:$0xff]
  %v3753 = vsel %vm60, %v3751, 0
  %3755 = vmatprep.subr.mxu0 %v3747
  %3756 = vmatpush1.msra.mxu0 %v3748
  %3757 = vmatprep.subr.mxu0 0.0
  %3758 = vmatpush1.msra.mxu0 0.0
  %3759 = vmatprep.subr.mxu0 0.0
  %3760 = vmatpush1.msra.mxu0 0.0
  %3761 = vmatprep.subr.mxu0 0.0
  %3762 = vmatpush1.msra.mxu0 0.0
  %3763 = vmatprep.subr.mxu0 0.0
  %3764 = vmatpush1.msra.mxu0 0.0
  %3765 = vmatprep.subr.mxu0 0.0
  %3766 = vmatpush1.msra.mxu0 0.0
  %3767 = vmatprep.subr.mxu0 0.0
  %3768 = vmatpush1.msra.mxu0 0.0
  %3769 = vmatprep.subr.mxu0 0.0
  %3770 = vmatpush1.msra.mxu0 0.0
  %3771 = vmatprep.subr.mxu0 0.0
  %3772 = vmatpush1.msra.mxu0 0.0
  %3773 = vmatprep.subr.mxu0 0.0
  %3774 = vmatpush1.msra.mxu0 0.0
  %3775 = vmatprep.subr.mxu0 0.0
  %3776 = vmatpush1.msra.mxu0 0.0
  %3777 = vmatprep.subr.mxu0 0.0
  %3778 = vmatpush1.msra.mxu0 0.0
  %3779 = vmatprep.subr.mxu0 0.0
  %3780 = vmatpush1.msra.mxu0 0.0
  %3781 = vmatprep.subr.mxu0 0.0
  %3782 = vmatpush1.msra.mxu0 0.0
  %3783 = vmatprep.subr.mxu0 0.0
  %3784 = vmatpush1.msra.mxu0 0.0
  %3785 = vmatprep.subr.mxu0 0.0
  %3786 = vmatpush1.msra.mxu0 0.0
  %3787 = vmatprep.subr.mxu0 0.0
  %3788 = vmatpush1.msra.mxu0 0.0
  %3789 = vmatprep.subr.mxu0 0.0
  %3790 = vmatpush1.msra.mxu0 0.0
  %3791 = vmatprep.subr.mxu0 0.0
  %3792 = vmatpush1.msra.mxu0 0.0
  %3793 = vmatprep.subr.mxu0 0.0
  %3794 = vmatpush1.msra.mxu0 0.0
  %3795 = vmatprep.subr.mxu0 0.0
  %3796 = vmatpush1.msra.mxu0 0.0
  %3797 = vmatprep.subr.mxu0 0.0
  %3798 = vmatpush1.msra.mxu0 0.0
  %3799 = vmatprep.subr.mxu0 0.0
  %3800 = vmatpush1.msra.mxu0 0.0
  %3801 = vmatprep.subr.mxu0 0.0
  %3802 = vmatpush1.msra.mxu0 0.0
  %3803 = vmatprep.subr.mxu0 0.0
  %3804 = vmatpush1.msra.mxu0 0.0
  %3805 = vmatprep.subr.mxu0 0.0
  %3806 = vmatpush1.msra.mxu0 0.0
  %3807 = vmatprep.subr.mxu0 0.0
  %3808 = vmatpush1.msra.mxu0 0.0
  %3809 = vmatprep.subr.mxu0 0.0
  %3810 = vmatpush1.msra.mxu0 0.0
  %3811 = vmatprep.subr.mxu0 0.0
  %3812 = vmatpush1.msra.mxu0 0.0
  %3813 = vmatprep.subr.mxu0 0.0
  %3814 = vmatpush1.msra.mxu0 0.0
  %3815 = vmatprep.subr.mxu0 0.0
  %3816 = vmatpush1.msra.mxu0 0.0
  %3817 = vmatprep.subr.mxu0 0.0
  %3818 = vmatpush1.msra.mxu0 0.0
  %3819 = vmatprep.mubr.f32.mxu0 0.0
  %3820 = vmatmul.mubr.f32.gmra.mrb[0].mxu0 %v3753
  %v3821 = vpop.f32.mrb[0].mxu0
  %v3822 = vadd.f32 0.0, %v3821
  %v3823 = vpop.f32.mrb[0].mxu0
  %v3824 = vadd.f32 0.0, %v3823
  %3825 = vdwg.mxu0
  %3826 = vmatprep.subr.mxu0 %v3745
  %3827 = vmatpush1.msra.mxu0 %v3746
  %3828 = vmatprep.subr.mxu0 0.0
  %3829 = vmatpush1.msra.mxu0 0.0
  %3830 = vmatprep.subr.mxu0 0.0
  %3831 = vmatpush1.msra.mxu0 0.0
  %3832 = vmatprep.subr.mxu0 0.0
  %3833 = vmatpush1.msra.mxu0 0.0
  %3834 = vmatprep.subr.mxu0 0.0
  %3835 = vmatpush1.msra.mxu0 0.0
  %3836 = vmatprep.subr.mxu0 0.0
  %3837 = vmatpush1.msra.mxu0 0.0
  %3838 = vmatprep.subr.mxu0 0.0
  %3839 = vmatpush1.msra.mxu0 0.0
  %3840 = vmatprep.subr.mxu0 0.0
  %3841 = vmatpush1.msra.mxu0 0.0
  %3842 = vmatprep.subr.mxu0 0.0
  %3843 = vmatpush1.msra.mxu0 0.0
  %3844 = vmatprep.subr.mxu0 0.0
  %3845 = vmatpush1.msra.mxu0 0.0
  %3846 = vmatprep.subr.mxu0 0.0
  %3847 = vmatpush1.msra.mxu0 0.0
  %3848 = vmatprep.subr.mxu0 0.0
  %3849 = vmatpush1.msra.mxu0 0.0
  %3850 = vmatprep.subr.mxu0 0.0
  %3851 = vmatpush1.msra.mxu0 0.0
  %3852 = vmatprep.subr.mxu0 0.0
  %3853 = vmatpush1.msra.mxu0 0.0
  %3854 = vmatprep.subr.mxu0 0.0
  %3855 = vmatpush1.msra.mxu0 0.0
  %3856 = vmatprep.subr.mxu0 0.0
  %3857 = vmatpush1.msra.mxu0 0.0
  %3858 = vmatprep.subr.mxu0 0.0
  %3859 = vmatpush1.msra.mxu0 0.0
  %3860 = vmatprep.subr.mxu0 0.0
  %3861 = vmatpush1.msra.mxu0 0.0
  %3862 = vmatprep.subr.mxu0 0.0
  %3863 = vmatpush1.msra.mxu0 0.0
  %3864 = vmatprep.subr.mxu0 0.0
  %3865 = vmatpush1.msra.mxu0 0.0
  %3866 = vmatprep.subr.mxu0 0.0
  %3867 = vmatpush1.msra.mxu0 0.0
  %3868 = vmatprep.subr.mxu0 0.0
  %3869 = vmatpush1.msra.mxu0 0.0
  %3870 = vmatprep.subr.mxu0 0.0
  %3871 = vmatpush1.msra.mxu0 0.0
  %3872 = vmatprep.subr.mxu0 0.0
  %3873 = vmatpush1.msra.mxu0 0.0
  %3874 = vmatprep.subr.mxu0 0.0
  %3875 = vmatpush1.msra.mxu0 0.0
  %3876 = vmatprep.subr.mxu0 0.0
  %3877 = vmatpush1.msra.mxu0 0.0
  %3878 = vmatprep.subr.mxu0 0.0
  %3879 = vmatpush1.msra.mxu0 0.0
  %3880 = vmatprep.subr.mxu0 0.0
  %3881 = vmatpush1.msra.mxu0 0.0
  %3882 = vmatprep.subr.mxu0 0.0
  %3883 = vmatpush1.msra.mxu0 0.0
  %3884 = vmatprep.subr.mxu0 0.0
  %3885 = vmatpush1.msra.mxu0 0.0
  %3886 = vmatprep.subr.mxu0 0.0
  %3887 = vmatpush1.msra.mxu0 0.0
  %3888 = vmatprep.subr.mxu0 0.0
  %3889 = vmatpush1.msra.mxu0 0.0
  %3890 = vmatprep.mubr.f32.mxu0 0.0
  %3891 = vmatmul.mubr.f32.gmra.mrb[0].mxu0 %v3753
  %v3892 = vpop.f32.mrb[0].mxu0
  %v3893 = vadd.f32 0.0, %v3892
  %v3894 = vpop.f32.mrb[0].mxu0
  %v3895 = vadd.f32 0.0, %v3894
  %3896 = vdwg.mxu0
  %3897 = vmatprep.subr.mxu0 %v3749
  %3898 = vmatpush1.msra.mxu0 %v3744
  %3899 = vmatprep.subr.mxu0 0.0
  %3900 = vmatpush1.msra.mxu0 0.0
  %3901 = vmatprep.subr.mxu0 0.0
  %3902 = vmatpush1.msra.mxu0 0.0
  %3903 = vmatprep.subr.mxu0 0.0
  %3904 = vmatpush1.msra.mxu0 0.0
  %3905 = vmatprep.subr.mxu0 0.0
  %3906 = vmatpush1.msra.mxu0 0.0
  %3907 = vmatprep.subr.mxu0 0.0
  %3908 = vmatpush1.msra.mxu0 0.0
  %3909 = vmatprep.subr.mxu0 0.0
  %3910 = vmatpush1.msra.mxu0 0.0
  %3911 = vmatprep.subr.mxu0 0.0
  %3912 = vmatpush1.msra.mxu0 0.0
  %3913 = vmatprep.subr.mxu0 0.0
  %3914 = vmatpush1.msra.mxu0 0.0
  %3915 = vmatprep.subr.mxu0 0.0
  %3916 = vmatpush1.msra.mxu0 0.0
  %3917 = vmatprep.subr.mxu0 0.0
  %3918 = vmatpush1.msra.mxu0 0.0
  %3919 = vmatprep.subr.mxu0 0.0
  %3920 = vmatpush1.msra.mxu0 0.0
  %3921 = vmatprep.subr.mxu0 0.0
  %3922 = vmatpush1.msra.mxu0 0.0
  %3923 = vmatprep.subr.mxu0 0.0
  %3924 = vmatpush1.msra.mxu0 0.0
  %3925 = vmatprep.subr.mxu0 0.0
  %3926 = vmatpush1.msra.mxu0 0.0
  %3927 = vmatprep.subr.mxu0 0.0
  %3928 = vmatpush1.msra.mxu0 0.0
  %3929 = vmatprep.subr.mxu0 0.0
  %3930 = vmatpush1.msra.mxu0 0.0
  %3931 = vmatprep.subr.mxu0 0.0
  %3932 = vmatpush1.msra.mxu0 0.0
  %3933 = vmatprep.subr.mxu0 0.0
  %3934 = vmatpush1.msra.mxu0 0.0
  %3935 = vmatprep.subr.mxu0 0.0
  %3936 = vmatpush1.msra.mxu0 0.0
  %3937 = vmatprep.subr.mxu0 0.0
  %3938 = vmatpush1.msra.mxu0 0.0
  %3939 = vmatprep.subr.mxu0 0.0
  %3940 = vmatpush1.msra.mxu0 0.0
  %3941 = vmatprep.subr.mxu0 0.0
  %3942 = vmatpush1.msra.mxu0 0.0
  %3943 = vmatprep.subr.mxu0 0.0
  %3944 = vmatpush1.msra.mxu0 0.0
  %3945 = vmatprep.subr.mxu0 0.0
  %3946 = vmatpush1.msra.mxu0 0.0
  %3947 = vmatprep.subr.mxu0 0.0
  %3948 = vmatpush1.msra.mxu0 0.0
  %3949 = vmatprep.subr.mxu0 0.0
  %3950 = vmatpush1.msra.mxu0 0.0
  %3951 = vmatprep.subr.mxu0 0.0
  %3952 = vmatpush1.msra.mxu0 0.0
  %3953 = vmatprep.subr.mxu0 0.0
  %3954 = vmatpush1.msra.mxu0 0.0
  %3955 = vmatprep.subr.mxu0 0.0
  %3956 = vmatpush1.msra.mxu0 0.0
  %3957 = vmatprep.subr.mxu0 0.0
  %3958 = vmatpush1.msra.mxu0 0.0
  %3959 = vmatprep.subr.mxu0 0.0
  %3960 = vmatpush1.msra.mxu0 0.0
  %3961 = vmatprep.mubr.f32.mxu0 0.0
  %3962 = vmatmul.mubr.f32.gmra.mrb[0].mxu0 %v3753
  %v3963 = vpop.f32.mrb[0].mxu0
  %v3964 = vadd.f32 0.0, %v3963
  %v3965 = vpop.f32.mrb[0].mxu0
  %v3966 = vadd.f32 0.0, %v3965
  %3967 = vdwg.mxu0
  %v3968 = vadd.f32 %v3725, %v3822
  %v3969 = vadd.f32 %v3726, %v3824
  %v3970 = vadd.f32 %v3727, %v3893
  %v3971 = vadd.f32 %v3728, %v3895
  %v3972 = vadd.f32 %v3729, %v3964
  %v3973 = vadd.f32 %v3730, %v3966
  %3974 = vrot.lane.b32.xlu0 %v2300, 110
  %v3975 = vpop.permute.xlu0 %3974
  %3976 = vrot.lane.b32.xlu0 %v2301, 110
  %v3977 = vpop.permute.xlu0 %3976
  %3978 = vrot.lane.b32.xlu0 %v2302, 110
  %v3979 = vpop.permute.xlu0 %3978
  %3980 = vrot.lane.b32.xlu0 %v2303, 110
  %v3981 = vpop.permute.xlu0 %3980
  %3982 = vrot.lane.b32.xlu0 %v2304, 110
  %v3983 = vpop.permute.xlu0 %3982
  %3984 = vrot.lane.b32.xlu0 %v2305, 110
  %v3985 = vpop.permute.xlu0 %3984
  %v3986 = vsel %vm748, %v3983, %v3985
  %v3987 = vsel %vm748, %v3981, %v3983
  %v3988 = vsel %vm748, %v3979, %v3981
  %v3989 = vsel %vm748, %v3977, %v3979
  %v3990 = vsel %vm748, %v3975, %v3977
  %v3991 = vsel %vm748, %v3985, %v3975
  %s3992 = scalar_lea.vmem %s4, 56
  %v3993 = vld [vmem:[%s3992] sm:$0xff]
  %v3995 = vsel %vm60, %v3993, 0
  %3997 = vmatprep.subr.mxu0 %v3989
  %3998 = vmatpush1.msra.mxu0 %v3990
  %3999 = vmatprep.subr.mxu0 0.0
  %4000 = vmatpush1.msra.mxu0 0.0
  %4001 = vmatprep.subr.mxu0 0.0
  %4002 = vmatpush1.msra.mxu0 0.0
  %4003 = vmatprep.subr.mxu0 0.0
  %4004 = vmatpush1.msra.mxu0 0.0
  %4005 = vmatprep.subr.mxu0 0.0
  %4006 = vmatpush1.msra.mxu0 0.0
  %4007 = vmatprep.subr.mxu0 0.0
  %4008 = vmatpush1.msra.mxu0 0.0
  %4009 = vmatprep.subr.mxu0 0.0
  %4010 = vmatpush1.msra.mxu0 0.0
  %4011 = vmatprep.subr.mxu0 0.0
  %4012 = vmatpush1.msra.mxu0 0.0
  %4013 = vmatprep.subr.mxu0 0.0
  %4014 = vmatpush1.msra.mxu0 0.0
  %4015 = vmatprep.subr.mxu0 0.0
  %4016 = vmatpush1.msra.mxu0 0.0
  %4017 = vmatprep.subr.mxu0 0.0
  %4018 = vmatpush1.msra.mxu0 0.0
  %4019 = vmatprep.subr.mxu0 0.0
  %4020 = vmatpush1.msra.mxu0 0.0
  %4021 = vmatprep.subr.mxu0 0.0
  %4022 = vmatpush1.msra.mxu0 0.0
  %4023 = vmatprep.subr.mxu0 0.0
  %4024 = vmatpush1.msra.mxu0 0.0
  %4025 = vmatprep.subr.mxu0 0.0
  %4026 = vmatpush1.msra.mxu0 0.0
  %4027 = vmatprep.subr.mxu0 0.0
  %4028 = vmatpush1.msra.mxu0 0.0
  %4029 = vmatprep.subr.mxu0 0.0
  %4030 = vmatpush1.msra.mxu0 0.0
  %4031 = vmatprep.subr.mxu0 0.0
  %4032 = vmatpush1.msra.mxu0 0.0
  %4033 = vmatprep.subr.mxu0 0.0
  %4034 = vmatpush1.msra.mxu0 0.0
  %4035 = vmatprep.subr.mxu0 0.0
  %4036 = vmatpush1.msra.mxu0 0.0
  %4037 = vmatprep.subr.mxu0 0.0
  %4038 = vmatpush1.msra.mxu0 0.0
  %4039 = vmatprep.subr.mxu0 0.0
  %4040 = vmatpush1.msra.mxu0 0.0
  %4041 = vmatprep.subr.mxu0 0.0
  %4042 = vmatpush1.msra.mxu0 0.0
  %4043 = vmatprep.subr.mxu0 0.0
  %4044 = vmatpush1.msra.mxu0 0.0
  %4045 = vmatprep.subr.mxu0 0.0
  %4046 = vmatpush1.msra.mxu0 0.0
  %4047 = vmatprep.subr.mxu0 0.0
  %4048 = vmatpush1.msra.mxu0 0.0
  %4049 = vmatprep.subr.mxu0 0.0
  %4050 = vmatpush1.msra.mxu0 0.0
  %4051 = vmatprep.subr.mxu0 0.0
  %4052 = vmatpush1.msra.mxu0 0.0
  %4053 = vmatprep.subr.mxu0 0.0
  %4054 = vmatpush1.msra.mxu0 0.0
  %4055 = vmatprep.subr.mxu0 0.0
  %4056 = vmatpush1.msra.mxu0 0.0
  %4057 = vmatprep.subr.mxu0 0.0
  %4058 = vmatpush1.msra.mxu0 0.0
  %4059 = vmatprep.subr.mxu0 0.0
  %4060 = vmatpush1.msra.mxu0 0.0
  %4061 = vmatprep.mubr.f32.mxu0 0.0
  %4062 = vmatmul.mubr.f32.gmra.mrb[0].mxu0 %v3995
  %v4063 = vpop.f32.mrb[0].mxu0
  %v4064 = vadd.f32 0.0, %v4063
  %v4065 = vpop.f32.mrb[0].mxu0
  %v4066 = vadd.f32 0.0, %v4065
  %4067 = vdwg.mxu0
  %4068 = vmatprep.subr.mxu0 %v3987
  %4069 = vmatpush1.msra.mxu0 %v3988
  %4070 = vmatprep.subr.mxu0 0.0
  %4071 = vmatpush1.msra.mxu0 0.0
  %4072 = vmatprep.subr.mxu0 0.0
  %4073 = vmatpush1.msra.mxu0 0.0
  %4074 = vmatprep.subr.mxu0 0.0
  %4075 = vmatpush1.msra.mxu0 0.0
  %4076 = vmatprep.subr.mxu0 0.0
  %4077 = vmatpush1.msra.mxu0 0.0
  %4078 = vmatprep.subr.mxu0 0.0
  %4079 = vmatpush1.msra.mxu0 0.0
  %4080 = vmatprep.subr.mxu0 0.0
  %4081 = vmatpush1.msra.mxu0 0.0
  %4082 = vmatprep.subr.mxu0 0.0
  %4083 = vmatpush1.msra.mxu0 0.0
  %4084 = vmatprep.subr.mxu0 0.0
  %4085 = vmatpush1.msra.mxu0 0.0
  %4086 = vmatprep.subr.mxu0 0.0
  %4087 = vmatpush1.msra.mxu0 0.0
  %4088 = vmatprep.subr.mxu0 0.0
  %4089 = vmatpush1.msra.mxu0 0.0
  %4090 = vmatprep.subr.mxu0 0.0
  %4091 = vmatpush1.msra.mxu0 0.0
  %4092 = vmatprep.subr.mxu0 0.0
  %4093 = vmatpush1.msra.mxu0 0.0
  %4094 = vmatprep.subr.mxu0 0.0
  %4095 = vmatpush1.msra.mxu0 0.0
  %4096 = vmatprep.subr.mxu0 0.0
  %4097 = vmatpush1.msra.mxu0 0.0
  %4098 = vmatprep.subr.mxu0 0.0
  %4099 = vmatpush1.msra.mxu0 0.0
  %4100 = vmatprep.subr.mxu0 0.0
  %4101 = vmatpush1.msra.mxu0 0.0
  %4102 = vmatprep.subr.mxu0 0.0
  %4103 = vmatpush1.msra.mxu0 0.0
  %4104 = vmatprep.subr.mxu0 0.0
  %4105 = vmatpush1.msra.mxu0 0.0
  %4106 = vmatprep.subr.mxu0 0.0
  %4107 = vmatpush1.msra.mxu0 0.0
  %4108 = vmatprep.subr.mxu0 0.0
  %4109 = vmatpush1.msra.mxu0 0.0
  %4110 = vmatprep.subr.mxu0 0.0
  %4111 = vmatpush1.msra.mxu0 0.0
  %4112 = vmatprep.subr.mxu0 0.0
  %4113 = vmatpush1.msra.mxu0 0.0
  %4114 = vmatprep.subr.mxu0 0.0
  %4115 = vmatpush1.msra.mxu0 0.0
  %4116 = vmatprep.subr.mxu0 0.0
  %4117 = vmatpush1.msra.mxu0 0.0
  %4118 = vmatprep.subr.mxu0 0.0
  %4119 = vmatpush1.msra.mxu0 0.0
  %4120 = vmatprep.subr.mxu0 0.0
  %4121 = vmatpush1.msra.mxu0 0.0
  %4122 = vmatprep.subr.mxu0 0.0
  %4123 = vmatpush1.msra.mxu0 0.0
  %4124 = vmatprep.subr.mxu0 0.0
  %4125 = vmatpush1.msra.mxu0 0.0
  %4126 = vmatprep.subr.mxu0 0.0
  %4127 = vmatpush1.msra.mxu0 0.0
  %4128 = vmatprep.subr.mxu0 0.0
  %4129 = vmatpush1.msra.mxu0 0.0
  %4130 = vmatprep.subr.mxu0 0.0
  %4131 = vmatpush1.msra.mxu0 0.0
  %4132 = vmatprep.mubr.f32.mxu0 0.0
  %4133 = vmatmul.mubr.f32.gmra.mrb[0].mxu0 %v3995
  %v4134 = vpop.f32.mrb[0].mxu0
  %v4135 = vadd.f32 0.0, %v4134
  %v4136 = vpop.f32.mrb[0].mxu0
  %v4137 = vadd.f32 0.0, %v4136
  %4138 = vdwg.mxu0
  %4139 = vmatprep.subr.mxu0 %v3991
  %4140 = vmatpush1.msra.mxu0 %v3986
  %4141 = vmatprep.subr.mxu0 0.0
  %4142 = vmatpush1.msra.mxu0 0.0
  %4143 = vmatprep.subr.mxu0 0.0
  %4144 = vmatpush1.msra.mxu0 0.0
  %4145 = vmatprep.subr.mxu0 0.0
  %4146 = vmatpush1.msra.mxu0 0.0
  %4147 = vmatprep.subr.mxu0 0.0
  %4148 = vmatpush1.msra.mxu0 0.0
  %4149 = vmatprep.subr.mxu0 0.0
  %4150 = vmatpush1.msra.mxu0 0.0
  %4151 = vmatprep.subr.mxu0 0.0
  %4152 = vmatpush1.msra.mxu0 0.0
  %4153 = vmatprep.subr.mxu0 0.0
  %4154 = vmatpush1.msra.mxu0 0.0
  %4155 = vmatprep.subr.mxu0 0.0
  %4156 = vmatpush1.msra.mxu0 0.0
  %4157 = vmatprep.subr.mxu0 0.0
  %4158 = vmatpush1.msra.mxu0 0.0
  %4159 = vmatprep.subr.mxu0 0.0
  %4160 = vmatpush1.msra.mxu0 0.0
  %4161 = vmatprep.subr.mxu0 0.0
  %4162 = vmatpush1.msra.mxu0 0.0
  %4163 = vmatprep.subr.mxu0 0.0
  %4164 = vmatpush1.msra.mxu0 0.0
  %4165 = vmatprep.subr.mxu0 0.0
  %4166 = vmatpush1.msra.mxu0 0.0
  %4167 = vmatprep.subr.mxu0 0.0
  %4168 = vmatpush1.msra.mxu0 0.0
  %4169 = vmatprep.subr.mxu0 0.0
  %4170 = vmatpush1.msra.mxu0 0.0
  %4171 = vmatprep.subr.mxu0 0.0
  %4172 = vmatpush1.msra.mxu0 0.0
  %4173 = vmatprep.subr.mxu0 0.0
  %4174 = vmatpush1.msra.mxu0 0.0
  %4175 = vmatprep.subr.mxu0 0.0
  %4176 = vmatpush1.msra.mxu0 0.0
  %4177 = vmatprep.subr.mxu0 0.0
  %4178 = vmatpush1.msra.mxu0 0.0
  %4179 = vmatprep.subr.mxu0 0.0
  %4180 = vmatpush1.msra.mxu0 0.0
  %4181 = vmatprep.subr.mxu0 0.0
  %4182 = vmatpush1.msra.mxu0 0.0
  %4183 = vmatprep.subr.mxu0 0.0
  %4184 = vmatpush1.msra.mxu0 0.0
  %4185 = vmatprep.subr.mxu0 0.0
  %4186 = vmatpush1.msra.mxu0 0.0
  %4187 = vmatprep.subr.mxu0 0.0
  %4188 = vmatpush1.msra.mxu0 0.0
  %4189 = vmatprep.subr.mxu0 0.0
  %4190 = vmatpush1.msra.mxu0 0.0
  %4191 = vmatprep.subr.mxu0 0.0
  %4192 = vmatpush1.msra.mxu0 0.0
  %4193 = vmatprep.subr.mxu0 0.0
  %4194 = vmatpush1.msra.mxu0 0.0
  %4195 = vmatprep.subr.mxu0 0.0
  %4196 = vmatpush1.msra.mxu0 0.0
  %4197 = vmatprep.subr.mxu0 0.0
  %4198 = vmatpush1.msra.mxu0 0.0
  %4199 = vmatprep.subr.mxu0 0.0
  %4200 = vmatpush1.msra.mxu0 0.0
  %4201 = vmatprep.subr.mxu0 0.0
  %4202 = vmatpush1.msra.mxu0 0.0
  %4203 = vmatprep.mubr.f32.mxu0 0.0
  %4204 = vmatmul.mubr.f32.gmra.mrb[0].mxu0 %v3995
  %v4205 = vpop.f32.mrb[0].mxu0
  %v4206 = vadd.f32 0.0, %v4205
  %v4207 = vpop.f32.mrb[0].mxu0
  %v4208 = vadd.f32 0.0, %v4207
  %4209 = vdwg.mxu0
  %v4210 = vadd.f32 %v3968, %v4064
  %v4211 = vadd.f32 %v3969, %v4066
  %v4212 = vadd.f32 %v3970, %v4135
  %v4213 = vadd.f32 %v3971, %v4137
  %v4214 = vadd.f32 %v3972, %v4206
  %v4215 = vadd.f32 %v3973, %v4208
  %4216 = vrot.lane.b32.xlu0 %v2300, 109
  %v4217 = vpop.permute.xlu0 %4216
  %4218 = vrot.lane.b32.xlu0 %v2301, 109
  %v4219 = vpop.permute.xlu0 %4218
  %4220 = vrot.lane.b32.xlu0 %v2302, 109
  %v4221 = vpop.permute.xlu0 %4220
  %4222 = vrot.lane.b32.xlu0 %v2303, 109
  %v4223 = vpop.permute.xlu0 %4222
  %4224 = vrot.lane.b32.xlu0 %v2304, 109
  %v4225 = vpop.permute.xlu0 %4224
  %4226 = vrot.lane.b32.xlu0 %v2305, 109
  %v4227 = vpop.permute.xlu0 %4226
  %v4228 = vsel %vm991, %v4225, %v4227
  %v4229 = vsel %vm991, %v4223, %v4225
  %v4230 = vsel %vm991, %v4221, %v4223
  %v4231 = vsel %vm991, %v4219, %v4221
  %v4232 = vsel %vm991, %v4217, %v4219
  %v4233 = vsel %vm991, %v4227, %v4217
  %s4234 = scalar_lea.vmem %s4, 64
  %v4235 = vld [vmem:[%s4234] sm:$0xff]
  %v4237 = vsel %vm60, %v4235, 0
  %4239 = vmatprep.subr.mxu0 %v4231
  %4240 = vmatpush1.msra.mxu0 %v4232
  %4241 = vmatprep.subr.mxu0 0.0
  %4242 = vmatpush1.msra.mxu0 0.0
  %4243 = vmatprep.subr.mxu0 0.0
  %4244 = vmatpush1.msra.mxu0 0.0
  %4245 = vmatprep.subr.mxu0 0.0
  %4246 = vmatpush1.msra.mxu0 0.0
  %4247 = vmatprep.subr.mxu0 0.0
  %4248 = vmatpush1.msra.mxu0 0.0
  %4249 = vmatprep.subr.mxu0 0.0
  %4250 = vmatpush1.msra.mxu0 0.0
  %4251 = vmatprep.subr.mxu0 0.0
  %4252 = vmatpush1.msra.mxu0 0.0
  %4253 = vmatprep.subr.mxu0 0.0
  %4254 = vmatpush1.msra.mxu0 0.0
  %4255 = vmatprep.subr.mxu0 0.0
  %4256 = vmatpush1.msra.mxu0 0.0
  %4257 = vmatprep.subr.mxu0 0.0
  %4258 = vmatpush1.msra.mxu0 0.0
  %4259 = vmatprep.subr.mxu0 0.0
  %4260 = vmatpush1.msra.mxu0 0.0
  %4261 = vmatprep.subr.mxu0 0.0
  %4262 = vmatpush1.msra.mxu0 0.0
  %4263 = vmatprep.subr.mxu0 0.0
  %4264 = vmatpush1.msra.mxu0 0.0
  %4265 = vmatprep.subr.mxu0 0.0
  %4266 = vmatpush1.msra.mxu0 0.0
  %4267 = vmatprep.subr.mxu0 0.0
  %4268 = vmatpush1.msra.mxu0 0.0
  %4269 = vmatprep.subr.mxu0 0.0
  %4270 = vmatpush1.msra.mxu0 0.0
  %4271 = vmatprep.subr.mxu0 0.0
  %4272 = vmatpush1.msra.mxu0 0.0
  %4273 = vmatprep.subr.mxu0 0.0
  %4274 = vmatpush1.msra.mxu0 0.0
  %4275 = vmatprep.subr.mxu0 0.0
  %4276 = vmatpush1.msra.mxu0 0.0
  %4277 = vmatprep.subr.mxu0 0.0
  %4278 = vmatpush1.msra.mxu0 0.0
  %4279 = vmatprep.subr.mxu0 0.0
  %4280 = vmatpush1.msra.mxu0 0.0
  %4281 = vmatprep.subr.mxu0 0.0
  %4282 = vmatpush1.msra.mxu0 0.0
  %4283 = vmatprep.subr.mxu0 0.0
  %4284 = vmatpush1.msra.mxu0 0.0
  %4285 = vmatprep.subr.mxu0 0.0
  %4286 = vmatpush1.msra.mxu0 0.0
  %4287 = vmatprep.subr.mxu0 0.0
  %4288 = vmatpush1.msra.mxu0 0.0
  %4289 = vmatprep.subr.mxu0 0.0
  %4290 = vmatpush1.msra.mxu0 0.0
  %4291 = vmatprep.subr.mxu0 0.0
  %4292 = vmatpush1.msra.mxu0 0.0
  %4293 = vmatprep.subr.mxu0 0.0
  %4294 = vmatpush1.msra.mxu0 0.0
  %4295 = vmatprep.subr.mxu0 0.0
  %4296 = vmatpush1.msra.mxu0 0.0
  %4297 = vmatprep.subr.mxu0 0.0
  %4298 = vmatpush1.msra.mxu0 0.0
  %4299 = vmatprep.subr.mxu0 0.0
  %4300 = vmatpush1.msra.mxu0 0.0
  %4301 = vmatprep.subr.mxu0 0.0
  %4302 = vmatpush1.msra.mxu0 0.0
  %4303 = vmatprep.mubr.f32.mxu0 0.0
  %4304 = vmatmul.mubr.f32.gmra.mrb[0].mxu0 %v4237
  %v4305 = vpop.f32.mrb[0].mxu0
  %v4306 = vadd.f32 0.0, %v4305
  %v4307 = vpop.f32.mrb[0].mxu0
  %v4308 = vadd.f32 0.0, %v4307
  %4309 = vdwg.mxu0
  %4310 = vmatprep.subr.mxu0 %v4229
  %4311 = vmatpush1.msra.mxu0 %v4230
  %4312 = vmatprep.subr.mxu0 0.0
  %4313 = vmatpush1.msra.mxu0 0.0
  %4314 = vmatprep.subr.mxu0 0.0
  %4315 = vmatpush1.msra.mxu0 0.0
  %4316 = vmatprep.subr.mxu0 0.0
  %4317 = vmatpush1.msra.mxu0 0.0
  %4318 = vmatprep.subr.mxu0 0.0
  %4319 = vmatpush1.msra.mxu0 0.0
  %4320 = vmatprep.subr.mxu0 0.0
  %4321 = vmatpush1.msra.mxu0 0.0
  %4322 = vmatprep.subr.mxu0 0.0
  %4323 = vmatpush1.msra.mxu0 0.0
  %4324 = vmatprep.subr.mxu0 0.0
  %4325 = vmatpush1.msra.mxu0 0.0
  %4326 = vmatprep.subr.mxu0 0.0
  %4327 = vmatpush1.msra.mxu0 0.0
  %4328 = vmatprep.subr.mxu0 0.0
  %4329 = vmatpush1.msra.mxu0 0.0
  %4330 = vmatprep.subr.mxu0 0.0
  %4331 = vmatpush1.msra.mxu0 0.0
  %4332 = vmatprep.subr.mxu0 0.0
  %4333 = vmatpush1.msra.mxu0 0.0
  %4334 = vmatprep.subr.mxu0 0.0
  %4335 = vmatpush1.msra.mxu0 0.0
  %4336 = vmatprep.subr.mxu0 0.0
  %4337 = vmatpush1.msra.mxu0 0.0
  %4338 = vmatprep.subr.mxu0 0.0
  %4339 = vmatpush1.msra.mxu0 0.0
  %4340 = vmatprep.subr.mxu0 0.0
  %4341 = vmatpush1.msra.mxu0 0.0
  %4342 = vmatprep.subr.mxu0 0.0
  %4343 = vmatpush1.msra.mxu0 0.0
  %4344 = vmatprep.subr.mxu0 0.0
  %4345 = vmatpush1.msra.mxu0 0.0
  %4346 = vmatprep.subr.mxu0 0.0
  %4347 = vmatpush1.msra.mxu0 0.0
  %4348 = vmatprep.subr.mxu0 0.0
  %4349 = vmatpush1.msra.mxu0 0.0
  %4350 = vmatprep.subr.mxu0 0.0
  %4351 = vmatpush1.msra.mxu0 0.0
  %4352 = vmatprep.subr.mxu0 0.0
  %4353 = vmatpush1.msra.mxu0 0.0
  %4354 = vmatprep.subr.mxu0 0.0
  %4355 = vmatpush1.msra.mxu0 0.0
  %4356 = vmatprep.subr.mxu0 0.0
  %4357 = vmatpush1.msra.mxu0 0.0
  %4358 = vmatprep.subr.mxu0 0.0
  %4359 = vmatpush1.msra.mxu0 0.0
  %4360 = vmatprep.subr.mxu0 0.0
  %4361 = vmatpush1.msra.mxu0 0.0
  %4362 = vmatprep.subr.mxu0 0.0
  %4363 = vmatpush1.msra.mxu0 0.0
  %4364 = vmatprep.subr.mxu0 0.0
  %4365 = vmatpush1.msra.mxu0 0.0
  %4366 = vmatprep.subr.mxu0 0.0
  %4367 = vmatpush1.msra.mxu0 0.0
  %4368 = vmatprep.subr.mxu0 0.0
  %4369 = vmatpush1.msra.mxu0 0.0
  %4370 = vmatprep.subr.mxu0 0.0
  %4371 = vmatpush1.msra.mxu0 0.0
  %4372 = vmatprep.subr.mxu0 0.0
  %4373 = vmatpush1.msra.mxu0 0.0
  %4374 = vmatprep.mubr.f32.mxu0 0.0
  %4375 = vmatmul.mubr.f32.gmra.mrb[0].mxu0 %v4237
  %v4376 = vpop.f32.mrb[0].mxu0
  %v4377 = vadd.f32 0.0, %v4376
  %v4378 = vpop.f32.mrb[0].mxu0
  %v4379 = vadd.f32 0.0, %v4378
  %4380 = vdwg.mxu0
  %4381 = vmatprep.subr.mxu0 %v4233
  %4382 = vmatpush1.msra.mxu0 %v4228
  %4383 = vmatprep.subr.mxu0 0.0
  %4384 = vmatpush1.msra.mxu0 0.0
  %4385 = vmatprep.subr.mxu0 0.0
  %4386 = vmatpush1.msra.mxu0 0.0
  %4387 = vmatprep.subr.mxu0 0.0
  %4388 = vmatpush1.msra.mxu0 0.0
  %4389 = vmatprep.subr.mxu0 0.0
  %4390 = vmatpush1.msra.mxu0 0.0
  %4391 = vmatprep.subr.mxu0 0.0
  %4392 = vmatpush1.msra.mxu0 0.0
  %4393 = vmatprep.subr.mxu0 0.0
  %4394 = vmatpush1.msra.mxu0 0.0
  %4395 = vmatprep.subr.mxu0 0.0
  %4396 = vmatpush1.msra.mxu0 0.0
  %4397 = vmatprep.subr.mxu0 0.0
  %4398 = vmatpush1.msra.mxu0 0.0
  %4399 = vmatprep.subr.mxu0 0.0
  %4400 = vmatpush1.msra.mxu0 0.0
  %4401 = vmatprep.subr.mxu0 0.0
  %4402 = vmatpush1.msra.mxu0 0.0
  %4403 = vmatprep.subr.mxu0 0.0
  %4404 = vmatpush1.msra.mxu0 0.0
  %4405 = vmatprep.subr.mxu0 0.0
  %4406 = vmatpush1.msra.mxu0 0.0
  %4407 = vmatprep.subr.mxu0 0.0
  %4408 = vmatpush1.msra.mxu0 0.0
  %4409 = vmatprep.subr.mxu0 0.0
  %4410 = vmatpush1.msra.mxu0 0.0
  %4411 = vmatprep.subr.mxu0 0.0
  %4412 = vmatpush1.msra.mxu0 0.0
  %4413 = vmatprep.subr.mxu0 0.0
  %4414 = vmatpush1.msra.mxu0 0.0
  %4415 = vmatprep.subr.mxu0 0.0
  %4416 = vmatpush1.msra.mxu0 0.0
  %4417 = vmatprep.subr.mxu0 0.0
  %4418 = vmatpush1.msra.mxu0 0.0
  %4419 = vmatprep.subr.mxu0 0.0
  %4420 = vmatpush1.msra.mxu0 0.0
  %4421 = vmatprep.subr.mxu0 0.0
  %4422 = vmatpush1.msra.mxu0 0.0
  %4423 = vmatprep.subr.mxu0 0.0
  %4424 = vmatpush1.msra.mxu0 0.0
  %4425 = vmatprep.subr.mxu0 0.0
  %4426 = vmatpush1.msra.mxu0 0.0
  %4427 = vmatprep.subr.mxu0 0.0
  %4428 = vmatpush1.msra.mxu0 0.0
  %4429 = vmatprep.subr.mxu0 0.0
  %4430 = vmatpush1.msra.mxu0 0.0
  %4431 = vmatprep.subr.mxu0 0.0
  %4432 = vmatpush1.msra.mxu0 0.0
  %4433 = vmatprep.subr.mxu0 0.0
  %4434 = vmatpush1.msra.mxu0 0.0
  %4435 = vmatprep.subr.mxu0 0.0
  %4436 = vmatpush1.msra.mxu0 0.0
  %4437 = vmatprep.subr.mxu0 0.0
  %4438 = vmatpush1.msra.mxu0 0.0
  %4439 = vmatprep.subr.mxu0 0.0
  %4440 = vmatpush1.msra.mxu0 0.0
  %4441 = vmatprep.subr.mxu0 0.0
  %4442 = vmatpush1.msra.mxu0 0.0
  %4443 = vmatprep.subr.mxu0 0.0
  %4444 = vmatpush1.msra.mxu0 0.0
  %4445 = vmatprep.mubr.f32.mxu0 0.0
  %4446 = vmatmul.mubr.f32.gmra.mrb[0].mxu0 %v4237
  %v4447 = vpop.f32.mrb[0].mxu0
  %v4448 = vadd.f32 0.0, %v4447
  %v4449 = vpop.f32.mrb[0].mxu0
  %v4450 = vadd.f32 0.0, %v4449
  %4451 = vdwg.mxu0
  %v4452 = vadd.f32 %v4210, %v4306
  %v4453 = vadd.f32 %v4211, %v4308
  %v4454 = vadd.f32 %v4212, %v4377
  %v4455 = vadd.f32 %v4213, %v4379
  %v4456 = vadd.f32 %v4214, %v4448
  %v4457 = vadd.f32 %v4215, %v4450
  %v4458 = vld [vmem:[%s5] sm:$0xff]
  %v4459 = vld [vmem:[%s6] sm:$0xff]
  %v4460 = vmul.f32 %v4452, %v2200
  %v4461 = vmul.f32 %v4453, %v2204
  %v4462 = vmul.f32 %v4454, %v2208
  %v4463 = vmul.f32 %v4455, %v2212
  %v4464 = vmul.f32 %v4456, %v2216
  %v4465 = vmul.f32 %v4457, %v2220
  %v4466 = vadd.f32 %v4460, %v4461
  %v4467 = vadd.f32 %v4466, %v4462
  %v4468 = vadd.f32 %v4467, %v4463
  %v4469 = vadd.f32 %v4468, %v4464
  %v4470 = vadd.f32 %v4469, %v4465
  %4471 = vadd.xlane.f32.xlu0 %v4470
  %v4472 = vpop.xlane.xlu0 %4471
  %v4473 = vmul.f32 %v4472, 0.001953125
  %v4474 = vsub.f32 %v4452, %v4473
  %v4475 = vsub.f32 %v4453, %v4473
  %v4476 = vsub.f32 %v4454, %v4473
  %v4477 = vsub.f32 %v4455, %v4473
  %v4478 = vsub.f32 %v4456, %v4473
  %v4479 = vsub.f32 %v4457, %v4473
  %v4480 = vmul.f32 %v4474, %v2200
  %v4481 = vmul.f32 %v4475, %v2204
  %v4482 = vmul.f32 %v4476, %v2208
  %v4483 = vmul.f32 %v4477, %v2212
  %v4484 = vmul.f32 %v4478, %v2216
  %v4485 = vmul.f32 %v4479, %v2220
  %v4486 = vmul.f32 %v4480, %v4480
  %v4487 = vmul.f32 %v4481, %v4481
  %v4488 = vmul.f32 %v4482, %v4482
  %v4489 = vmul.f32 %v4483, %v4483
  %v4490 = vmul.f32 %v4484, %v4484
  %v4491 = vmul.f32 %v4485, %v4485
  %v4492 = vadd.f32 %v4486, %v4487
  %v4493 = vadd.f32 %v4492, %v4488
  %v4494 = vadd.f32 %v4493, %v4489
  %v4495 = vadd.f32 %v4494, %v4490
  %v4496 = vadd.f32 %v4495, %v4491
  %4497 = vadd.xlane.f32.xlu0 %v4496
  %v4498 = vpop.xlane.xlu0 %4497
  %v4499 = vmul.f32 %v4498, 0.001953125
  %v4500 = vadd.f32 %v4499, 1e-05
  %v4501 = vrsqrt.pop %v4500
  %v4502 = vmul.f32 %v4458, %v4501
  %v4503 = vmul.f32 %v4473, %v4502
  %v4504 = vsub.f32 %v4459, %v4503
  %4506 = vset.pattern.permute.xlu0 0
  %4507 = vperm.xlu0 %4506, %v4502
  %v4508 = vpop.permute.xlu0 %4507
  %v4510 = vmul.f32 %v4452, %v4508
  %v4511 = vmul.f32 %v4453, %v4508
  %v4512 = vmul.f32 %v4454, %v4508
  %v4513 = vmul.f32 %v4455, %v4508
  %v4514 = vmul.f32 %v4456, %v4508
  %v4515 = vmul.f32 %v4457, %v4508
  %4517 = vset.pattern.permute.xlu0 0
  %4518 = vperm.xlu0 %4517, %v4504
  %v4519 = vpop.permute.xlu0 %4518
  %v4521 = vadd.f32 %v4510, %v4519
  %v4522 = vadd.f32 %v4511, %v4519
  %v4523 = vadd.f32 %v4512, %v4519
  %v4524 = vadd.f32 %v4513, %v4519
  %v4525 = vadd.f32 %v4514, %v4519
  %v4526 = vadd.f32 %v4515, %v4519
  %v4527 = vmax.f32 %v4521, 0.0
  %v4528 = vmax.f32 %v4522, 0.0
  %v4529 = vmax.f32 %v4523, 0.0
  %v4530 = vmax.f32 %v4524, 0.0
  %v4531 = vmax.f32 %v4525, 0.0
  %v4532 = vmax.f32 %v4526, 0.0
  %4533 = vst [vmem:[%s8] sm:$0xff] %v4527
  %4534 = vst [vmem:[%s8 + $0x8] sm:$0xff] %v4528
  %4535 = vst [vmem:[%s8 + $0x10] sm:$0xff] %v4529
  %4536 = vst [vmem:[%s8 + $0x18] sm:$0xff] %v4530
  %4537 = vst [vmem:[%s8 + $0x20] sm:$0xff] %v4531
  %4538 = vst [vmem:[%s8 + $0x28] sm:$0xff] %v4532
  // Predicated region
  $region34: #{first2d_forward_fn.1} parent=0 // pred_check
    _
  $region35: #{first2d_forward_fn.1} parent=0 // pred_check_branch
    %4540 = sbr.rel (0) target = $region37
  $region36: #{first2d_forward_fn.1} parent=0 // pred_region
    _
  $region37: #{first2d_forward_fn.1} parent=0 // pred_fallthru
    _
  // Predicated region
  $region38: #{first2d_forward_fn.1} parent=0 // pred_check
    _
  $region39: #{first2d_forward_fn.1} parent=0 // pred_check_branch
    %4542 = sbr.rel (0) target = $region41
  $region40: #{first2d_forward_fn.1} parent=0 // pred_region
    _
  $region41: #{first2d_forward_fn.1} parent=0 // pred_fallthru
    _

</llo_original>
